<compile_context>
chip_gen: v7x
topology: tpu7x:2x2x1
jax: 0.10.0
libtpu: 0.0.40
codegen_flags: <defaults>
</compile_context>

<pallas_src>
import functools

import jax
import jax.numpy as jnp
from jax import lax
from jax.experimental import pallas as pl
from jax.experimental.pallas import tpu as pltpu


def _vmem_limit_bytes():
    # v5e/v6e: 128 MiB physical -> ~96 MiB budget; v7x: 64 MiB -> ~48 MiB.
    try:
        return int(pltpu.get_tpu_info().vmem_capacity_bytes * 3 // 4)
    except Exception:
        return 48 * 1024 * 1024


def _pick_tile(n, desired, align):
    """Largest tile <= desired that divides n and is a multiple of `align`;
    falls back to the full extent (always legal for BlockSpec)."""
    if n <= desired:
        return n
    t = (desired // align) * align
    while t >= align:
        if n % t == 0:
            return t
        t -= align
    return n


# --------------------------------------------------------------------------
# Encoder, small-N fused path: everything resident, single launch.
# --------------------------------------------------------------------------
def _encoder_fused_kernel(x_ref, adj_ref, w1_ref, wmu_ref, wsig_ref, eps_ref,
                          z_ref):
    # s1 = x @ W1
    s1 = jnp.dot(x_ref[...], w1_ref[...], preferred_element_type=jnp.float32)
    # hidden = relu(adj @ s1)
    h = jnp.dot(adj_ref[...], s1.astype(jnp.bfloat16),
                preferred_element_type=jnp.float32)
    h = jnp.maximum(h, 0.0).astype(jnp.bfloat16)
    # supports for mu / log_sigma (two narrow matmuls -> no lane slicing)
    s2_mu = jnp.dot(h, wmu_ref[...], preferred_element_type=jnp.float32)
    s2_sig = jnp.dot(h, wsig_ref[...], preferred_element_type=jnp.float32)
    # mu / log_sigma = adj @ support
    mu = jnp.dot(adj_ref[...], s2_mu.astype(jnp.bfloat16),
                 preferred_element_type=jnp.float32)
    log_sigma = jnp.dot(adj_ref[...], s2_sig.astype(jnp.bfloat16),
                        preferred_element_type=jnp.float32)
    # reparameterize: z = eps * exp(log_sigma) + mu   (f32 elementwise)
    z_ref[...] = (eps_ref[...] * jnp.exp(log_sigma) + mu).astype(z_ref.dtype)


# --------------------------------------------------------------------------
# Encoder, large-N tiled path.
# --------------------------------------------------------------------------
def _enc_s2_kernel(adj_ref, s1_ref, wmu_ref, wsig_ref, s2mu_ref, s2sig_ref):
    # hidden row-block = relu(adj_block @ s1); immediately project so the
    # (N, H) hidden tensor never roundtrips HBM.
    h = jnp.dot(adj_ref[...], s1_ref[...], preferred_element_type=jnp.float32)
    h = jnp.maximum(h, 0.0).astype(jnp.bfloat16)
    s2mu_ref[...] = jnp.dot(
        h, wmu_ref[...], preferred_element_type=jnp.float32
    ).astype(s2mu_ref.dtype)
    s2sig_ref[...] = jnp.dot(
        h, wsig_ref[...], preferred_element_type=jnp.float32
    ).astype(s2sig_ref.dtype)


def _enc_z_kernel(adj_ref, s2mu_ref, s2sig_ref, eps_ref, z_ref):
    mu = jnp.dot(adj_ref[...], s2mu_ref[...],
                 preferred_element_type=jnp.float32)
    log_sigma = jnp.dot(adj_ref[...], s2sig_ref[...],
                        preferred_element_type=jnp.float32)
    z_ref[...] = (eps_ref[...] * jnp.exp(log_sigma) + mu).astype(z_ref.dtype)


# --------------------------------------------------------------------------
# Decoder: adj_hat = sigmoid(z @ z^T), z fully resident in VMEM.
# --------------------------------------------------------------------------
def _decoder_kernel(z_ref, out_ref, *, ti, tj):
    i = pl.program_id(0)
    j = pl.program_id(1)
    zi = z_ref[pl.ds(pl.multiple_of(i * ti, ti), ti), :]
    zj = z_ref[pl.ds(pl.multiple_of(j * tj, tj), tj), :]
    # contract the last dim of both operands (no explicit transpose of z)
    logits = lax.dot_general(zi, zj,
                             dimension_numbers=(((1,), (1,)), ((), ())),
                             preferred_element_type=jnp.float32)
    out_ref[...] = jax.nn.sigmoid(logits)


# --------------------------------------------------------------------------
# Forward wrapper.
# --------------------------------------------------------------------------
def vgae_forward(x, adj, w1, w_mu, w_sig, eps, *,
                 row_tile=256, dec_tile_rows=256, dec_tile_cols=512,
                 force_tiled=False):
    n, f_in = x.shape
    n_hidden = w1.shape[1]
    dim_z = w_mu.shape[1]
    vmem_limit = _vmem_limit_bytes()

    # bf16 MXU operands (f32 accumulation inside kernels); halves adj bytes.
    x_b = x.astype(jnp.bfloat16)
    adj_b = adj.astype(jnp.bfloat16)
    w1_b = w1.astype(jnp.bfloat16)
    w_mu_b = w_mu.astype(jnp.bfloat16)
    w_sig_b = w_sig.astype(jnp.bfloat16)

    # Small-N regime: adj (bf16) comfortably fits VMEM -> single fused launch.
    use_fused = (not force_tiled) and (2 * n * n <= 16 * 1024 * 1024)

    if use_fused:
        z_b = pl.pallas_call(
            _encoder_fused_kernel,
            out_shape=jax.ShapeDtypeStruct((n, dim_z), jnp.bfloat16),
            compiler_params=pltpu.CompilerParams(
                vmem_limit_bytes=vmem_limit),
            cost_estimate=pl.CostEstimate(
                flops=2 * n * f_in * n_hidden + 2 * n * n * n_hidden
                + 4 * n * n_hidden * dim_z + 4 * n * n * dim_z,
                transcendentals=n * dim_z,
                bytes_accessed=2 * n * n + 2 * n * f_in + 4 * n * dim_z
                + 2 * n * dim_z),
        )(x_b, adj_b, w1_b, w_mu_b, w_sig_b, eps)
    else:
        # TODO(synk): for very large graphs on v7x (64 MiB VMEM) add an
        # adj-column (contraction) grid axis + f32 accumulator scratch instead
        # of full-width (tm, N) adj row slabs.
        # phase 0 (hoisted once, not per row-block): s1 = x @ W1
        s1_b = jnp.dot(x, w1).astype(jnp.bfloat16)

        tm = _pick_tile(n, row_tile, 8)
        grid_rows = n // tm
        enc_params = pltpu.CompilerParams(
            dimension_semantics=("parallel",), vmem_limit_bytes=vmem_limit)

        # phase 1a: s2_{mu,sig} = relu(adj_block @ s1) @ W_{mu,sig}
        s2_mu, s2_sig = pl.pallas_call(
            _enc_s2_kernel,
            out_shape=(jax.ShapeDtypeStruct((n, dim_z), jnp.bfloat16),
                       jax.ShapeDtypeStruct((n, dim_z), jnp.bfloat16)),
            grid=(grid_rows,),
            in_specs=[
                pl.BlockSpec((tm, n), lambda i: (i, 0)),            # adj rows
                pl.BlockSpec((n, n_hidden), lambda i: (0, 0)),      # s1 (res.)
                pl.BlockSpec((n_hidden, dim_z), lambda i: (0, 0)),  # W_mu
                pl.BlockSpec((n_hidden, dim_z), lambda i: (0, 0)),  # W_sig
            ],
            out_specs=(pl.BlockSpec((tm, dim_z), lambda i: (i, 0)),
                       pl.BlockSpec((tm, dim_z), lambda i: (i, 0))),
            compiler_params=enc_params,
            cost_estimate=pl.CostEstimate(
                flops=2 * n * n * n_hidden + 4 * n * n_hidden * dim_z,
                transcendentals=0,
                bytes_accessed=2 * n * n + 2 * n * n_hidden + 4 * n * dim_z),
        )(adj_b, s1_b, w_mu_b, w_sig_b)

        # phase 1b: mu/log_sigma = adj @ s2_{mu,sig};  z = eps*exp(ls) + mu
        z_b = pl.pallas_call(
            _enc_z_kernel,
            out_shape=jax.ShapeDtypeStruct((n, dim_z), jnp.bfloat16),
            grid=(grid_rows,),
            in_specs=[
                pl.BlockSpec((tm, n), lambda i: (i, 0)),        # adj rows
                pl.BlockSpec((n, dim_z), lambda i: (0, 0)),     # s2_mu (res.)
                pl.BlockSpec((n, dim_z), lambda i: (0, 0)),     # s2_sig (res.)
                pl.BlockSpec((tm, dim_z), lambda i: (i, 0)),    # eps rows
            ],
            out_specs=pl.BlockSpec((tm, dim_z), lambda i: (i, 0)),
            compiler_params=enc_params,
            cost_estimate=pl.CostEstimate(
                flops=4 * n * n * dim_z,
                transcendentals=n * dim_z,
                bytes_accessed=2 * n * n + 4 * n * dim_z + 4 * n * dim_z
                + 2 * n * dim_z),
        )(adj_b, s2_mu, s2_sig, eps)

    # --- decoder: adj_hat = sigmoid(z @ z^T) -------------------------------
    ti = _pick_tile(n, dec_tile_rows, 8)
    tj = _pick_tile(n, dec_tile_cols, 128)
    gi, gj = n // ti, n // tj
    adj_hat = pl.pallas_call(
        functools.partial(_decoder_kernel, ti=ti, tj=tj),
        out_shape=jax.ShapeDtypeStruct((n, n), jnp.float32),
        grid=(gi, gj),
        in_specs=[
            # z (bf16, N x dim_z) is tiny: keep it fully resident; constant
            # index_map => fetched once, no per-tile re-DMA.
            pl.BlockSpec((n, dim_z), lambda i, j: (0, 0)),
        ],
        out_specs=pl.BlockSpec((ti, tj), lambda i, j: (i, j)),
        compiler_params=pltpu.CompilerParams(
            dimension_semantics=("parallel", "parallel"),
            vmem_limit_bytes=vmem_limit),
        cost_estimate=pl.CostEstimate(
            flops=2 * n * n * dim_z,
            transcendentals=n * n,
            bytes_accessed=n * n * 4 + n * dim_z * 2),
    )(z_b)
    return adj_hat


def xavier_normal(key, fan_in, fan_out):
    # Matches torch.nn.init.xavier_normal_ (gain=1.0)
    std = jnp.sqrt(2.0 / (fan_in + fan_out))
    return jax.random.normal(key, (fan_in, fan_out), dtype=jnp.float32) * std


if __name__ == "__main__":
    # 512 nodes so both the fused-encoder and the tiled-encoder paths as well
    # as the multi-tile decoder grid are exercised; feature dims stay small.
    n_nodes, in_features, n_hidden, dim_z = 512, 32, 32, 16

    key = jax.random.PRNGKey(0)
    k_x, k_adj, k_w1, k_wmu, k_wsig, k_eps = jax.random.split(key, 6)

    x = jax.random.normal(k_x, (n_nodes, in_features), dtype=jnp.float32)

    # Symmetric normalized adjacency (dense, deterministic).
    a = (jax.random.uniform(k_adj, (n_nodes, n_nodes)) > 0.8).astype(jnp.float32)
    a = jnp.maximum(a, a.T) + jnp.eye(n_nodes, dtype=jnp.float32)
    deg = jnp.sum(a, axis=1)
    d_inv_sqrt = 1.0 / jnp.sqrt(deg)
    adj = a * d_inv_sqrt[:, None] * d_inv_sqrt[None, :]

    w1 = xavier_normal(k_w1, in_features, n_hidden)
    w_mu = xavier_normal(k_wmu, n_hidden, dim_z)
    w_sig = xavier_normal(k_wsig, n_hidden, dim_z)

    # eps ~ N(0,1) (torch.randn_like(std)), passed in explicitly.
    eps = jax.random.normal(k_eps, (n_nodes, dim_z), dtype=jnp.float32)

    # Pure-JAX f32 reference of the module's forward pass.
    hidden_ref = jnp.maximum(adj @ (x @ w1), 0.0)
    mu_ref = adj @ (hidden_ref @ w_mu)
    log_sigma_ref = adj @ (hidden_ref @ w_sig)
    z_ref = eps * jnp.exp(log_sigma_ref) + mu_ref
    ref = jax.nn.sigmoid(z_ref @ z_ref.T)

    # Fused small-N encoder path (default) and tiled large-N path (forced).
    out_fused = vgae_forward(x, adj, w1, w_mu, w_sig, eps)
    out_tiled = vgae_forward(x, adj, w1, w_mu, w_sig, eps,
                             force_tiled=True, row_tile=128,
                             dec_tile_rows=128, dec_tile_cols=256)
    jax.block_until_ready((out_fused, out_tiled))

    # bf16 MXU operands (incl. bf16 z in the decoder) => loosened tolerance.
    for out in (out_fused, out_tiled):
        assert out.shape == (n_nodes, n_nodes)
        max_err = float(jnp.max(jnp.abs(out - ref)))
        assert max_err < 4e-2, f"max abs err {max_err}"

    print("KERNEL_OK")
</pallas_src>

<mosaic_0001>
module attributes {stable_mosaic.version = 11 : i64} {
  func.func @_encoder_fused_kernel(%arg0: memref<512x32xbf16, #tpu.memory_space<vmem>>, %arg1: memref<512x512xbf16, #tpu.memory_space<vmem>>, %arg2: memref<32x32xbf16, #tpu.memory_space<vmem>>, %arg3: memref<32x16xbf16, #tpu.memory_space<vmem>>, %arg4: memref<32x16xbf16, #tpu.memory_space<vmem>>, %arg5: memref<512x16xf32, #tpu.memory_space<vmem>>, %arg6: memref<512x16xbf16, #tpu.memory_space<vmem>>) attributes {dimension_semantics = [], scalar_prefetch = 0 : i64, scratch_operands = 0 : i64, tpu.core_type = #tpu.core_type<tc>} {
    %c0 = arith.constant 0 : index
    %c0_0 = arith.constant 0 : index
    %0 = vector.load %arg0[%c0, %c0_0] : memref<512x32xbf16, #tpu.memory_space<vmem>>, vector<512x32xbf16>
    %c0_1 = arith.constant 0 : index
    %c0_2 = arith.constant 0 : index
    %1 = vector.load %arg2[%c0_1, %c0_2] : memref<32x32xbf16, #tpu.memory_space<vmem>>, vector<32x32xbf16>
    %cst = arith.constant dense<0.000000e+00> : vector<512x32xf32>
    %2 = tpu.matmul %0, %1, %cst {dimension_numbers = #tpu.dot_dimension_numbers<[1], [0], [0], [1], [0, 0, 1, 1], [], []>} : vector<512x32xbf16>, vector<32x32xbf16>, vector<512x32xf32> -> vector<512x32xf32>
    %c0_3 = arith.constant 0 : index
    %c0_4 = arith.constant 0 : index
    %3 = vector.load %arg1[%c0_3, %c0_4] : memref<512x512xbf16, #tpu.memory_space<vmem>>, vector<512x512xbf16>
    %4 = arith.truncf %2 : vector<512x32xf32> to vector<512x32xbf16>
    %cst_5 = arith.constant dense<0.000000e+00> : vector<512x32xf32>
    %5 = tpu.matmul %3, %4, %cst_5 {dimension_numbers = #tpu.dot_dimension_numbers<[1], [0], [0], [1], [0, 0, 1, 1], [], []>} : vector<512x512xbf16>, vector<512x32xbf16>, vector<512x32xf32> -> vector<512x32xf32>
    %cst_6 = arith.constant 0.000000e+00 : f32
    %6 = vector.broadcast %cst_6 : f32 to vector<512x32xf32>
    %7 = arith.maximumf %5, %6 : vector<512x32xf32>
    %8 = arith.truncf %7 : vector<512x32xf32> to vector<512x32xbf16>
    %c0_7 = arith.constant 0 : index
    %c0_8 = arith.constant 0 : index
    %9 = vector.load %arg3[%c0_7, %c0_8] : memref<32x16xbf16, #tpu.memory_space<vmem>>, vector<32x16xbf16>
    %cst_9 = arith.constant dense<0.000000e+00> : vector<512x16xf32>
    %10 = tpu.matmul %8, %9, %cst_9 {dimension_numbers = #tpu.dot_dimension_numbers<[1], [0], [0], [1], [0, 0, 1, 1], [], []>} : vector<512x32xbf16>, vector<32x16xbf16>, vector<512x16xf32> -> vector<512x16xf32>
    %c0_10 = arith.constant 0 : index
    %c0_11 = arith.constant 0 : index
    %11 = vector.load %arg4[%c0_10, %c0_11] : memref<32x16xbf16, #tpu.memory_space<vmem>>, vector<32x16xbf16>
    %cst_12 = arith.constant dense<0.000000e+00> : vector<512x16xf32>
    %12 = tpu.matmul %8, %11, %cst_12 {dimension_numbers = #tpu.dot_dimension_numbers<[1], [0], [0], [1], [0, 0, 1, 1], [], []>} : vector<512x32xbf16>, vector<32x16xbf16>, vector<512x16xf32> -> vector<512x16xf32>
    %c0_13 = arith.constant 0 : index
    %c0_14 = arith.constant 0 : index
    %13 = vector.load %arg1[%c0_13, %c0_14] : memref<512x512xbf16, #tpu.memory_space<vmem>>, vector<512x512xbf16>
    %14 = arith.truncf %10 : vector<512x16xf32> to vector<512x16xbf16>
    %cst_15 = arith.constant dense<0.000000e+00> : vector<512x16xf32>
    %15 = tpu.matmul %13, %14, %cst_15 {dimension_numbers = #tpu.dot_dimension_numbers<[1], [0], [0], [1], [0, 0, 1, 1], [], []>} : vector<512x512xbf16>, vector<512x16xbf16>, vector<512x16xf32> -> vector<512x16xf32>
    %c0_16 = arith.constant 0 : index
    %c0_17 = arith.constant 0 : index
    %16 = vector.load %arg1[%c0_16, %c0_17] : memref<512x512xbf16, #tpu.memory_space<vmem>>, vector<512x512xbf16>
    %17 = arith.truncf %12 : vector<512x16xf32> to vector<512x16xbf16>
    %cst_18 = arith.constant dense<0.000000e+00> : vector<512x16xf32>
    %18 = tpu.matmul %16, %17, %cst_18 {dimension_numbers = #tpu.dot_dimension_numbers<[1], [0], [0], [1], [0, 0, 1, 1], [], []>} : vector<512x512xbf16>, vector<512x16xbf16>, vector<512x16xf32> -> vector<512x16xf32>
    %c0_19 = arith.constant 0 : index
    %c0_20 = arith.constant 0 : index
    %19 = vector.load %arg5[%c0_19, %c0_20] : memref<512x16xf32, #tpu.memory_space<vmem>>, vector<512x16xf32>
    %20 = math.exp %18 : vector<512x16xf32>
    %21 = arith.mulf %19, %20 : vector<512x16xf32>
    %22 = arith.addf %21, %15 : vector<512x16xf32>
    %23 = arith.truncf %22 : vector<512x16xf32> to vector<512x16xbf16>
    %c0_21 = arith.constant 0 : index
    %c0_22 = arith.constant 0 : index
    %24 = vector.load %arg6[%c0_21, %c0_22] : memref<512x16xbf16, #tpu.memory_space<vmem>>, vector<512x16xbf16>
    tpu.vector_store %arg6[%c0_21, %c0_22], %23 {strides = array<i32>} : memref<512x16xbf16, #tpu.memory_space<vmem>>, vector<512x16xbf16>,
    return
  }
}

</mosaic_0001>

<llo_original>
// kernel: tpu_custom_call.1
$region0: #{tpu_custom_call.1}
  #allocation0 [shape = 'u32[]', space=smem, size = 0x4, offset = 0x4, fixed_abs, tag = 'smem constant byte address 0x4 - core index']
  #allocation1 [shape = 'u32[144,128]{1,0:T(1,128)}', space=vmem, size = 0x12000, scoped, tag = 'internal scratch']
  %s0 = inlined_call_operand.vmem [shape: bf16[512,32], index: 0, kind: input, shape index: {}]
  %s1 = inlined_call_operand.hbm [shape: bf16[512,512], index: 1, kind: input, shape index: {}]
  %s2 = inlined_call_operand.vmem [shape: bf16[32,32], index: 2, kind: input, shape index: {}]
  %s3 = inlined_call_operand.vmem [shape: bf16[32,16], index: 3, kind: input, shape index: {}]
  %s4 = inlined_call_operand.vmem [shape: bf16[32,16], index: 4, kind: input, shape index: {}]
  %s5 = inlined_call_operand.vmem [shape: f32[512,16], index: 5, kind: input, shape index: {}]
  %s6 = inlined_call_operand.vmem [shape: bf16[512,16], index: 6, kind: output, shape index: {}]
  %s7 = sld [smem:[#allocation0]]
  $region38: #{tpu_custom_call.1} parent=0
    _
  %s9 = ssub.s32 1, %s7
  %s10 = scalar_select 0, %s9, %s7
  $region1: #{tpu_custom_call.1} parent=0
    #allocation2 [shape = 'u8[524288]{0}', space=vmem, size = 0x80000, scoped, tag = 'input window, operand 1, single buffered']
    #allocation3 [shape = 's32[1]{0}', space=sflag, size = 0x4, scoped, tag = 'scoped memory for tpu_custom_call.1']
    %11 = vsyncpa [#allocation3], 0
    // Predicated region
    $region2: #{tpu_custom_call.1} parent=1 // pred_check
      _
    $region3: #{tpu_custom_call.1} parent=1 // pred_check_branch
      %13 = sbr.rel (0) target = $region5
    $region4: #{tpu_custom_call.1} parent=1 // pred_region
      _
    $region5: #{tpu_custom_call.1} parent=1 // pred_fallthru
      _
    // Predicated region
    $region6: #{tpu_custom_call.1} parent=1 // pred_check
      _
    $region7: #{tpu_custom_call.1} parent=1 // pred_check_branch
      %15 = sbr.rel (0) target = $region9
    $region8: #{tpu_custom_call.1} parent=1 // pred_region
      %s17 = ssub.s32 16384, 16384
      %18 = vsyncadd [#allocation3], %s17
      %s19 = sshll.u32 [#allocation2], 4
      %s20 = int_to_ptr.vmem [resolvable:$true] %s19
      %25 = dma.hbm_to_vmem [thread:$0]  %s1, 16384, %s20, [#allocation3], 256, 256, 16
    $region9: #{tpu_custom_call.1} parent=1 // pred_fallthru
      _
    // Predicated region
    $region10: #{tpu_custom_call.1} parent=1 // pred_check
      _
    $region11: #{tpu_custom_call.1} parent=1 // pred_check_branch
      %27 = sbr.rel (0) target = $region13
    $region12: #{tpu_custom_call.1} parent=1 // pred_region
      _
    $region13: #{tpu_custom_call.1} parent=1 // pred_fallthru
      _
    // Predicated region
    $region14: #{tpu_custom_call.1} parent=1 // pred_check
      _
    $region15: #{tpu_custom_call.1} parent=1 // pred_check_branch
      %29 = sbr.rel (0) target = $region17
    $region16: #{tpu_custom_call.1} parent=1 // pred_region
      _
    $region17: #{tpu_custom_call.1} parent=1 // pred_fallthru
      _
    // Predicated region
    $region18: #{tpu_custom_call.1} parent=1 // pred_check
      _
    $region19: #{tpu_custom_call.1} parent=1 // pred_check_branch
      %31 = sbr.rel (0) target = $region21
    $region20: #{tpu_custom_call.1} parent=1 // pred_region
      _
    $region21: #{tpu_custom_call.1} parent=1 // pred_fallthru
      _
    // Predicated region
    $region22: #{tpu_custom_call.1} parent=1 // pred_check
      _
    $region23: #{tpu_custom_call.1} parent=1 // pred_check_branch
      %33 = sbr.rel (0) target = $region25
    $region24: #{tpu_custom_call.1} parent=1 // pred_region
      _
    $region25: #{tpu_custom_call.1} parent=1 // pred_fallthru
      _
    // Predicated region
    $region26: #{tpu_custom_call.1} parent=1 // pred_check
      _
    $region27: #{tpu_custom_call.1} parent=1 // pred_check_branch
      %35 = sbr.rel (0) target = $region29
    $region28: #{tpu_custom_call.1} parent=1 // pred_region
      %36 = dma.done [#allocation3], 16384
    $region29: #{tpu_custom_call.1} parent=1 // pred_fallthru
      _
    %v38 = vld [vmem:[%s0] sm:$0xf]
    %v39 = vld [vmem:[%s0 + $0x4] sm:$0xf]
    %v40 = vld [vmem:[%s0 + $0x8] sm:$0xf]
    %v41 = vld [vmem:[%s0 + $0xc] sm:$0xf]
    %v42 = vld [vmem:[%s0 + $0x10] sm:$0xf]
    %v43 = vld [vmem:[%s0 + $0x14] sm:$0xf]
    %v44 = vld [vmem:[%s0 + $0x18] sm:$0xf]
    %v45 = vld [vmem:[%s0 + $0x1c] sm:$0xf]
    %v46 = vld [vmem:[%s0 + $0x20] sm:$0xf]
    %v47 = vld [vmem:[%s0 + $0x24] sm:$0xf]
    %v48 = vld [vmem:[%s0 + $0x28] sm:$0xf]
    %v49 = vld [vmem:[%s0 + $0x2c] sm:$0xf]
    %v50 = vld [vmem:[%s0 + $0x30] sm:$0xf]
    %v51 = vld [vmem:[%s0 + $0x34] sm:$0xf]
    %v52 = vld [vmem:[%s0 + $0x38] sm:$0xf]
    %v53 = vld [vmem:[%s0 + $0x3c] sm:$0xf]
    %v54 = vld [vmem:[%s0 + $0x40] sm:$0xf]
    %v55 = vld [vmem:[%s0 + $0x44] sm:$0xf]
    %v56 = vld [vmem:[%s0 + $0x48] sm:$0xf]
    %v57 = vld [vmem:[%s0 + $0x4c] sm:$0xf]
    %v58 = vld [vmem:[%s0 + $0x50] sm:$0xf]
    %v59 = vld [vmem:[%s0 + $0x54] sm:$0xf]
    %v60 = vld [vmem:[%s0 + $0x58] sm:$0xf]
    %v61 = vld [vmem:[%s0 + $0x5c] sm:$0xf]
    %v62 = vld [vmem:[%s0 + $0x60] sm:$0xf]
    %v63 = vld [vmem:[%s0 + $0x64] sm:$0xf]
    %v64 = vld [vmem:[%s0 + $0x68] sm:$0xf]
    %v65 = vld [vmem:[%s0 + $0x6c] sm:$0xf]
    %v66 = vld [vmem:[%s0 + $0x70] sm:$0xf]
    %v67 = vld [vmem:[%s0 + $0x74] sm:$0xf]
    %v68 = vld [vmem:[%s0 + $0x78] sm:$0xf]
    %v69 = vld [vmem:[%s0 + $0x7c] sm:$0xf]
    %v70 = vld [vmem:[%s0 + $0x80] sm:$0xf]
    %v71 = vld [vmem:[%s0 + $0x84] sm:$0xf]
    %v72 = vld [vmem:[%s0 + $0x88] sm:$0xf]
    %v73 = vld [vmem:[%s0 + $0x8c] sm:$0xf]
    %v74 = vld [vmem:[%s0 + $0x90] sm:$0xf]
    %v75 = vld [vmem:[%s0 + $0x94] sm:$0xf]
    %v76 = vld [vmem:[%s0 + $0x98] sm:$0xf]
    %v77 = vld [vmem:[%s0 + $0x9c] sm:$0xf]
    %v78 = vld [vmem:[%s0 + $0xa0] sm:$0xf]
    %v79 = vld [vmem:[%s0 + $0xa4] sm:$0xf]
    %v80 = vld [vmem:[%s0 + $0xa8] sm:$0xf]
    %v81 = vld [vmem:[%s0 + $0xac] sm:$0xf]
    %v82 = vld [vmem:[%s0 + $0xb0] sm:$0xf]
    %v83 = vld [vmem:[%s0 + $0xb4] sm:$0xf]
    %v84 = vld [vmem:[%s0 + $0xb8] sm:$0xf]
    %v85 = vld [vmem:[%s0 + $0xbc] sm:$0xf]
    %v86 = vld [vmem:[%s0 + $0xc0] sm:$0xf]
    %v87 = vld [vmem:[%s0 + $0xc4] sm:$0xf]
    %v88 = vld [vmem:[%s0 + $0xc8] sm:$0xf]
    %v89 = vld [vmem:[%s0 + $0xcc] sm:$0xf]
    %v90 = vld [vmem:[%s0 + $0xd0] sm:$0xf]
    %v91 = vld [vmem:[%s0 + $0xd4] sm:$0xf]
    %v92 = vld [vmem:[%s0 + $0xd8] sm:$0xf]
    %v93 = vld [vmem:[%s0 + $0xdc] sm:$0xf]
    %v94 = vld [vmem:[%s0 + $0xe0] sm:$0xf]
    %v95 = vld [vmem:[%s0 + $0xe4] sm:$0xf]
    %v96 = vld [vmem:[%s0 + $0xe8] sm:$0xf]
    %v97 = vld [vmem:[%s0 + $0xec] sm:$0xf]
    %v98 = vld [vmem:[%s0 + $0xf0] sm:$0xf]
    %v99 = vld [vmem:[%s0 + $0xf4] sm:$0xf]
    %v100 = vld [vmem:[%s0 + $0xf8] sm:$0xf]
    %v101 = vld [vmem:[%s0 + $0xfc] sm:$0xf]
    %v102 = vld [vmem:[%s2] sm:$0xf]
    %v103 = vld [vmem:[%s2 + $0x4] sm:$0xf]
    %v104 = vld [vmem:[%s2 + $0x8] sm:$0xf]
    %v105 = vld [vmem:[%s2 + $0xc] sm:$0xf]
    %v170 = vunpack.c.l.b16 %v38
    %v171 = vunpack.c.l.b16 %v39
    %v172 = vunpack.c.l.b16 %v40
    %v173 = vunpack.c.l.b16 %v41
    %v174 = vunpack.c.l.b16 %v42
    %v175 = vunpack.c.l.b16 %v43
    %v176 = vunpack.c.l.b16 %v44
    %v177 = vunpack.c.l.b16 %v45
    %v178 = vunpack.c.l.b16 %v46
    %v179 = vunpack.c.l.b16 %v47
    %v180 = vunpack.c.l.b16 %v48
    %v181 = vunpack.c.l.b16 %v49
    %v182 = vunpack.c.l.b16 %v50
    %v183 = vunpack.c.l.b16 %v51
    %v184 = vunpack.c.l.b16 %v52
    %v185 = vunpack.c.l.b16 %v53
    %v186 = vunpack.c.l.b16 %v54
    %v187 = vunpack.c.l.b16 %v55
    %v188 = vunpack.c.l.b16 %v56
    %v189 = vunpack.c.l.b16 %v57
    %v190 = vunpack.c.l.b16 %v58
    %v191 = vunpack.c.l.b16 %v59
    %v192 = vunpack.c.l.b16 %v60
    %v193 = vunpack.c.l.b16 %v61
    %v194 = vunpack.c.l.b16 %v62
    %v195 = vunpack.c.l.b16 %v63
    %v196 = vunpack.c.l.b16 %v64
    %v197 = vunpack.c.l.b16 %v65
    %v198 = vunpack.c.l.b16 %v66
    %v199 = vunpack.c.l.b16 %v67
    %v200 = vunpack.c.l.b16 %v68
    %v201 = vunpack.c.l.b16 %v69
    %v202 = vunpack.c.l.b16 %v70
    %v203 = vunpack.c.l.b16 %v71
    %v204 = vunpack.c.l.b16 %v72
    %v205 = vunpack.c.l.b16 %v73
    %v206 = vunpack.c.l.b16 %v74
    %v207 = vunpack.c.l.b16 %v75
    %v208 = vunpack.c.l.b16 %v76
    %v209 = vunpack.c.l.b16 %v77
    %v210 = vunpack.c.l.b16 %v78
    %v211 = vunpack.c.l.b16 %v79
    %v212 = vunpack.c.l.b16 %v80
    %v213 = vunpack.c.l.b16 %v81
    %v214 = vunpack.c.l.b16 %v82
    %v215 = vunpack.c.l.b16 %v83
    %v216 = vunpack.c.l.b16 %v84
    %v217 = vunpack.c.l.b16 %v85
    %v218 = vunpack.c.l.b16 %v86
    %v219 = vunpack.c.l.b16 %v87
    %v220 = vunpack.c.l.b16 %v88
    %v221 = vunpack.c.l.b16 %v89
    %v222 = vunpack.c.l.b16 %v90
    %v223 = vunpack.c.l.b16 %v91
    %v224 = vunpack.c.l.b16 %v92
    %v225 = vunpack.c.l.b16 %v93
    %v226 = vunpack.c.l.b16 %v94
    %v227 = vunpack.c.l.b16 %v95
    %v228 = vunpack.c.l.b16 %v96
    %v229 = vunpack.c.l.b16 %v97
    %v230 = vunpack.c.l.b16 %v98
    %v231 = vunpack.c.l.b16 %v99
    %v232 = vunpack.c.l.b16 %v100
    %v233 = vunpack.c.l.b16 %v101
    %v234 = vpack.c.b16 %v171, %v170
    %v235 = vpack.c.b16 %v173, %v172
    %v236 = vpack.c.b16 %v175, %v174
    %v237 = vpack.c.b16 %v177, %v176
    %v238 = vpack.c.b16 %v179, %v178
    %v239 = vpack.c.b16 %v181, %v180
    %v240 = vpack.c.b16 %v183, %v182
    %v241 = vpack.c.b16 %v185, %v184
    %v242 = vpack.c.b16 %v187, %v186
    %v243 = vpack.c.b16 %v189, %v188
    %v244 = vpack.c.b16 %v191, %v190
    %v245 = vpack.c.b16 %v193, %v192
    %v246 = vpack.c.b16 %v195, %v194
    %v247 = vpack.c.b16 %v197, %v196
    %v248 = vpack.c.b16 %v199, %v198
    %v249 = vpack.c.b16 %v201, %v200
    %v250 = vpack.c.b16 %v203, %v202
    %v251 = vpack.c.b16 %v205, %v204
    %v252 = vpack.c.b16 %v207, %v206
    %v253 = vpack.c.b16 %v209, %v208
    %v254 = vpack.c.b16 %v211, %v210
    %v255 = vpack.c.b16 %v213, %v212
    %v256 = vpack.c.b16 %v215, %v214
    %v257 = vpack.c.b16 %v217, %v216
    %v258 = vpack.c.b16 %v219, %v218
    %v259 = vpack.c.b16 %v221, %v220
    %v260 = vpack.c.b16 %v223, %v222
    %v261 = vpack.c.b16 %v225, %v224
    %v262 = vpack.c.b16 %v227, %v226
    %v263 = vpack.c.b16 %v229, %v228
    %v264 = vpack.c.b16 %v231, %v230
    %v265 = vpack.c.b16 %v233, %v232
    %v270 = vunpack.c.l.b16 %v102
    %v271 = vunpack.c.l.b16 %v103
    %v272 = vunpack.c.l.b16 %v104
    %v273 = vunpack.c.l.b16 %v105
    %v274 = vpack.c.b16 %v271, %v270
    %v275 = vpack.c.b16 %v273, %v272
    %vm278 = vcmask 261120
    %v280 = vsel %vm278, %v234, 0
    %v283 = vsel %vm278, %v235, 0
    %v286 = vsel %vm278, %v236, 0
    %v289 = vsel %vm278, %v237, 0
    %v292 = vsel %vm278, %v238, 0
    %v295 = vsel %vm278, %v239, 0
    %v298 = vsel %vm278, %v240, 0
    %v301 = vsel %vm278, %v241, 0
    %v304 = vsel %vm278, %v242, 0
    %v307 = vsel %vm278, %v243, 0
    %v310 = vsel %vm278, %v244, 0
    %v313 = vsel %vm278, %v245, 0
    %v316 = vsel %vm278, %v246, 0
    %v319 = vsel %vm278, %v247, 0
    %v322 = vsel %vm278, %v248, 0
    %v325 = vsel %vm278, %v249, 0
    %v328 = vsel %vm278, %v250, 0
    %v331 = vsel %vm278, %v251, 0
    %v334 = vsel %vm278, %v252, 0
    %v337 = vsel %vm278, %v253, 0
    %v340 = vsel %vm278, %v254, 0
    %v343 = vsel %vm278, %v255, 0
    %v346 = vsel %vm278, %v256, 0
    %v349 = vsel %vm278, %v257, 0
    %v352 = vsel %vm278, %v258, 0
    %v355 = vsel %vm278, %v259, 0
    %v358 = vsel %vm278, %v260, 0
    %v361 = vsel %vm278, %v261, 0
    %v364 = vsel %vm278, %v262, 0
    %v367 = vsel %vm278, %v263, 0
    %v370 = vsel %vm278, %v264, 0
    %v373 = vsel %vm278, %v265, 0
    %375 = vmatprep.subr.bf16.mxu0 0
    %376 = vmatpush1.bf16.msra.mxu0 %v274
    %377 = vmatprep.subr.bf16.mxu0 0
    %378 = vmatpush1.bf16.msra.mxu0 %v275
    %379 = vmatprep.subr.bf16.mxu0 0
    %380 = vmatpush1.bf16.msra.mxu0 0
    %381 = vmatprep.subr.bf16.mxu0 0
    %382 = vmatpush1.bf16.msra.mxu0 0
    %383 = vmatprep.subr.bf16.mxu0 0
    %384 = vmatpush1.bf16.msra.mxu0 0
    %385 = vmatprep.subr.bf16.mxu0 0
    %386 = vmatpush1.bf16.msra.mxu0 0
    %387 = vmatprep.subr.bf16.mxu0 0
    %388 = vmatpush1.bf16.msra.mxu0 0
    %389 = vmatprep.subr.bf16.mxu0 0
    %390 = vmatpush1.bf16.msra.mxu0 0
    %391 = vmatprep.subr.bf16.mxu0 0
    %392 = vmatpush1.bf16.msra.mxu0 0
    %393 = vmatprep.subr.bf16.mxu0 0
    %394 = vmatpush1.bf16.msra.mxu0 0
    %395 = vmatprep.subr.bf16.mxu0 0
    %396 = vmatpush1.bf16.msra.mxu0 0
    %397 = vmatprep.subr.bf16.mxu0 0
    %398 = vmatpush1.bf16.msra.mxu0 0
    %399 = vmatprep.subr.bf16.mxu0 0
    %400 = vmatpush1.bf16.msra.mxu0 0
    %401 = vmatprep.subr.bf16.mxu0 0
    %402 = vmatpush1.bf16.msra.mxu0 0
    %403 = vmatprep.subr.bf16.mxu0 0
    %404 = vmatpush1.bf16.msra.mxu0 0
    %405 = vmatprep.subr.bf16.mxu0 0
    %406 = vmatpush1.bf16.msra.mxu0 0
    %407 = vmatprep.mubr.bf16.mxu0 0
    %408 = vmatmul.mubr.bf16.gmra.mrb[0].mxu0 %v280
    %v409 = vpop.f32.mrb[0].mxu0
    %v410 = vadd.f32 0.0, %v409
    %v411 = vpop.f32.mrb[0].mxu0
    %v412 = vpop.f32.mrb[0].mxu0
    %v413 = vadd.f32 0.0, %v412
    %v414 = vpop.f32.mrb[0].mxu0
    %415 = vmatprep.mubr.bf16.mxu0 0
    %416 = vmatmul.mubr.bf16.gmra.mrb[0].mxu0 %v283
    %v417 = vpop.f32.mrb[0].mxu0
    %v418 = vadd.f32 0.0, %v417
    %v419 = vpop.f32.mrb[0].mxu0
    %v420 = vpop.f32.mrb[0].mxu0
    %v421 = vadd.f32 0.0, %v420
    %v422 = vpop.f32.mrb[0].mxu0
    %423 = vmatprep.mubr.bf16.mxu0 0
    %424 = vmatmul.mubr.bf16.gmra.mrb[0].mxu0 %v286
    %v425 = vpop.f32.mrb[0].mxu0
    %v426 = vadd.f32 0.0, %v425
    %v427 = vpop.f32.mrb[0].mxu0
    %v428 = vpop.f32.mrb[0].mxu0
    %v429 = vadd.f32 0.0, %v428
    %v430 = vpop.f32.mrb[0].mxu0
    %431 = vmatprep.mubr.bf16.mxu0 0
    %432 = vmatmul.mubr.bf16.gmra.mrb[0].mxu0 %v289
    %v433 = vpop.f32.mrb[0].mxu0
    %v434 = vadd.f32 0.0, %v433
    %v435 = vpop.f32.mrb[0].mxu0
    %v436 = vpop.f32.mrb[0].mxu0
    %v437 = vadd.f32 0.0, %v436
    %v438 = vpop.f32.mrb[0].mxu0
    %439 = vmatprep.mubr.bf16.mxu0 0
    %440 = vmatmul.mubr.bf16.gmra.mrb[0].mxu0 %v292
    %v441 = vpop.f32.mrb[0].mxu0
    %v442 = vadd.f32 0.0, %v441
    %v443 = vpop.f32.mrb[0].mxu0
    %v444 = vpop.f32.mrb[0].mxu0
    %v445 = vadd.f32 0.0, %v444
    %v446 = vpop.f32.mrb[0].mxu0
    %447 = vmatprep.mubr.bf16.mxu0 0
    %448 = vmatmul.mubr.bf16.gmra.mrb[0].mxu0 %v295
    %v449 = vpop.f32.mrb[0].mxu0
    %v450 = vadd.f32 0.0, %v449
    %v451 = vpop.f32.mrb[0].mxu0
    %v452 = vpop.f32.mrb[0].mxu0
    %v453 = vadd.f32 0.0, %v452
    %v454 = vpop.f32.mrb[0].mxu0
    %455 = vmatprep.mubr.bf16.mxu0 0
    %456 = vmatmul.mubr.bf16.gmra.mrb[0].mxu0 %v298
    %v457 = vpop.f32.mrb[0].mxu0
    %v458 = vadd.f32 0.0, %v457
    %v459 = vpop.f32.mrb[0].mxu0
    %v460 = vpop.f32.mrb[0].mxu0
    %v461 = vadd.f32 0.0, %v460
    %v462 = vpop.f32.mrb[0].mxu0
    %463 = vmatprep.mubr.bf16.mxu0 0
    %464 = vmatmul.mubr.bf16.gmra.mrb[0].mxu0 %v301
    %v465 = vpop.f32.mrb[0].mxu0
    %v466 = vadd.f32 0.0, %v465
    %v467 = vpop.f32.mrb[0].mxu0
    %v468 = vpop.f32.mrb[0].mxu0
    %v469 = vadd.f32 0.0, %v468
    %v470 = vpop.f32.mrb[0].mxu0
    %471 = vmatprep.mubr.bf16.mxu0 0
    %472 = vmatmul.mubr.bf16.gmra.mrb[0].mxu0 %v304
    %v473 = vpop.f32.mrb[0].mxu0
    %v474 = vadd.f32 0.0, %v473
    %v475 = vpop.f32.mrb[0].mxu0
    %v476 = vpop.f32.mrb[0].mxu0
    %v477 = vadd.f32 0.0, %v476
    %v478 = vpop.f32.mrb[0].mxu0
    %479 = vmatprep.mubr.bf16.mxu0 0
    %480 = vmatmul.mubr.bf16.gmra.mrb[0].mxu0 %v307
    %v481 = vpop.f32.mrb[0].mxu0
    %v482 = vadd.f32 0.0, %v481
    %v483 = vpop.f32.mrb[0].mxu0
    %v484 = vpop.f32.mrb[0].mxu0
    %v485 = vadd.f32 0.0, %v484
    %v486 = vpop.f32.mrb[0].mxu0
    %487 = vmatprep.mubr.bf16.mxu0 0
    %488 = vmatmul.mubr.bf16.gmra.mrb[0].mxu0 %v310
    %v489 = vpop.f32.mrb[0].mxu0
    %v490 = vadd.f32 0.0, %v489
    %v491 = vpop.f32.mrb[0].mxu0
    %v492 = vpop.f32.mrb[0].mxu0
    %v493 = vadd.f32 0.0, %v492
    %v494 = vpop.f32.mrb[0].mxu0
    %495 = vmatprep.mubr.bf16.mxu0 0
    %496 = vmatmul.mubr.bf16.gmra.mrb[0].mxu0 %v313
    %v497 = vpop.f32.mrb[0].mxu0
    %v498 = vadd.f32 0.0, %v497
    %v499 = vpop.f32.mrb[0].mxu0
    %v500 = vpop.f32.mrb[0].mxu0
    %v501 = vadd.f32 0.0, %v500
    %v502 = vpop.f32.mrb[0].mxu0
    %503 = vmatprep.mubr.bf16.mxu0 0
    %504 = vmatmul.mubr.bf16.gmra.mrb[0].mxu0 %v316
    %v505 = vpop.f32.mrb[0].mxu0
    %v506 = vadd.f32 0.0, %v505
    %v507 = vpop.f32.mrb[0].mxu0
    %v508 = vpop.f32.mrb[0].mxu0
    %v509 = vadd.f32 0.0, %v508
    %v510 = vpop.f32.mrb[0].mxu0
    %511 = vmatprep.mubr.bf16.mxu0 0
    %512 = vmatmul.mubr.bf16.gmra.mrb[0].mxu0 %v319
    %v513 = vpop.f32.mrb[0].mxu0
    %v514 = vadd.f32 0.0, %v513
    %v515 = vpop.f32.mrb[0].mxu0
    %v516 = vpop.f32.mrb[0].mxu0
    %v517 = vadd.f32 0.0, %v516
    %v518 = vpop.f32.mrb[0].mxu0
    %519 = vmatprep.mubr.bf16.mxu0 0
    %520 = vmatmul.mubr.bf16.gmra.mrb[0].mxu0 %v322
    %v521 = vpop.f32.mrb[0].mxu0
    %v522 = vadd.f32 0.0, %v521
    %v523 = vpop.f32.mrb[0].mxu0
    %v524 = vpop.f32.mrb[0].mxu0
    %v525 = vadd.f32 0.0, %v524
    %v526 = vpop.f32.mrb[0].mxu0
    %527 = vmatprep.mubr.bf16.mxu0 0
    %528 = vmatmul.mubr.bf16.gmra.mrb[0].mxu0 %v325
    %v529 = vpop.f32.mrb[0].mxu0
    %v530 = vadd.f32 0.0, %v529
    %v531 = vpop.f32.mrb[0].mxu0
    %v532 = vpop.f32.mrb[0].mxu0
    %v533 = vadd.f32 0.0, %v532
    %v534 = vpop.f32.mrb[0].mxu0
    %535 = vmatprep.mubr.bf16.mxu0 0
    %536 = vmatmul.mubr.bf16.gmra.mrb[0].mxu0 %v328
    %v537 = vpop.f32.mrb[0].mxu0
    %v538 = vadd.f32 0.0, %v537
    %v539 = vpop.f32.mrb[0].mxu0
    %v540 = vpop.f32.mrb[0].mxu0
    %v541 = vadd.f32 0.0, %v540
    %v542 = vpop.f32.mrb[0].mxu0
    %543 = vmatprep.mubr.bf16.mxu0 0
    %544 = vmatmul.mubr.bf16.gmra.mrb[0].mxu0 %v331
    %v545 = vpop.f32.mrb[0].mxu0
    %v546 = vadd.f32 0.0, %v545
    %v547 = vpop.f32.mrb[0].mxu0
    %v548 = vpop.f32.mrb[0].mxu0
    %v549 = vadd.f32 0.0, %v548
    %v550 = vpop.f32.mrb[0].mxu0
    %551 = vmatprep.mubr.bf16.mxu0 0
    %552 = vmatmul.mubr.bf16.gmra.mrb[0].mxu0 %v334
    %v553 = vpop.f32.mrb[0].mxu0
    %v554 = vadd.f32 0.0, %v553
    %v555 = vpop.f32.mrb[0].mxu0
    %v556 = vpop.f32.mrb[0].mxu0
    %v557 = vadd.f32 0.0, %v556
    %v558 = vpop.f32.mrb[0].mxu0
    %559 = vmatprep.mubr.bf16.mxu0 0
    %560 = vmatmul.mubr.bf16.gmra.mrb[0].mxu0 %v337
    %v561 = vpop.f32.mrb[0].mxu0
    %v562 = vadd.f32 0.0, %v561
    %v563 = vpop.f32.mrb[0].mxu0
    %v564 = vpop.f32.mrb[0].mxu0
    %v565 = vadd.f32 0.0, %v564
    %v566 = vpop.f32.mrb[0].mxu0
    %567 = vmatprep.mubr.bf16.mxu0 0
    %568 = vmatmul.mubr.bf16.gmra.mrb[0].mxu0 %v340
    %v569 = vpop.f32.mrb[0].mxu0
    %v570 = vadd.f32 0.0, %v569
    %v571 = vpop.f32.mrb[0].mxu0
    %v572 = vpop.f32.mrb[0].mxu0
    %v573 = vadd.f32 0.0, %v572
    %v574 = vpop.f32.mrb[0].mxu0
    %575 = vmatprep.mubr.bf16.mxu0 0
    %576 = vmatmul.mubr.bf16.gmra.mrb[0].mxu0 %v343
    %v577 = vpop.f32.mrb[0].mxu0
    %v578 = vadd.f32 0.0, %v577
    %v579 = vpop.f32.mrb[0].mxu0
    %v580 = vpop.f32.mrb[0].mxu0
    %v581 = vadd.f32 0.0, %v580
    %v582 = vpop.f32.mrb[0].mxu0
    %583 = vmatprep.mubr.bf16.mxu0 0
    %584 = vmatmul.mubr.bf16.gmra.mrb[0].mxu0 %v346
    %v585 = vpop.f32.mrb[0].mxu0
    %v586 = vadd.f32 0.0, %v585
    %v587 = vpop.f32.mrb[0].mxu0
    %v588 = vpop.f32.mrb[0].mxu0
    %v589 = vadd.f32 0.0, %v588
    %v590 = vpop.f32.mrb[0].mxu0
    %591 = vmatprep.mubr.bf16.mxu0 0
    %592 = vmatmul.mubr.bf16.gmra.mrb[0].mxu0 %v349
    %v593 = vpop.f32.mrb[0].mxu0
    %v594 = vadd.f32 0.0, %v593
    %v595 = vpop.f32.mrb[0].mxu0
    %v596 = vpop.f32.mrb[0].mxu0
    %v597 = vadd.f32 0.0, %v596
    %v598 = vpop.f32.mrb[0].mxu0
    %599 = vmatprep.mubr.bf16.mxu0 0
    %600 = vmatmul.mubr.bf16.gmra.mrb[0].mxu0 %v352
    %v601 = vpop.f32.mrb[0].mxu0
    %v602 = vadd.f32 0.0, %v601
    %v603 = vpop.f32.mrb[0].mxu0
    %v604 = vpop.f32.mrb[0].mxu0
    %v605 = vadd.f32 0.0, %v604
    %v606 = vpop.f32.mrb[0].mxu0
    %607 = vmatprep.mubr.bf16.mxu0 0
    %608 = vmatmul.mubr.bf16.gmra.mrb[0].mxu0 %v355
    %v609 = vpop.f32.mrb[0].mxu0
    %v610 = vadd.f32 0.0, %v609
    %v611 = vpop.f32.mrb[0].mxu0
    %v612 = vpop.f32.mrb[0].mxu0
    %v613 = vadd.f32 0.0, %v612
    %v614 = vpop.f32.mrb[0].mxu0
    %615 = vmatprep.mubr.bf16.mxu0 0
    %616 = vmatmul.mubr.bf16.gmra.mrb[0].mxu0 %v358
    %v617 = vpop.f32.mrb[0].mxu0
    %v618 = vadd.f32 0.0, %v617
    %v619 = vpop.f32.mrb[0].mxu0
    %v620 = vpop.f32.mrb[0].mxu0
    %v621 = vadd.f32 0.0, %v620
    %v622 = vpop.f32.mrb[0].mxu0
    %623 = vmatprep.mubr.bf16.mxu0 0
    %624 = vmatmul.mubr.bf16.gmra.mrb[0].mxu0 %v361
    %v625 = vpop.f32.mrb[0].mxu0
    %v626 = vadd.f32 0.0, %v625
    %v627 = vpop.f32.mrb[0].mxu0
    %v628 = vpop.f32.mrb[0].mxu0
    %v629 = vadd.f32 0.0, %v628
    %v630 = vpop.f32.mrb[0].mxu0
    %631 = vmatprep.mubr.bf16.mxu0 0
    %632 = vmatmul.mubr.bf16.gmra.mrb[0].mxu0 %v364
    %v633 = vpop.f32.mrb[0].mxu0
    %v634 = vadd.f32 0.0, %v633
    %v635 = vpop.f32.mrb[0].mxu0
    %v636 = vpop.f32.mrb[0].mxu0
    %v637 = vadd.f32 0.0, %v636
    %v638 = vpop.f32.mrb[0].mxu0
    %639 = vmatprep.mubr.bf16.mxu0 0
    %640 = vmatmul.mubr.bf16.gmra.mrb[0].mxu0 %v367
    %v641 = vpop.f32.mrb[0].mxu0
    %v642 = vadd.f32 0.0, %v641
    %v643 = vpop.f32.mrb[0].mxu0
    %v644 = vpop.f32.mrb[0].mxu0
    %v645 = vadd.f32 0.0, %v644
    %v646 = vpop.f32.mrb[0].mxu0
    %647 = vmatprep.mubr.bf16.mxu0 0
    %648 = vmatmul.mubr.bf16.gmra.mrb[0].mxu0 %v370
    %v649 = vpop.f32.mrb[0].mxu0
    %v650 = vadd.f32 0.0, %v649
    %v651 = vpop.f32.mrb[0].mxu0
    %v652 = vpop.f32.mrb[0].mxu0
    %v653 = vadd.f32 0.0, %v652
    %v654 = vpop.f32.mrb[0].mxu0
    %655 = vmatprep.mubr.bf16.mxu0 0
    %656 = vmatmul.mubr.bf16.gmra.mrb[0].mxu0 %v373
    %v657 = vpop.f32.mrb[0].mxu0
    %v658 = vadd.f32 0.0, %v657
    %v659 = vpop.f32.mrb[0].mxu0
    %v660 = vpop.f32.mrb[0].mxu0
    %v661 = vadd.f32 0.0, %v660
    %v662 = vpop.f32.mrb[0].mxu0
    %663 = vdwg.mxu0
    %v664 = vld [vmem:[#allocation2] sm:$0xff]
    %v665 = vld [vmem:[#allocation2 + $0x8] sm:$0xff]
    %v666 = vld [vmem:[#allocation2 + $0x10] sm:$0xff]
    %v667 = vld [vmem:[#allocation2 + $0x18] sm:$0xff]
    %v668 = vld [vmem:[#allocation2 + $0x20] sm:$0xff]
    %v669 = vld [vmem:[#allocation2 + $0x28] sm:$0xff]
    %v670 = vld [vmem:[#allocation2 + $0x30] sm:$0xff]
    %v671 = vld [vmem:[#allocation2 + $0x38] sm:$0xff]
    %v672 = vld [vmem:[#allocation2 + $0x40] sm:$0xff]
    %v673 = vld [vmem:[#allocation2 + $0x48] sm:$0xff]
    %v674 = vld [vmem:[#allocation2 + $0x50] sm:$0xff]
    %v675 = vld [vmem:[#allocation2 + $0x58] sm:$0xff]
    %v676 = vld [vmem:[#allocation2 + $0x60] sm:$0xff]
    %v677 = vld [vmem:[#allocation2 + $0x68] sm:$0xff]
    %v678 = vld [vmem:[#allocation2 + $0x70] sm:$0xff]
    %v679 = vld [vmem:[#allocation2 + $0x78] sm:$0xff]
    %v680 = vld [vmem:[#allocation2 + $0x80] sm:$0xff]
    %v681 = vld [vmem:[#allocation2 + $0x88] sm:$0xff]
    %v682 = vld [vmem:[#allocation2 + $0x90] sm:$0xff]
    %v683 = vld [vmem:[#allocation2 + $0x98] sm:$0xff]
    %v684 = vld [vmem:[#allocation2 + $0xa0] sm:$0xff]
    %v685 = vld [vmem:[#allocation2 + $0xa8] sm:$0xff]
    %v686 = vld [vmem:[#allocation2 + $0xb0] sm:$0xff]
    %v687 = vld [vmem:[#allocation2 + $0xb8] sm:$0xff]
    %v688 = vld [vmem:[#allocation2 + $0xc0] sm:$0xff]
    %v689 = vld [vmem:[#allocation2 + $0xc8] sm:$0xff]
    %v690 = vld [vmem:[#allocation2 + $0xd0] sm:$0xff]
    %v691 = vld [vmem:[#allocation2 + $0xd8] sm:$0xff]
    %v692 = vld [vmem:[#allocation2 + $0xe0] sm:$0xff]
    %v693 = vld [vmem:[#allocation2 + $0xe8] sm:$0xff]
    %v694 = vld [vmem:[#allocation2 + $0xf0] sm:$0xff]
    %v695 = vld [vmem:[#allocation2 + $0xf8] sm:$0xff]
    %v696 = vld [vmem:[#allocation2 + $0x100] sm:$0xff]
    %v697 = vld [vmem:[#allocation2 + $0x108] sm:$0xff]
    %v698 = vld [vmem:[#allocation2 + $0x110] sm:$0xff]
    %v699 = vld [vmem:[#allocation2 + $0x118] sm:$0xff]
    %v700 = vld [vmem:[#allocation2 + $0x120] sm:$0xff]
    %v701 = vld [vmem:[#allocation2 + $0x128] sm:$0xff]
    %v702 = vld [vmem:[#allocation2 + $0x130] sm:$0xff]
    %v703 = vld [vmem:[#allocation2 + $0x138] sm:$0xff]
    %v704 = vld [vmem:[#allocation2 + $0x140] sm:$0xff]
    %v705 = vld [vmem:[#allocation2 + $0x148] sm:$0xff]
    %v706 = vld [vmem:[#allocation2 + $0x150] sm:$0xff]
    %v707 = vld [vmem:[#allocation2 + $0x158] sm:$0xff]
    %v708 = vld [vmem:[#allocation2 + $0x160] sm:$0xff]
    %v709 = vld [vmem:[#allocation2 + $0x168] sm:$0xff]
    %v710 = vld [vmem:[#allocation2 + $0x170] sm:$0xff]
    %v711 = vld [vmem:[#allocation2 + $0x178] sm:$0xff]
    %v712 = vld [vmem:[#allocation2 + $0x180] sm:$0xff]
    %v713 = vld [vmem:[#allocation2 + $0x188] sm:$0xff]
    %v714 = vld [vmem:[#allocation2 + $0x190] sm:$0xff]
    %v715 = vld [vmem:[#allocation2 + $0x198] sm:$0xff]
    %v716 = vld [vmem:[#allocation2 + $0x1a0] sm:$0xff]
    %v717 = vld [vmem:[#allocation2 + $0x1a8] sm:$0xff]
    %v718 = vld [vmem:[#allocation2 + $0x1b0] sm:$0xff]
    %v719 = vld [vmem:[#allocation2 + $0x1b8] sm:$0xff]
    %v720 = vld [vmem:[#allocation2 + $0x1c0] sm:$0xff]
    %v721 = vld [vmem:[#allocation2 + $0x1c8] sm:$0xff]
    %v722 = vld [vmem:[#allocation2 + $0x1d0] sm:$0xff]
    %v723 = vld [vmem:[#allocation2 + $0x1d8] sm:$0xff]
    %v724 = vld [vmem:[#allocation2 + $0x1e0] sm:$0xff]
    %v725 = vld [vmem:[#allocation2 + $0x1e8] sm:$0xff]
    %v726 = vld [vmem:[#allocation2 + $0x1f0] sm:$0xff]
    %v727 = vld [vmem:[#allocation2 + $0x1f8] sm:$0xff]
    %v728 = vld [vmem:[#allocation2 + $0x200] sm:$0xff]
    %v729 = vld [vmem:[#allocation2 + $0x208] sm:$0xff]
    %v730 = vld [vmem:[#allocation2 + $0x210] sm:$0xff]
    %v731 = vld [vmem:[#allocation2 + $0x218] sm:$0xff]
    %v732 = vld [vmem:[#allocation2 + $0x220] sm:$0xff]
    %v733 = vld [vmem:[#allocation2 + $0x228] sm:$0xff]
    %v734 = vld [vmem:[#allocation2 + $0x230] sm:$0xff]
    %v735 = vld [vmem:[#allocation2 + $0x238] sm:$0xff]
    %v736 = vld [vmem:[#allocation2 + $0x240] sm:$0xff]
    %v737 = vld [vmem:[#allocation2 + $0x248] sm:$0xff]
    %v738 = vld [vmem:[#allocation2 + $0x250] sm:$0xff]
    %v739 = vld [vmem:[#allocation2 + $0x258] sm:$0xff]
    %v740 = vld [vmem:[#allocation2 + $0x260] sm:$0xff]
    %v741 = vld [vmem:[#allocation2 + $0x268] sm:$0xff]
    %v742 = vld [vmem:[#allocation2 + $0x270] sm:$0xff]
    %v743 = vld [vmem:[#allocation2 + $0x278] sm:$0xff]
    %v744 = vld [vmem:[#allocation2 + $0x280] sm:$0xff]
    %v745 = vld [vmem:[#allocation2 + $0x288] sm:$0xff]
    %v746 = vld [vmem:[#allocation2 + $0x290] sm:$0xff]
    %v747 = vld [vmem:[#allocation2 + $0x298] sm:$0xff]
    %v748 = vld [vmem:[#allocation2 + $0x2a0] sm:$0xff]
    %v749 = vld [vmem:[#allocation2 + $0x2a8] sm:$0xff]
    %v750 = vld [vmem:[#allocation2 + $0x2b0] sm:$0xff]
    %v751 = vld [vmem:[#allocation2 + $0x2b8] sm:$0xff]
    %v752 = vld [vmem:[#allocation2 + $0x2c0] sm:$0xff]
    %v753 = vld [vmem:[#allocation2 + $0x2c8] sm:$0xff]
    %v754 = vld [vmem:[#allocation2 + $0x2d0] sm:$0xff]
    %v755 = vld [vmem:[#allocation2 + $0x2d8] sm:$0xff]
    %v756 = vld [vmem:[#allocation2 + $0x2e0] sm:$0xff]
    %v757 = vld [vmem:[#allocation2 + $0x2e8] sm:$0xff]
    %v758 = vld [vmem:[#allocation2 + $0x2f0] sm:$0xff]
    %v759 = vld [vmem:[#allocation2 + $0x2f8] sm:$0xff]
    %v760 = vld [vmem:[#allocation2 + $0x300] sm:$0xff]
    %v761 = vld [vmem:[#allocation2 + $0x308] sm:$0xff]
    %v762 = vld [vmem:[#allocation2 + $0x310] sm:$0xff]
    %v763 = vld [vmem:[#allocation2 + $0x318] sm:$0xff]
    %v764 = vld [vmem:[#allocation2 + $0x320] sm:$0xff]
    %v765 = vld [vmem:[#allocation2 + $0x328] sm:$0xff]
    %v766 = vld [vmem:[#allocation2 + $0x330] sm:$0xff]
    %v767 = vld [vmem:[#allocation2 + $0x338] sm:$0xff]
    %v768 = vld [vmem:[#allocation2 + $0x340] sm:$0xff]
    %v769 = vld [vmem:[#allocation2 + $0x348] sm:$0xff]
    %v770 = vld [vmem:[#allocation2 + $0x350] sm:$0xff]
    %v771 = vld [vmem:[#allocation2 + $0x358] sm:$0xff]
    %v772 = vld [vmem:[#allocation2 + $0x360] sm:$0xff]
    %v773 = vld [vmem:[#allocation2 + $0x368] sm:$0xff]
    %v774 = vld [vmem:[#allocation2 + $0x370] sm:$0xff]
    %v775 = vld [vmem:[#allocation2 + $0x378] sm:$0xff]
    %v776 = vld [vmem:[#allocation2 + $0x380] sm:$0xff]
    %v777 = vld [vmem:[#allocation2 + $0x388] sm:$0xff]
    %v778 = vld [vmem:[#allocation2 + $0x390] sm:$0xff]
    %v779 = vld [vmem:[#allocation2 + $0x398] sm:$0xff]
    %v780 = vld [vmem:[#allocation2 + $0x3a0] sm:$0xff]
    %v781 = vld [vmem:[#allocation2 + $0x3a8] sm:$0xff]
    %v782 = vld [vmem:[#allocation2 + $0x3b0] sm:$0xff]
    %v783 = vld [vmem:[#allocation2 + $0x3b8] sm:$0xff]
    %v784 = vld [vmem:[#allocation2 + $0x3c0] sm:$0xff]
    %v785 = vld [vmem:[#allocation2 + $0x3c8] sm:$0xff]
    %v786 = vld [vmem:[#allocation2 + $0x3d0] sm:$0xff]
    %v787 = vld [vmem:[#allocation2 + $0x3d8] sm:$0xff]
    %v788 = vld [vmem:[#allocation2 + $0x3e0] sm:$0xff]
    %v789 = vld [vmem:[#allocation2 + $0x3e8] sm:$0xff]
    %v790 = vld [vmem:[#allocation2 + $0x3f0] sm:$0xff]
    %v791 = vld [vmem:[#allocation2 + $0x3f8] sm:$0xff]
    %v792 = vpack.c.bf16 %v413, %v410
    %v793 = vpack.c.bf16 %v421, %v418
    %v794 = vpack.c.bf16 %v429, %v426
    %v795 = vpack.c.bf16 %v437, %v434
    %v796 = vpack.c.bf16 %v445, %v442
    %v797 = vpack.c.bf16 %v453, %v450
    %v798 = vpack.c.bf16 %v461, %v458
    %v799 = vpack.c.bf16 %v469, %v466
    %v800 = vpack.c.bf16 %v477, %v474
    %v801 = vpack.c.bf16 %v485, %v482
    %v802 = vpack.c.bf16 %v493, %v490
    %v803 = vpack.c.bf16 %v501, %v498
    %v804 = vpack.c.bf16 %v509, %v506
    %v805 = vpack.c.bf16 %v517, %v514
    %v806 = vpack.c.bf16 %v525, %v522
    %v807 = vpack.c.bf16 %v533, %v530
    %v808 = vpack.c.bf16 %v541, %v538
    %v809 = vpack.c.bf16 %v549, %v546
    %v810 = vpack.c.bf16 %v557, %v554
    %v811 = vpack.c.bf16 %v565, %v562
    %v812 = vpack.c.bf16 %v573, %v570
    %v813 = vpack.c.bf16 %v581, %v578
    %v814 = vpack.c.bf16 %v589, %v586
    %v815 = vpack.c.bf16 %v597, %v594
    %v816 = vpack.c.bf16 %v605, %v602
    %v817 = vpack.c.bf16 %v613, %v610
    %v818 = vpack.c.bf16 %v621, %v618
    %v819 = vpack.c.bf16 %v629, %v626
    %v820 = vpack.c.bf16 %v637, %v634
    %v821 = vpack.c.bf16 %v645, %v642
    %v822 = vpack.c.bf16 %v653, %v650
    %v823 = vpack.c.bf16 %v661, %v658
    %v952 = vunpack.c.l.b16 %v664
    %v953 = vunpack.c.h.b16 %v664
    %v954 = vunpack.c.l.b16 %v665
    %v955 = vunpack.c.h.b16 %v665
    %v956 = vunpack.c.l.b16 %v666
    %v957 = vunpack.c.h.b16 %v666
    %v958 = vunpack.c.l.b16 %v667
    %v959 = vunpack.c.h.b16 %v667
    %v960 = vunpack.c.l.b16 %v668
    %v961 = vunpack.c.h.b16 %v668
    %v962 = vunpack.c.l.b16 %v669
    %v963 = vunpack.c.h.b16 %v669
    %v964 = vunpack.c.l.b16 %v670
    %v965 = vunpack.c.h.b16 %v670
    %v966 = vunpack.c.l.b16 %v671
    %v967 = vunpack.c.h.b16 %v671
    %v968 = vunpack.c.l.b16 %v672
    %v969 = vunpack.c.h.b16 %v672
    %v970 = vunpack.c.l.b16 %v673
    %v971 = vunpack.c.h.b16 %v673
    %v972 = vunpack.c.l.b16 %v674
    %v973 = vunpack.c.h.b16 %v674
    %v974 = vunpack.c.l.b16 %v675
    %v975 = vunpack.c.h.b16 %v675
    %v976 = vunpack.c.l.b16 %v676
    %v977 = vunpack.c.h.b16 %v676
    %v978 = vunpack.c.l.b16 %v677
    %v979 = vunpack.c.h.b16 %v677
    %v980 = vunpack.c.l.b16 %v678
    %v981 = vunpack.c.h.b16 %v678
    %v982 = vunpack.c.l.b16 %v679
    %v983 = vunpack.c.h.b16 %v679
    %v984 = vunpack.c.l.b16 %v680
    %v985 = vunpack.c.h.b16 %v680
    %v986 = vunpack.c.l.b16 %v681
    %v987 = vunpack.c.h.b16 %v681
    %v988 = vunpack.c.l.b16 %v682
    %v989 = vunpack.c.h.b16 %v682
    %v990 = vunpack.c.l.b16 %v683
    %v991 = vunpack.c.h.b16 %v683
    %v992 = vunpack.c.l.b16 %v684
    %v993 = vunpack.c.h.b16 %v684
    %v994 = vunpack.c.l.b16 %v685
    %v995 = vunpack.c.h.b16 %v685
    %v996 = vunpack.c.l.b16 %v686
    %v997 = vunpack.c.h.b16 %v686
    %v998 = vunpack.c.l.b16 %v687
    %v999 = vunpack.c.h.b16 %v687
    %v1000 = vunpack.c.l.b16 %v688
    %v1001 = vunpack.c.h.b16 %v688
    %v1002 = vunpack.c.l.b16 %v689
    %v1003 = vunpack.c.h.b16 %v689
    %v1004 = vunpack.c.l.b16 %v690
    %v1005 = vunpack.c.h.b16 %v690
    %v1006 = vunpack.c.l.b16 %v691
    %v1007 = vunpack.c.h.b16 %v691
    %v1008 = vunpack.c.l.b16 %v692
    %v1009 = vunpack.c.h.b16 %v692
    %v1010 = vunpack.c.l.b16 %v693
    %v1011 = vunpack.c.h.b16 %v693
    %v1012 = vunpack.c.l.b16 %v694
    %v1013 = vunpack.c.h.b16 %v694
    %v1014 = vunpack.c.l.b16 %v695
    %v1015 = vunpack.c.h.b16 %v695
    %v1016 = vunpack.c.l.b16 %v696
    %v1017 = vunpack.c.h.b16 %v696
    %v1018 = vunpack.c.l.b16 %v697
    %v1019 = vunpack.c.h.b16 %v697
    %v1020 = vunpack.c.l.b16 %v698
    %v1021 = vunpack.c.h.b16 %v698
    %v1022 = vunpack.c.l.b16 %v699
    %v1023 = vunpack.c.h.b16 %v699
    %v1024 = vunpack.c.l.b16 %v700
    %v1025 = vunpack.c.h.b16 %v700
    %v1026 = vunpack.c.l.b16 %v701
    %v1027 = vunpack.c.h.b16 %v701
    %v1028 = vunpack.c.l.b16 %v702
    %v1029 = vunpack.c.h.b16 %v702
    %v1030 = vunpack.c.l.b16 %v703
    %v1031 = vunpack.c.h.b16 %v703
    %v1032 = vunpack.c.l.b16 %v704
    %v1033 = vunpack.c.h.b16 %v704
    %v1034 = vunpack.c.l.b16 %v705
    %v1035 = vunpack.c.h.b16 %v705
    %v1036 = vunpack.c.l.b16 %v706
    %v1037 = vunpack.c.h.b16 %v706
    %v1038 = vunpack.c.l.b16 %v707
    %v1039 = vunpack.c.h.b16 %v707
    %v1040 = vunpack.c.l.b16 %v708
    %v1041 = vunpack.c.h.b16 %v708
    %v1042 = vunpack.c.l.b16 %v709
    %v1043 = vunpack.c.h.b16 %v709
    %v1044 = vunpack.c.l.b16 %v710
    %v1045 = vunpack.c.h.b16 %v710
    %v1046 = vunpack.c.l.b16 %v711
    %v1047 = vunpack.c.h.b16 %v711
    %v1048 = vunpack.c.l.b16 %v712
    %v1049 = vunpack.c.h.b16 %v712
    %v1050 = vunpack.c.l.b16 %v713
    %v1051 = vunpack.c.h.b16 %v713
    %v1052 = vunpack.c.l.b16 %v714
    %v1053 = vunpack.c.h.b16 %v714
    %v1054 = vunpack.c.l.b16 %v715
    %v1055 = vunpack.c.h.b16 %v715
    %v1056 = vunpack.c.l.b16 %v716
    %v1057 = vunpack.c.h.b16 %v716
    %v1058 = vunpack.c.l.b16 %v717
    %v1059 = vunpack.c.h.b16 %v717
    %v1060 = vunpack.c.l.b16 %v718
    %v1061 = vunpack.c.h.b16 %v718
    %v1062 = vunpack.c.l.b16 %v719
    %v1063 = vunpack.c.h.b16 %v719
    %v1064 = vunpack.c.l.b16 %v720
    %v1065 = vunpack.c.h.b16 %v720
    %v1066 = vunpack.c.l.b16 %v721
    %v1067 = vunpack.c.h.b16 %v721
    %v1068 = vunpack.c.l.b16 %v722
    %v1069 = vunpack.c.h.b16 %v722
    %v1070 = vunpack.c.l.b16 %v723
    %v1071 = vunpack.c.h.b16 %v723
    %v1072 = vunpack.c.l.b16 %v724
    %v1073 = vunpack.c.h.b16 %v724
    %v1074 = vunpack.c.l.b16 %v725
    %v1075 = vunpack.c.h.b16 %v725
    %v1076 = vunpack.c.l.b16 %v726
    %v1077 = vunpack.c.h.b16 %v726
    %v1078 = vunpack.c.l.b16 %v727
    %v1079 = vunpack.c.h.b16 %v727
    %v1080 = vunpack.c.l.b16 %v728
    %v1081 = vunpack.c.h.b16 %v728
    %v1082 = vunpack.c.l.b16 %v729
    %v1083 = vunpack.c.h.b16 %v729
    %v1084 = vunpack.c.l.b16 %v730
    %v1085 = vunpack.c.h.b16 %v730
    %v1086 = vunpack.c.l.b16 %v731
    %v1087 = vunpack.c.h.b16 %v731
    %v1088 = vunpack.c.l.b16 %v732
    %v1089 = vunpack.c.h.b16 %v732
    %v1090 = vunpack.c.l.b16 %v733
    %v1091 = vunpack.c.h.b16 %v733
    %v1092 = vunpack.c.l.b16 %v734
    %v1093 = vunpack.c.h.b16 %v734
    %v1094 = vunpack.c.l.b16 %v735
    %v1095 = vunpack.c.h.b16 %v735
    %v1096 = vunpack.c.l.b16 %v736
    %v1097 = vunpack.c.h.b16 %v736
    %v1098 = vunpack.c.l.b16 %v737
    %v1099 = vunpack.c.h.b16 %v737
    %v1100 = vunpack.c.l.b16 %v738
    %v1101 = vunpack.c.h.b16 %v738
    %v1102 = vunpack.c.l.b16 %v739
    %v1103 = vunpack.c.h.b16 %v739
    %v1104 = vunpack.c.l.b16 %v740
    %v1105 = vunpack.c.h.b16 %v740
    %v1106 = vunpack.c.l.b16 %v741
    %v1107 = vunpack.c.h.b16 %v741
    %v1108 = vunpack.c.l.b16 %v742
    %v1109 = vunpack.c.h.b16 %v742
    %v1110 = vunpack.c.l.b16 %v743
    %v1111 = vunpack.c.h.b16 %v743
    %v1112 = vunpack.c.l.b16 %v744
    %v1113 = vunpack.c.h.b16 %v744
    %v1114 = vunpack.c.l.b16 %v745
    %v1115 = vunpack.c.h.b16 %v745
    %v1116 = vunpack.c.l.b16 %v746
    %v1117 = vunpack.c.h.b16 %v746
    %v1118 = vunpack.c.l.b16 %v747
    %v1119 = vunpack.c.h.b16 %v747
    %v1120 = vunpack.c.l.b16 %v748
    %v1121 = vunpack.c.h.b16 %v748
    %v1122 = vunpack.c.l.b16 %v749
    %v1123 = vunpack.c.h.b16 %v749
    %v1124 = vunpack.c.l.b16 %v750
    %v1125 = vunpack.c.h.b16 %v750
    %v1126 = vunpack.c.l.b16 %v751
    %v1127 = vunpack.c.h.b16 %v751
    %v1128 = vunpack.c.l.b16 %v752
    %v1129 = vunpack.c.h.b16 %v752
    %v1130 = vunpack.c.l.b16 %v753
    %v1131 = vunpack.c.h.b16 %v753
    %v1132 = vunpack.c.l.b16 %v754
    %v1133 = vunpack.c.h.b16 %v754
    %v1134 = vunpack.c.l.b16 %v755
    %v1135 = vunpack.c.h.b16 %v755
    %v1136 = vunpack.c.l.b16 %v756
    %v1137 = vunpack.c.h.b16 %v756
    %v1138 = vunpack.c.l.b16 %v757
    %v1139 = vunpack.c.h.b16 %v757
    %v1140 = vunpack.c.l.b16 %v758
    %v1141 = vunpack.c.h.b16 %v758
    %v1142 = vunpack.c.l.b16 %v759
    %v1143 = vunpack.c.h.b16 %v759
    %v1144 = vunpack.c.l.b16 %v760
    %v1145 = vunpack.c.h.b16 %v760
    %v1146 = vunpack.c.l.b16 %v761
    %v1147 = vunpack.c.h.b16 %v761
    %v1148 = vunpack.c.l.b16 %v762
    %v1149 = vunpack.c.h.b16 %v762
    %v1150 = vunpack.c.l.b16 %v763
    %v1151 = vunpack.c.h.b16 %v763
    %v1152 = vunpack.c.l.b16 %v764
    %v1153 = vunpack.c.h.b16 %v764
    %v1154 = vunpack.c.l.b16 %v765
    %v1155 = vunpack.c.h.b16 %v765
    %v1156 = vunpack.c.l.b16 %v766
    %v1157 = vunpack.c.h.b16 %v766
    %v1158 = vunpack.c.l.b16 %v767
    %v1159 = vunpack.c.h.b16 %v767
    %v1160 = vunpack.c.l.b16 %v768
    %v1161 = vunpack.c.h.b16 %v768
    %v1162 = vunpack.c.l.b16 %v769
    %v1163 = vunpack.c.h.b16 %v769
    %v1164 = vunpack.c.l.b16 %v770
    %v1165 = vunpack.c.h.b16 %v770
    %v1166 = vunpack.c.l.b16 %v771
    %v1167 = vunpack.c.h.b16 %v771
    %v1168 = vunpack.c.l.b16 %v772
    %v1169 = vunpack.c.h.b16 %v772
    %v1170 = vunpack.c.l.b16 %v773
    %v1171 = vunpack.c.h.b16 %v773
    %v1172 = vunpack.c.l.b16 %v774
    %v1173 = vunpack.c.h.b16 %v774
    %v1174 = vunpack.c.l.b16 %v775
    %v1175 = vunpack.c.h.b16 %v775
    %v1176 = vunpack.c.l.b16 %v776
    %v1177 = vunpack.c.h.b16 %v776
    %v1178 = vunpack.c.l.b16 %v777
    %v1179 = vunpack.c.h.b16 %v777
    %v1180 = vunpack.c.l.b16 %v778
    %v1181 = vunpack.c.h.b16 %v778
    %v1182 = vunpack.c.l.b16 %v779
    %v1183 = vunpack.c.h.b16 %v779
    %v1184 = vunpack.c.l.b16 %v780
    %v1185 = vunpack.c.h.b16 %v780
    %v1186 = vunpack.c.l.b16 %v781
    %v1187 = vunpack.c.h.b16 %v781
    %v1188 = vunpack.c.l.b16 %v782
    %v1189 = vunpack.c.h.b16 %v782
    %v1190 = vunpack.c.l.b16 %v783
    %v1191 = vunpack.c.h.b16 %v783
    %v1192 = vunpack.c.l.b16 %v784
    %v1193 = vunpack.c.h.b16 %v784
    %v1194 = vunpack.c.l.b16 %v785
    %v1195 = vunpack.c.h.b16 %v785
    %v1196 = vunpack.c.l.b16 %v786
    %v1197 = vunpack.c.h.b16 %v786
    %v1198 = vunpack.c.l.b16 %v787
    %v1199 = vunpack.c.h.b16 %v787
    %v1200 = vunpack.c.l.b16 %v788
    %v1201 = vunpack.c.h.b16 %v788
    %v1202 = vunpack.c.l.b16 %v789
    %v1203 = vunpack.c.h.b16 %v789
    %v1204 = vunpack.c.l.b16 %v790
    %v1205 = vunpack.c.h.b16 %v790
    %v1206 = vunpack.c.l.b16 %v791
    %v1207 = vunpack.c.h.b16 %v791
    %v1208 = vpack.c.b16 %v956, %v952
    %v1209 = vpack.c.b16 %v957, %v953
    %v1210 = vpack.c.b16 %v958, %v954
    %v1211 = vpack.c.b16 %v959, %v955
    %v1212 = vpack.c.b16 %v964, %v960
    %v1213 = vpack.c.b16 %v965, %v961
    %v1214 = vpack.c.b16 %v966, %v962
    %v1215 = vpack.c.b16 %v967, %v963
    %v1216 = vpack.c.b16 %v972, %v968
    %v1217 = vpack.c.b16 %v973, %v969
    %v1218 = vpack.c.b16 %v974, %v970
    %v1219 = vpack.c.b16 %v975, %v971
    %v1220 = vpack.c.b16 %v980, %v976
    %v1221 = vpack.c.b16 %v981, %v977
    %v1222 = vpack.c.b16 %v982, %v978
    %v1223 = vpack.c.b16 %v983, %v979
    %v1224 = vpack.c.b16 %v988, %v984
    %v1225 = vpack.c.b16 %v989, %v985
    %v1226 = vpack.c.b16 %v990, %v986
    %v1227 = vpack.c.b16 %v991, %v987
    %v1228 = vpack.c.b16 %v996, %v992
    %v1229 = vpack.c.b16 %v997, %v993
    %v1230 = vpack.c.b16 %v998, %v994
    %v1231 = vpack.c.b16 %v999, %v995
    %v1232 = vpack.c.b16 %v1004, %v1000
    %v1233 = vpack.c.b16 %v1005, %v1001
    %v1234 = vpack.c.b16 %v1006, %v1002
    %v1235 = vpack.c.b16 %v1007, %v1003
    %v1236 = vpack.c.b16 %v1012, %v1008
    %v1237 = vpack.c.b16 %v1013, %v1009
    %v1238 = vpack.c.b16 %v1014, %v1010
    %v1239 = vpack.c.b16 %v1015, %v1011
    %v1240 = vpack.c.b16 %v1020, %v1016
    %v1241 = vpack.c.b16 %v1021, %v1017
    %v1242 = vpack.c.b16 %v1022, %v1018
    %v1243 = vpack.c.b16 %v1023, %v1019
    %v1244 = vpack.c.b16 %v1028, %v1024
    %v1245 = vpack.c.b16 %v1029, %v1025
    %v1246 = vpack.c.b16 %v1030, %v1026
    %v1247 = vpack.c.b16 %v1031, %v1027
    %v1248 = vpack.c.b16 %v1036, %v1032
    %v1249 = vpack.c.b16 %v1037, %v1033
    %v1250 = vpack.c.b16 %v1038, %v1034
    %v1251 = vpack.c.b16 %v1039, %v1035
    %v1252 = vpack.c.b16 %v1044, %v1040
    %v1253 = vpack.c.b16 %v1045, %v1041
    %v1254 = vpack.c.b16 %v1046, %v1042
    %v1255 = vpack.c.b16 %v1047, %v1043
    %v1256 = vpack.c.b16 %v1052, %v1048
    %v1257 = vpack.c.b16 %v1053, %v1049
    %v1258 = vpack.c.b16 %v1054, %v1050
    %v1259 = vpack.c.b16 %v1055, %v1051
    %v1260 = vpack.c.b16 %v1060, %v1056
    %v1261 = vpack.c.b16 %v1061, %v1057
    %v1262 = vpack.c.b16 %v1062, %v1058
    %v1263 = vpack.c.b16 %v1063, %v1059
    %v1264 = vpack.c.b16 %v1068, %v1064
    %v1265 = vpack.c.b16 %v1069, %v1065
    %v1266 = vpack.c.b16 %v1070, %v1066
    %v1267 = vpack.c.b16 %v1071, %v1067
    %v1268 = vpack.c.b16 %v1076, %v1072
    %v1269 = vpack.c.b16 %v1077, %v1073
    %v1270 = vpack.c.b16 %v1078, %v1074
    %v1271 = vpack.c.b16 %v1079, %v1075
    %v1272 = vpack.c.b16 %v1084, %v1080
    %v1273 = vpack.c.b16 %v1085, %v1081
    %v1274 = vpack.c.b16 %v1086, %v1082
    %v1275 = vpack.c.b16 %v1087, %v1083
    %v1276 = vpack.c.b16 %v1092, %v1088
    %v1277 = vpack.c.b16 %v1093, %v1089
    %v1278 = vpack.c.b16 %v1094, %v1090
    %v1279 = vpack.c.b16 %v1095, %v1091
    %v1280 = vpack.c.b16 %v1100, %v1096
    %v1281 = vpack.c.b16 %v1101, %v1097
    %v1282 = vpack.c.b16 %v1102, %v1098
    %v1283 = vpack.c.b16 %v1103, %v1099
    %v1284 = vpack.c.b16 %v1108, %v1104
    %v1285 = vpack.c.b16 %v1109, %v1105
    %v1286 = vpack.c.b16 %v1110, %v1106
    %v1287 = vpack.c.b16 %v1111, %v1107
    %v1288 = vpack.c.b16 %v1116, %v1112
    %v1289 = vpack.c.b16 %v1117, %v1113
    %v1290 = vpack.c.b16 %v1118, %v1114
    %v1291 = vpack.c.b16 %v1119, %v1115
    %v1292 = vpack.c.b16 %v1124, %v1120
    %v1293 = vpack.c.b16 %v1125, %v1121
    %v1294 = vpack.c.b16 %v1126, %v1122
    %v1295 = vpack.c.b16 %v1127, %v1123
    %v1296 = vpack.c.b16 %v1132, %v1128
    %v1297 = vpack.c.b16 %v1133, %v1129
    %v1298 = vpack.c.b16 %v1134, %v1130
    %v1299 = vpack.c.b16 %v1135, %v1131
    %v1300 = vpack.c.b16 %v1140, %v1136
    %v1301 = vpack.c.b16 %v1141, %v1137
    %v1302 = vpack.c.b16 %v1142, %v1138
    %v1303 = vpack.c.b16 %v1143, %v1139
    %v1304 = vpack.c.b16 %v1148, %v1144
    %v1305 = vpack.c.b16 %v1149, %v1145
    %v1306 = vpack.c.b16 %v1150, %v1146
    %v1307 = vpack.c.b16 %v1151, %v1147
    %v1308 = vpack.c.b16 %v1156, %v1152
    %v1309 = vpack.c.b16 %v1157, %v1153
    %v1310 = vpack.c.b16 %v1158, %v1154
    %v1311 = vpack.c.b16 %v1159, %v1155
    %v1312 = vpack.c.b16 %v1164, %v1160
    %v1313 = vpack.c.b16 %v1165, %v1161
    %v1314 = vpack.c.b16 %v1166, %v1162
    %v1315 = vpack.c.b16 %v1167, %v1163
    %v1316 = vpack.c.b16 %v1172, %v1168
    %v1317 = vpack.c.b16 %v1173, %v1169
    %v1318 = vpack.c.b16 %v1174, %v1170
    %v1319 = vpack.c.b16 %v1175, %v1171
    %v1320 = vpack.c.b16 %v1180, %v1176
    %v1321 = vpack.c.b16 %v1181, %v1177
    %v1322 = vpack.c.b16 %v1182, %v1178
    %v1323 = vpack.c.b16 %v1183, %v1179
    %v1324 = vpack.c.b16 %v1188, %v1184
    %v1325 = vpack.c.b16 %v1189, %v1185
    %v1326 = vpack.c.b16 %v1190, %v1186
    %v1327 = vpack.c.b16 %v1191, %v1187
    %v1328 = vpack.c.b16 %v1196, %v1192
    %v1329 = vpack.c.b16 %v1197, %v1193
    %v1330 = vpack.c.b16 %v1198, %v1194
    %v1331 = vpack.c.b16 %v1199, %v1195
    %v1332 = vpack.c.b16 %v1204, %v1200
    %v1333 = vpack.c.b16 %v1205, %v1201
    %v1334 = vpack.c.b16 %v1206, %v1202
    %v1335 = vpack.c.b16 %v1207, %v1203
    %1464 = vmatprep.subr.bf16.mxu0 0
    %1465 = vmatpush1.bf16.msra.mxu0 %v792
    %1466 = vmatprep.subr.bf16.mxu0 0
    %1467 = vmatpush1.bf16.msra.mxu0 %v793
    %1468 = vmatprep.subr.bf16.mxu0 0
    %1469 = vmatpush1.bf16.msra.mxu0 %v794
    %1470 = vmatprep.subr.bf16.mxu0 0
    %1471 = vmatpush1.bf16.msra.mxu0 %v795
    %1472 = vmatprep.subr.bf16.mxu0 0
    %1473 = vmatpush1.bf16.msra.mxu0 %v796
    %1474 = vmatprep.subr.bf16.mxu0 0
    %1475 = vmatpush1.bf16.msra.mxu0 %v797
    %1476 = vmatprep.subr.bf16.mxu0 0
    %1477 = vmatpush1.bf16.msra.mxu0 %v798
    %1478 = vmatprep.subr.bf16.mxu0 0
    %1479 = vmatpush1.bf16.msra.mxu0 %v799
    %1480 = vmatprep.subr.bf16.mxu0 0
    %1481 = vmatpush1.bf16.msra.mxu0 %v800
    %1482 = vmatprep.subr.bf16.mxu0 0
    %1483 = vmatpush1.bf16.msra.mxu0 %v801
    %1484 = vmatprep.subr.bf16.mxu0 0
    %1485 = vmatpush1.bf16.msra.mxu0 %v802
    %1486 = vmatprep.subr.bf16.mxu0 0
    %1487 = vmatpush1.bf16.msra.mxu0 %v803
    %1488 = vmatprep.subr.bf16.mxu0 0
    %1489 = vmatpush1.bf16.msra.mxu0 %v804
    %1490 = vmatprep.subr.bf16.mxu0 0
    %1491 = vmatpush1.bf16.msra.mxu0 %v805
    %1492 = vmatprep.subr.bf16.mxu0 0
    %1493 = vmatpush1.bf16.msra.mxu0 %v806
    %1494 = vmatprep.subr.bf16.mxu0 0
    %1495 = vmatpush1.bf16.msra.mxu0 %v807
    %1496 = vmatprep.mubr.bf16.mxu0 %v1209
    %1497 = vmatmul.mubr.bf16.gmra.mrb[0].mxu0 %v1208
    %v1498 = vpop.f32.mrb[0].mxu0
    %v1499 = vadd.f32 0.0, %v1498
    %v1500 = vpop.f32.mrb[0].mxu0
    %v1501 = vpop.f32.mrb[0].mxu0
    %v1502 = vadd.f32 0.0, %v1501
    %v1503 = vpop.f32.mrb[0].mxu0
    %1504 = vmatprep.mubr.bf16.mxu0 %v1213
    %1505 = vmatmul.mubr.bf16.gmra.mrb[0].mxu0 %v1212
    %v1506 = vpop.f32.mrb[0].mxu0
    %v1507 = vadd.f32 0.0, %v1506
    %v1508 = vpop.f32.mrb[0].mxu0
    %v1509 = vpop.f32.mrb[0].mxu0
    %v1510 = vadd.f32 0.0, %v1509
    %v1511 = vpop.f32.mrb[0].mxu0
    %1512 = vmatprep.mubr.bf16.mxu0 %v1217
    %1513 = vmatmul.mubr.bf16.gmra.mrb[0].mxu0 %v1216
    %v1514 = vpop.f32.mrb[0].mxu0
    %v1515 = vadd.f32 0.0, %v1514
    %v1516 = vpop.f32.mrb[0].mxu0
    %v1517 = vpop.f32.mrb[0].mxu0
    %v1518 = vadd.f32 0.0, %v1517
    %v1519 = vpop.f32.mrb[0].mxu0
    %1520 = vmatprep.mubr.bf16.mxu0 %v1221
    %1521 = vmatmul.mubr.bf16.gmra.mrb[0].mxu0 %v1220
    %v1522 = vpop.f32.mrb[0].mxu0
    %v1523 = vadd.f32 0.0, %v1522
    %v1524 = vpop.f32.mrb[0].mxu0
    %v1525 = vpop.f32.mrb[0].mxu0
    %v1526 = vadd.f32 0.0, %v1525
    %v1527 = vpop.f32.mrb[0].mxu0
    %1528 = vmatprep.mubr.bf16.mxu0 %v1225
    %1529 = vmatmul.mubr.bf16.gmra.mrb[0].mxu0 %v1224
    %v1530 = vpop.f32.mrb[0].mxu0
    %v1531 = vadd.f32 0.0, %v1530
    %v1532 = vpop.f32.mrb[0].mxu0
    %v1533 = vpop.f32.mrb[0].mxu0
    %v1534 = vadd.f32 0.0, %v1533
    %v1535 = vpop.f32.mrb[0].mxu0
    %1536 = vmatprep.mubr.bf16.mxu0 %v1229
    %1537 = vmatmul.mubr.bf16.gmra.mrb[0].mxu0 %v1228
    %v1538 = vpop.f32.mrb[0].mxu0
    %v1539 = vadd.f32 0.0, %v1538
    %v1540 = vpop.f32.mrb[0].mxu0
    %v1541 = vpop.f32.mrb[0].mxu0
    %v1542 = vadd.f32 0.0, %v1541
    %v1543 = vpop.f32.mrb[0].mxu0
    %1544 = vmatprep.mubr.bf16.mxu0 %v1233
    %1545 = vmatmul.mubr.bf16.gmra.mrb[0].mxu0 %v1232
    %v1546 = vpop.f32.mrb[0].mxu0
    %v1547 = vadd.f32 0.0, %v1546
    %v1548 = vpop.f32.mrb[0].mxu0
    %v1549 = vpop.f32.mrb[0].mxu0
    %v1550 = vadd.f32 0.0, %v1549
    %v1551 = vpop.f32.mrb[0].mxu0
    %1552 = vmatprep.mubr.bf16.mxu0 %v1237
    %1553 = vmatmul.mubr.bf16.gmra.mrb[0].mxu0 %v1236
    %v1554 = vpop.f32.mrb[0].mxu0
    %v1555 = vadd.f32 0.0, %v1554
    %v1556 = vpop.f32.mrb[0].mxu0
    %v1557 = vpop.f32.mrb[0].mxu0
    %v1558 = vadd.f32 0.0, %v1557
    %v1559 = vpop.f32.mrb[0].mxu0
    %1560 = vmatprep.mubr.bf16.mxu0 %v1241
    %1561 = vmatmul.mubr.bf16.gmra.mrb[0].mxu0 %v1240
    %v1562 = vpop.f32.mrb[0].mxu0
    %v1563 = vadd.f32 0.0, %v1562
    %v1564 = vpop.f32.mrb[0].mxu0
    %v1565 = vpop.f32.mrb[0].mxu0
    %v1566 = vadd.f32 0.0, %v1565
    %v1567 = vpop.f32.mrb[0].mxu0
    %1568 = vmatprep.mubr.bf16.mxu0 %v1245
    %1569 = vmatmul.mubr.bf16.gmra.mrb[0].mxu0 %v1244
    %v1570 = vpop.f32.mrb[0].mxu0
    %v1571 = vadd.f32 0.0, %v1570
    %v1572 = vpop.f32.mrb[0].mxu0
    %v1573 = vpop.f32.mrb[0].mxu0
    %v1574 = vadd.f32 0.0, %v1573
    %v1575 = vpop.f32.mrb[0].mxu0
    %1576 = vmatprep.mubr.bf16.mxu0 %v1249
    %1577 = vmatmul.mubr.bf16.gmra.mrb[0].mxu0 %v1248
    %v1578 = vpop.f32.mrb[0].mxu0
    %v1579 = vadd.f32 0.0, %v1578
    %v1580 = vpop.f32.mrb[0].mxu0
    %v1581 = vpop.f32.mrb[0].mxu0
    %v1582 = vadd.f32 0.0, %v1581
    %v1583 = vpop.f32.mrb[0].mxu0
    %1584 = vmatprep.mubr.bf16.mxu0 %v1253
    %1585 = vmatmul.mubr.bf16.gmra.mrb[0].mxu0 %v1252
    %v1586 = vpop.f32.mrb[0].mxu0
    %v1587 = vadd.f32 0.0, %v1586
    %v1588 = vpop.f32.mrb[0].mxu0
    %v1589 = vpop.f32.mrb[0].mxu0
    %v1590 = vadd.f32 0.0, %v1589
    %v1591 = vpop.f32.mrb[0].mxu0
    %1592 = vmatprep.mubr.bf16.mxu0 %v1257
    %1593 = vmatmul.mubr.bf16.gmra.mrb[0].mxu0 %v1256
    %v1594 = vpop.f32.mrb[0].mxu0
    %v1595 = vadd.f32 0.0, %v1594
    %v1596 = vpop.f32.mrb[0].mxu0
    %v1597 = vpop.f32.mrb[0].mxu0
    %v1598 = vadd.f32 0.0, %v1597
    %v1599 = vpop.f32.mrb[0].mxu0
    %1600 = vmatprep.mubr.bf16.mxu0 %v1261
    %1601 = vmatmul.mubr.bf16.gmra.mrb[0].mxu0 %v1260
    %v1602 = vpop.f32.mrb[0].mxu0
    %v1603 = vadd.f32 0.0, %v1602
    %v1604 = vpop.f32.mrb[0].mxu0
    %v1605 = vpop.f32.mrb[0].mxu0
    %v1606 = vadd.f32 0.0, %v1605
    %v1607 = vpop.f32.mrb[0].mxu0
    %1608 = vmatprep.mubr.bf16.mxu0 %v1265
    %1609 = vmatmul.mubr.bf16.gmra.mrb[0].mxu0 %v1264
    %v1610 = vpop.f32.mrb[0].mxu0
    %v1611 = vadd.f32 0.0, %v1610
    %v1612 = vpop.f32.mrb[0].mxu0
    %v1613 = vpop.f32.mrb[0].mxu0
    %v1614 = vadd.f32 0.0, %v1613
    %v1615 = vpop.f32.mrb[0].mxu0
    %1616 = vmatprep.mubr.bf16.mxu0 %v1269
    %1617 = vmatmul.mubr.bf16.gmra.mrb[0].mxu0 %v1268
    %v1618 = vpop.f32.mrb[0].mxu0
    %v1619 = vadd.f32 0.0, %v1618
    %v1620 = vpop.f32.mrb[0].mxu0
    %v1621 = vpop.f32.mrb[0].mxu0
    %v1622 = vadd.f32 0.0, %v1621
    %v1623 = vpop.f32.mrb[0].mxu0
    %1624 = vmatprep.mubr.bf16.mxu0 %v1273
    %1625 = vmatmul.mubr.bf16.gmra.mrb[0].mxu0 %v1272
    %v1626 = vpop.f32.mrb[0].mxu0
    %v1627 = vadd.f32 0.0, %v1626
    %v1628 = vpop.f32.mrb[0].mxu0
    %v1629 = vpop.f32.mrb[0].mxu0
    %v1630 = vadd.f32 0.0, %v1629
    %v1631 = vpop.f32.mrb[0].mxu0
    %1632 = vmatprep.mubr.bf16.mxu0 %v1277
    %1633 = vmatmul.mubr.bf16.gmra.mrb[0].mxu0 %v1276
    %v1634 = vpop.f32.mrb[0].mxu0
    %v1635 = vadd.f32 0.0, %v1634
    %v1636 = vpop.f32.mrb[0].mxu0
    %v1637 = vpop.f32.mrb[0].mxu0
    %v1638 = vadd.f32 0.0, %v1637
    %v1639 = vpop.f32.mrb[0].mxu0
    %1640 = vmatprep.mubr.bf16.mxu0 %v1281
    %1641 = vmatmul.mubr.bf16.gmra.mrb[0].mxu0 %v1280
    %v1642 = vpop.f32.mrb[0].mxu0
    %v1643 = vadd.f32 0.0, %v1642
    %v1644 = vpop.f32.mrb[0].mxu0
    %v1645 = vpop.f32.mrb[0].mxu0
    %v1646 = vadd.f32 0.0, %v1645
    %v1647 = vpop.f32.mrb[0].mxu0
    %1648 = vmatprep.mubr.bf16.mxu0 %v1285
    %1649 = vmatmul.mubr.bf16.gmra.mrb[0].mxu0 %v1284
    %v1650 = vpop.f32.mrb[0].mxu0
    %v1651 = vadd.f32 0.0, %v1650
    %v1652 = vpop.f32.mrb[0].mxu0
    %v1653 = vpop.f32.mrb[0].mxu0
    %v1654 = vadd.f32 0.0, %v1653
    %v1655 = vpop.f32.mrb[0].mxu0
    %1656 = vmatprep.mubr.bf16.mxu0 %v1289
    %1657 = vmatmul.mubr.bf16.gmra.mrb[0].mxu0 %v1288
    %v1658 = vpop.f32.mrb[0].mxu0
    %v1659 = vadd.f32 0.0, %v1658
    %v1660 = vpop.f32.mrb[0].mxu0
    %v1661 = vpop.f32.mrb[0].mxu0
    %v1662 = vadd.f32 0.0, %v1661
    %v1663 = vpop.f32.mrb[0].mxu0
    %1664 = vmatprep.mubr.bf16.mxu0 %v1293
    %1665 = vmatmul.mubr.bf16.gmra.mrb[0].mxu0 %v1292
    %v1666 = vpop.f32.mrb[0].mxu0
    %v1667 = vadd.f32 0.0, %v1666
    %v1668 = vpop.f32.mrb[0].mxu0
    %v1669 = vpop.f32.mrb[0].mxu0
    %v1670 = vadd.f32 0.0, %v1669
    %v1671 = vpop.f32.mrb[0].mxu0
    %1672 = vmatprep.mubr.bf16.mxu0 %v1297
    %1673 = vmatmul.mubr.bf16.gmra.mrb[0].mxu0 %v1296
    %v1674 = vpop.f32.mrb[0].mxu0
    %v1675 = vadd.f32 0.0, %v1674
    %v1676 = vpop.f32.mrb[0].mxu0
    %v1677 = vpop.f32.mrb[0].mxu0
    %v1678 = vadd.f32 0.0, %v1677
    %v1679 = vpop.f32.mrb[0].mxu0
    %1680 = vmatprep.mubr.bf16.mxu0 %v1301
    %1681 = vmatmul.mubr.bf16.gmra.mrb[0].mxu0 %v1300
    %v1682 = vpop.f32.mrb[0].mxu0
    %v1683 = vadd.f32 0.0, %v1682
    %v1684 = vpop.f32.mrb[0].mxu0
    %v1685 = vpop.f32.mrb[0].mxu0
    %v1686 = vadd.f32 0.0, %v1685
    %v1687 = vpop.f32.mrb[0].mxu0
    %1688 = vmatprep.mubr.bf16.mxu0 %v1305
    %1689 = vmatmul.mubr.bf16.gmra.mrb[0].mxu0 %v1304
    %v1690 = vpop.f32.mrb[0].mxu0
    %v1691 = vadd.f32 0.0, %v1690
    %v1692 = vpop.f32.mrb[0].mxu0
    %v1693 = vpop.f32.mrb[0].mxu0
    %v1694 = vadd.f32 0.0, %v1693
    %v1695 = vpop.f32.mrb[0].mxu0
    %1696 = vmatprep.mubr.bf16.mxu0 %v1309
    %1697 = vmatmul.mubr.bf16.gmra.mrb[0].mxu0 %v1308
    %v1698 = vpop.f32.mrb[0].mxu0
    %v1699 = vadd.f32 0.0, %v1698
    %v1700 = vpop.f32.mrb[0].mxu0
    %v1701 = vpop.f32.mrb[0].mxu0
    %v1702 = vadd.f32 0.0, %v1701
    %v1703 = vpop.f32.mrb[0].mxu0
    %1704 = vmatprep.mubr.bf16.mxu0 %v1313
    %1705 = vmatmul.mubr.bf16.gmra.mrb[0].mxu0 %v1312
    %v1706 = vpop.f32.mrb[0].mxu0
    %v1707 = vadd.f32 0.0, %v1706
    %v1708 = vpop.f32.mrb[0].mxu0
    %v1709 = vpop.f32.mrb[0].mxu0
    %v1710 = vadd.f32 0.0, %v1709
    %v1711 = vpop.f32.mrb[0].mxu0
    %1712 = vmatprep.mubr.bf16.mxu0 %v1317
    %1713 = vmatmul.mubr.bf16.gmra.mrb[0].mxu0 %v1316
    %v1714 = vpop.f32.mrb[0].mxu0
    %v1715 = vadd.f32 0.0, %v1714
    %v1716 = vpop.f32.mrb[0].mxu0
    %v1717 = vpop.f32.mrb[0].mxu0
    %v1718 = vadd.f32 0.0, %v1717
    %v1719 = vpop.f32.mrb[0].mxu0
    %1720 = vmatprep.mubr.bf16.mxu0 %v1321
    %1721 = vmatmul.mubr.bf16.gmra.mrb[0].mxu0 %v1320
    %v1722 = vpop.f32.mrb[0].mxu0
    %v1723 = vadd.f32 0.0, %v1722
    %v1724 = vpop.f32.mrb[0].mxu0
    %v1725 = vpop.f32.mrb[0].mxu0
    %v1726 = vadd.f32 0.0, %v1725
    %v1727 = vpop.f32.mrb[0].mxu0
    %1728 = vmatprep.mubr.bf16.mxu0 %v1325
    %1729 = vmatmul.mubr.bf16.gmra.mrb[0].mxu0 %v1324
    %v1730 = vpop.f32.mrb[0].mxu0
    %v1731 = vadd.f32 0.0, %v1730
    %v1732 = vpop.f32.mrb[0].mxu0
    %v1733 = vpop.f32.mrb[0].mxu0
    %v1734 = vadd.f32 0.0, %v1733
    %v1735 = vpop.f32.mrb[0].mxu0
    %1736 = vmatprep.mubr.bf16.mxu0 %v1329
    %1737 = vmatmul.mubr.bf16.gmra.mrb[0].mxu0 %v1328
    %v1738 = vpop.f32.mrb[0].mxu0
    %v1739 = vadd.f32 0.0, %v1738
    %v1740 = vpop.f32.mrb[0].mxu0
    %v1741 = vpop.f32.mrb[0].mxu0
    %v1742 = vadd.f32 0.0, %v1741
    %v1743 = vpop.f32.mrb[0].mxu0
    %1744 = vmatprep.mubr.bf16.mxu0 %v1333
    %1745 = vmatmul.mubr.bf16.gmra.mrb[0].mxu0 %v1332
    %v1746 = vpop.f32.mrb[0].mxu0
    %v1747 = vadd.f32 0.0, %v1746
    %v1748 = vpop.f32.mrb[0].mxu0
    %v1749 = vpop.f32.mrb[0].mxu0
    %v1750 = vadd.f32 0.0, %v1749
    %v1751 = vpop.f32.mrb[0].mxu0
    %1752 = vdwg.mxu0
    %1753 = vmatprep.subr.bf16.mxu0 0
    %1754 = vmatpush1.bf16.msra.mxu0 %v808
    %1755 = vmatprep.subr.bf16.mxu0 0
    %1756 = vmatpush1.bf16.msra.mxu0 %v809
    %1757 = vmatprep.subr.bf16.mxu0 0
    %1758 = vmatpush1.bf16.msra.mxu0 %v810
    %1759 = vmatprep.subr.bf16.mxu0 0
    %1760 = vmatpush1.bf16.msra.mxu0 %v811
    %1761 = vmatprep.subr.bf16.mxu0 0
    %1762 = vmatpush1.bf16.msra.mxu0 %v812
    %1763 = vmatprep.subr.bf16.mxu0 0
    %1764 = vmatpush1.bf16.msra.mxu0 %v813
    %1765 = vmatprep.subr.bf16.mxu0 0
    %1766 = vmatpush1.bf16.msra.mxu0 %v814
    %1767 = vmatprep.subr.bf16.mxu0 0
    %1768 = vmatpush1.bf16.msra.mxu0 %v815
    %1769 = vmatprep.subr.bf16.mxu0 0
    %1770 = vmatpush1.bf16.msra.mxu0 %v816
    %1771 = vmatprep.subr.bf16.mxu0 0
    %1772 = vmatpush1.bf16.msra.mxu0 %v817
    %1773 = vmatprep.subr.bf16.mxu0 0
    %1774 = vmatpush1.bf16.msra.mxu0 %v818
    %1775 = vmatprep.subr.bf16.mxu0 0
    %1776 = vmatpush1.bf16.msra.mxu0 %v819
    %1777 = vmatprep.subr.bf16.mxu0 0
    %1778 = vmatpush1.bf16.msra.mxu0 %v820
    %1779 = vmatprep.subr.bf16.mxu0 0
    %1780 = vmatpush1.bf16.msra.mxu0 %v821
    %1781 = vmatprep.subr.bf16.mxu0 0
    %1782 = vmatpush1.bf16.msra.mxu0 %v822
    %1783 = vmatprep.subr.bf16.mxu0 0
    %1784 = vmatpush1.bf16.msra.mxu0 %v823
    %1785 = vmatprep.mubr.bf16.mxu0 %v1211
    %1786 = vmatmul.mubr.bf16.gmra.mrb[0].mxu0 %v1210
    %v1787 = vpop.f32.mrb[0].mxu0
    %v1788 = vadd.f32 %v1499, %v1787
    %v1789 = vpop.f32.mrb[0].mxu0
    %v1790 = vpop.f32.mrb[0].mxu0
    %v1791 = vadd.f32 %v1502, %v1790
    %v1792 = vpop.f32.mrb[0].mxu0
    %1793 = vmatprep.mubr.bf16.mxu0 %v1215
    %1794 = vmatmul.mubr.bf16.gmra.mrb[0].mxu0 %v1214
    %v1795 = vpop.f32.mrb[0].mxu0
    %v1796 = vadd.f32 %v1507, %v1795
    %v1797 = vpop.f32.mrb[0].mxu0
    %v1798 = vpop.f32.mrb[0].mxu0
    %v1799 = vadd.f32 %v1510, %v1798
    %v1800 = vpop.f32.mrb[0].mxu0
    %1801 = vmatprep.mubr.bf16.mxu0 %v1219
    %1802 = vmatmul.mubr.bf16.gmra.mrb[0].mxu0 %v1218
    %v1803 = vpop.f32.mrb[0].mxu0
    %v1804 = vadd.f32 %v1515, %v1803
    %v1805 = vpop.f32.mrb[0].mxu0
    %v1806 = vpop.f32.mrb[0].mxu0
    %v1807 = vadd.f32 %v1518, %v1806
    %v1808 = vpop.f32.mrb[0].mxu0
    %1809 = vmatprep.mubr.bf16.mxu0 %v1223
    %1810 = vmatmul.mubr.bf16.gmra.mrb[0].mxu0 %v1222
    %v1811 = vpop.f32.mrb[0].mxu0
    %v1812 = vadd.f32 %v1523, %v1811
    %v1813 = vpop.f32.mrb[0].mxu0
    %v1814 = vpop.f32.mrb[0].mxu0
    %v1815 = vadd.f32 %v1526, %v1814
    %v1816 = vpop.f32.mrb[0].mxu0
    %1817 = vmatprep.mubr.bf16.mxu0 %v1227
    %1818 = vmatmul.mubr.bf16.gmra.mrb[0].mxu0 %v1226
    %v1819 = vpop.f32.mrb[0].mxu0
    %v1820 = vadd.f32 %v1531, %v1819
    %v1821 = vpop.f32.mrb[0].mxu0
    %v1822 = vpop.f32.mrb[0].mxu0
    %v1823 = vadd.f32 %v1534, %v1822
    %v1824 = vpop.f32.mrb[0].mxu0
    %1825 = vmatprep.mubr.bf16.mxu0 %v1231
    %1826 = vmatmul.mubr.bf16.gmra.mrb[0].mxu0 %v1230
    %v1827 = vpop.f32.mrb[0].mxu0
    %v1828 = vadd.f32 %v1539, %v1827
    %v1829 = vpop.f32.mrb[0].mxu0
    %v1830 = vpop.f32.mrb[0].mxu0
    %v1831 = vadd.f32 %v1542, %v1830
    %v1832 = vpop.f32.mrb[0].mxu0
    %1833 = vmatprep.mubr.bf16.mxu0 %v1235
    %1834 = vmatmul.mubr.bf16.gmra.mrb[0].mxu0 %v1234
    %v1835 = vpop.f32.mrb[0].mxu0
    %v1836 = vadd.f32 %v1547, %v1835
    %v1837 = vpop.f32.mrb[0].mxu0
    %v1838 = vpop.f32.mrb[0].mxu0
    %v1839 = vadd.f32 %v1550, %v1838
    %v1840 = vpop.f32.mrb[0].mxu0
    %1841 = vmatprep.mubr.bf16.mxu0 %v1239
    %1842 = vmatmul.mubr.bf16.gmra.mrb[0].mxu0 %v1238
    %v1843 = vpop.f32.mrb[0].mxu0
    %v1844 = vadd.f32 %v1555, %v1843
    %v1845 = vpop.f32.mrb[0].mxu0
    %v1846 = vpop.f32.mrb[0].mxu0
    %v1847 = vadd.f32 %v1558, %v1846
    %v1848 = vpop.f32.mrb[0].mxu0
    %1849 = vmatprep.mubr.bf16.mxu0 %v1243
    %1850 = vmatmul.mubr.bf16.gmra.mrb[0].mxu0 %v1242
    %v1851 = vpop.f32.mrb[0].mxu0
    %v1852 = vadd.f32 %v1563, %v1851
    %v1853 = vpop.f32.mrb[0].mxu0
    %v1854 = vpop.f32.mrb[0].mxu0
    %v1855 = vadd.f32 %v1566, %v1854
    %v1856 = vpop.f32.mrb[0].mxu0
    %1857 = vmatprep.mubr.bf16.mxu0 %v1247
    %1858 = vmatmul.mubr.bf16.gmra.mrb[0].mxu0 %v1246
    %v1859 = vpop.f32.mrb[0].mxu0
    %v1860 = vadd.f32 %v1571, %v1859
    %v1861 = vpop.f32.mrb[0].mxu0
    %v1862 = vpop.f32.mrb[0].mxu0
    %v1863 = vadd.f32 %v1574, %v1862
    %v1864 = vpop.f32.mrb[0].mxu0
    %1865 = vmatprep.mubr.bf16.mxu0 %v1251
    %1866 = vmatmul.mubr.bf16.gmra.mrb[0].mxu0 %v1250
    %v1867 = vpop.f32.mrb[0].mxu0
    %v1868 = vadd.f32 %v1579, %v1867
    %v1869 = vpop.f32.mrb[0].mxu0
    %v1870 = vpop.f32.mrb[0].mxu0
    %v1871 = vadd.f32 %v1582, %v1870
    %v1872 = vpop.f32.mrb[0].mxu0
    %1873 = vmatprep.mubr.bf16.mxu0 %v1255
    %1874 = vmatmul.mubr.bf16.gmra.mrb[0].mxu0 %v1254
    %v1875 = vpop.f32.mrb[0].mxu0
    %v1876 = vadd.f32 %v1587, %v1875
    %v1877 = vpop.f32.mrb[0].mxu0
    %v1878 = vpop.f32.mrb[0].mxu0
    %v1879 = vadd.f32 %v1590, %v1878
    %v1880 = vpop.f32.mrb[0].mxu0
    %1881 = vmatprep.mubr.bf16.mxu0 %v1259
    %1882 = vmatmul.mubr.bf16.gmra.mrb[0].mxu0 %v1258
    %v1883 = vpop.f32.mrb[0].mxu0
    %v1884 = vadd.f32 %v1595, %v1883
    %v1885 = vpop.f32.mrb[0].mxu0
    %v1886 = vpop.f32.mrb[0].mxu0
    %v1887 = vadd.f32 %v1598, %v1886
    %v1888 = vpop.f32.mrb[0].mxu0
    %1889 = vmatprep.mubr.bf16.mxu0 %v1263
    %1890 = vmatmul.mubr.bf16.gmra.mrb[0].mxu0 %v1262
    %v1891 = vpop.f32.mrb[0].mxu0
    %v1892 = vadd.f32 %v1603, %v1891
    %v1893 = vpop.f32.mrb[0].mxu0
    %v1894 = vpop.f32.mrb[0].mxu0
    %v1895 = vadd.f32 %v1606, %v1894
    %v1896 = vpop.f32.mrb[0].mxu0
    %1897 = vmatprep.mubr.bf16.mxu0 %v1267
    %1898 = vmatmul.mubr.bf16.gmra.mrb[0].mxu0 %v1266
    %v1899 = vpop.f32.mrb[0].mxu0
    %v1900 = vadd.f32 %v1611, %v1899
    %v1901 = vpop.f32.mrb[0].mxu0
    %v1902 = vpop.f32.mrb[0].mxu0
    %v1903 = vadd.f32 %v1614, %v1902
    %v1904 = vpop.f32.mrb[0].mxu0
    %1905 = vmatprep.mubr.bf16.mxu0 %v1271
    %1906 = vmatmul.mubr.bf16.gmra.mrb[0].mxu0 %v1270
    %v1907 = vpop.f32.mrb[0].mxu0
    %v1908 = vadd.f32 %v1619, %v1907
    %v1909 = vpop.f32.mrb[0].mxu0
    %v1910 = vpop.f32.mrb[0].mxu0
    %v1911 = vadd.f32 %v1622, %v1910
    %v1912 = vpop.f32.mrb[0].mxu0
    %1913 = vmatprep.mubr.bf16.mxu0 %v1275
    %1914 = vmatmul.mubr.bf16.gmra.mrb[0].mxu0 %v1274
    %v1915 = vpop.f32.mrb[0].mxu0
    %v1916 = vadd.f32 %v1627, %v1915
    %v1917 = vpop.f32.mrb[0].mxu0
    %v1918 = vpop.f32.mrb[0].mxu0
    %v1919 = vadd.f32 %v1630, %v1918
    %v1920 = vpop.f32.mrb[0].mxu0
    %1921 = vmatprep.mubr.bf16.mxu0 %v1279
    %1922 = vmatmul.mubr.bf16.gmra.mrb[0].mxu0 %v1278
    %v1923 = vpop.f32.mrb[0].mxu0
    %v1924 = vadd.f32 %v1635, %v1923
    %v1925 = vpop.f32.mrb[0].mxu0
    %v1926 = vpop.f32.mrb[0].mxu0
    %v1927 = vadd.f32 %v1638, %v1926
    %v1928 = vpop.f32.mrb[0].mxu0
    %1929 = vmatprep.mubr.bf16.mxu0 %v1283
    %1930 = vmatmul.mubr.bf16.gmra.mrb[0].mxu0 %v1282
    %v1931 = vpop.f32.mrb[0].mxu0
    %v1932 = vadd.f32 %v1643, %v1931
    %v1933 = vpop.f32.mrb[0].mxu0
    %v1934 = vpop.f32.mrb[0].mxu0
    %v1935 = vadd.f32 %v1646, %v1934
    %v1936 = vpop.f32.mrb[0].mxu0
    %1937 = vmatprep.mubr.bf16.mxu0 %v1287
    %1938 = vmatmul.mubr.bf16.gmra.mrb[0].mxu0 %v1286
    %v1939 = vpop.f32.mrb[0].mxu0
    %v1940 = vadd.f32 %v1651, %v1939
    %v1941 = vpop.f32.mrb[0].mxu0
    %v1942 = vpop.f32.mrb[0].mxu0
    %v1943 = vadd.f32 %v1654, %v1942
    %v1944 = vpop.f32.mrb[0].mxu0
    %1945 = vmatprep.mubr.bf16.mxu0 %v1291
    %1946 = vmatmul.mubr.bf16.gmra.mrb[0].mxu0 %v1290
    %v1947 = vpop.f32.mrb[0].mxu0
    %v1948 = vadd.f32 %v1659, %v1947
    %v1949 = vpop.f32.mrb[0].mxu0
    %v1950 = vpop.f32.mrb[0].mxu0
    %v1951 = vadd.f32 %v1662, %v1950
    %v1952 = vpop.f32.mrb[0].mxu0
    %1953 = vmatprep.mubr.bf16.mxu0 %v1295
    %1954 = vmatmul.mubr.bf16.gmra.mrb[0].mxu0 %v1294
    %v1955 = vpop.f32.mrb[0].mxu0
    %v1956 = vadd.f32 %v1667, %v1955
    %v1957 = vpop.f32.mrb[0].mxu0
    %v1958 = vpop.f32.mrb[0].mxu0
    %v1959 = vadd.f32 %v1670, %v1958
    %v1960 = vpop.f32.mrb[0].mxu0
    %1961 = vmatprep.mubr.bf16.mxu0 %v1299
    %1962 = vmatmul.mubr.bf16.gmra.mrb[0].mxu0 %v1298
    %v1963 = vpop.f32.mrb[0].mxu0
    %v1964 = vadd.f32 %v1675, %v1963
    %v1965 = vpop.f32.mrb[0].mxu0
    %v1966 = vpop.f32.mrb[0].mxu0
    %v1967 = vadd.f32 %v1678, %v1966
    %v1968 = vpop.f32.mrb[0].mxu0
    %1969 = vmatprep.mubr.bf16.mxu0 %v1303
    %1970 = vmatmul.mubr.bf16.gmra.mrb[0].mxu0 %v1302
    %v1971 = vpop.f32.mrb[0].mxu0
    %v1972 = vadd.f32 %v1683, %v1971
    %v1973 = vpop.f32.mrb[0].mxu0
    %v1974 = vpop.f32.mrb[0].mxu0
    %v1975 = vadd.f32 %v1686, %v1974
    %v1976 = vpop.f32.mrb[0].mxu0
    %1977 = vmatprep.mubr.bf16.mxu0 %v1307
    %1978 = vmatmul.mubr.bf16.gmra.mrb[0].mxu0 %v1306
    %v1979 = vpop.f32.mrb[0].mxu0
    %v1980 = vadd.f32 %v1691, %v1979
    %v1981 = vpop.f32.mrb[0].mxu0
    %v1982 = vpop.f32.mrb[0].mxu0
    %v1983 = vadd.f32 %v1694, %v1982
    %v1984 = vpop.f32.mrb[0].mxu0
    %1985 = vmatprep.mubr.bf16.mxu0 %v1311
    %1986 = vmatmul.mubr.bf16.gmra.mrb[0].mxu0 %v1310
    %v1987 = vpop.f32.mrb[0].mxu0
    %v1988 = vadd.f32 %v1699, %v1987
    %v1989 = vpop.f32.mrb[0].mxu0
    %v1990 = vpop.f32.mrb[0].mxu0
    %v1991 = vadd.f32 %v1702, %v1990
    %v1992 = vpop.f32.mrb[0].mxu0
    %1993 = vmatprep.mubr.bf16.mxu0 %v1315
    %1994 = vmatmul.mubr.bf16.gmra.mrb[0].mxu0 %v1314
    %v1995 = vpop.f32.mrb[0].mxu0
    %v1996 = vadd.f32 %v1707, %v1995
    %v1997 = vpop.f32.mrb[0].mxu0
    %v1998 = vpop.f32.mrb[0].mxu0
    %v1999 = vadd.f32 %v1710, %v1998
    %v2000 = vpop.f32.mrb[0].mxu0
    %2001 = vmatprep.mubr.bf16.mxu0 %v1319
    %2002 = vmatmul.mubr.bf16.gmra.mrb[0].mxu0 %v1318
    %v2003 = vpop.f32.mrb[0].mxu0
    %v2004 = vadd.f32 %v1715, %v2003
    %v2005 = vpop.f32.mrb[0].mxu0
    %v2006 = vpop.f32.mrb[0].mxu0
    %v2007 = vadd.f32 %v1718, %v2006
    %v2008 = vpop.f32.mrb[0].mxu0
    %2009 = vmatprep.mubr.bf16.mxu0 %v1323
    %2010 = vmatmul.mubr.bf16.gmra.mrb[0].mxu0 %v1322
    %v2011 = vpop.f32.mrb[0].mxu0
    %v2012 = vadd.f32 %v1723, %v2011
    %v2013 = vpop.f32.mrb[0].mxu0
    %v2014 = vpop.f32.mrb[0].mxu0
    %v2015 = vadd.f32 %v1726, %v2014
    %v2016 = vpop.f32.mrb[0].mxu0
    %2017 = vmatprep.mubr.bf16.mxu0 %v1327
    %2018 = vmatmul.mubr.bf16.gmra.mrb[0].mxu0 %v1326
    %v2019 = vpop.f32.mrb[0].mxu0
    %v2020 = vadd.f32 %v1731, %v2019
    %v2021 = vpop.f32.mrb[0].mxu0
    %v2022 = vpop.f32.mrb[0].mxu0
    %v2023 = vadd.f32 %v1734, %v2022
    %v2024 = vpop.f32.mrb[0].mxu0
    %2025 = vmatprep.mubr.bf16.mxu0 %v1331
    %2026 = vmatmul.mubr.bf16.gmra.mrb[0].mxu0 %v1330
    %v2027 = vpop.f32.mrb[0].mxu0
    %v2028 = vadd.f32 %v1739, %v2027
    %v2029 = vpop.f32.mrb[0].mxu0
    %v2030 = vpop.f32.mrb[0].mxu0
    %v2031 = vadd.f32 %v1742, %v2030
    %v2032 = vpop.f32.mrb[0].mxu0
    %2033 = vmatprep.mubr.bf16.mxu0 %v1335
    %2034 = vmatmul.mubr.bf16.gmra.mrb[0].mxu0 %v1334
    %v2035 = vpop.f32.mrb[0].mxu0
    %v2036 = vadd.f32 %v1747, %v2035
    %v2037 = vpop.f32.mrb[0].mxu0
    %v2038 = vpop.f32.mrb[0].mxu0
    %v2039 = vadd.f32 %v1750, %v2038
    %v2040 = vpop.f32.mrb[0].mxu0
    %2041 = vdwg.mxu0
    %v2042 = vmax.f32 %v1788, 0.0
    %v2043 = vmax.f32 %v1791, 0.0
    %v2044 = vmax.f32 %v1796, 0.0
    %v2045 = vmax.f32 %v1799, 0.0
    %v2046 = vmax.f32 %v1804, 0.0
    %v2047 = vmax.f32 %v1807, 0.0
    %v2048 = vmax.f32 %v1812, 0.0
    %v2049 = vmax.f32 %v1815, 0.0
    %v2050 = vmax.f32 %v1820, 0.0
    %v2051 = vmax.f32 %v1823, 0.0
    %v2052 = vmax.f32 %v1828, 0.0
    %v2053 = vmax.f32 %v1831, 0.0
    %v2054 = vmax.f32 %v1836, 0.0
    %v2055 = vmax.f32 %v1839, 0.0
    %v2056 = vmax.f32 %v1844, 0.0
    %v2057 = vmax.f32 %v1847, 0.0
    %v2058 = vmax.f32 %v1852, 0.0
    %v2059 = vmax.f32 %v1855, 0.0
    %v2060 = vmax.f32 %v1860, 0.0
    %v2061 = vmax.f32 %v1863, 0.0
    %v2062 = vmax.f32 %v1868, 0.0
    %v2063 = vmax.f32 %v1871, 0.0
    %v2064 = vmax.f32 %v1876, 0.0
    %v2065 = vmax.f32 %v1879, 0.0
    %v2066 = vmax.f32 %v1884, 0.0
    %v2067 = vmax.f32 %v1887, 0.0
    %v2068 = vmax.f32 %v1892, 0.0
    %v2069 = vmax.f32 %v1895, 0.0
    %v2070 = vmax.f32 %v1900, 0.0
    %v2071 = vmax.f32 %v1903, 0.0
    %v2072 = vmax.f32 %v1908, 0.0
    %v2073 = vmax.f32 %v1911, 0.0
    %v2074 = vmax.f32 %v1916, 0.0
    %v2075 = vmax.f32 %v1919, 0.0
    %v2076 = vmax.f32 %v1924, 0.0
    %v2077 = vmax.f32 %v1927, 0.0
    %v2078 = vmax.f32 %v1932, 0.0
    %v2079 = vmax.f32 %v1935, 0.0
    %v2080 = vmax.f32 %v1940, 0.0
    %v2081 = vmax.f32 %v1943, 0.0
    %v2082 = vmax.f32 %v1948, 0.0
    %v2083 = vmax.f32 %v1951, 0.0
    %v2084 = vmax.f32 %v1956, 0.0
    %v2085 = vmax.f32 %v1959, 0.0
    %v2086 = vmax.f32 %v1964, 0.0
    %v2087 = vmax.f32 %v1967, 0.0
    %v2088 = vmax.f32 %v1972, 0.0
    %v2089 = vmax.f32 %v1975, 0.0
    %v2090 = vmax.f32 %v1980, 0.0
    %v2091 = vmax.f32 %v1983, 0.0
    %v2092 = vmax.f32 %v1988, 0.0
    %v2093 = vmax.f32 %v1991, 0.0
    %v2094 = vmax.f32 %v1996, 0.0
    %v2095 = vmax.f32 %v1999, 0.0
    %v2096 = vmax.f32 %v2004, 0.0
    %v2097 = vmax.f32 %v2007, 0.0
    %v2098 = vmax.f32 %v2012, 0.0
    %v2099 = vmax.f32 %v2015, 0.0
    %v2100 = vmax.f32 %v2020, 0.0
    %v2101 = vmax.f32 %v2023, 0.0
    %v2102 = vmax.f32 %v2028, 0.0
    %v2103 = vmax.f32 %v2031, 0.0
    %v2104 = vmax.f32 %v2036, 0.0
    %v2105 = vmax.f32 %v2039, 0.0
    %v2106 = vpack.c.bf16 %v2043, %v2042
    %v2107 = vpack.c.bf16 %v2045, %v2044
    %v2108 = vpack.c.bf16 %v2047, %v2046
    %v2109 = vpack.c.bf16 %v2049, %v2048
    %v2110 = vpack.c.bf16 %v2051, %v2050
    %v2111 = vpack.c.bf16 %v2053, %v2052
    %v2112 = vpack.c.bf16 %v2055, %v2054
    %v2113 = vpack.c.bf16 %v2057, %v2056
    %v2114 = vpack.c.bf16 %v2059, %v2058
    %v2115 = vpack.c.bf16 %v2061, %v2060
    %v2116 = vpack.c.bf16 %v2063, %v2062
    %v2117 = vpack.c.bf16 %v2065, %v2064
    %v2118 = vpack.c.bf16 %v2067, %v2066
    %v2119 = vpack.c.bf16 %v2069, %v2068
    %v2120 = vpack.c.bf16 %v2071, %v2070
    %v2121 = vpack.c.bf16 %v2073, %v2072
    %v2122 = vpack.c.bf16 %v2075, %v2074
    %v2123 = vpack.c.bf16 %v2077, %v2076
    %v2124 = vpack.c.bf16 %v2079, %v2078
    %v2125 = vpack.c.bf16 %v2081, %v2080
    %v2126 = vpack.c.bf16 %v2083, %v2082
    %v2127 = vpack.c.bf16 %v2085, %v2084
    %v2128 = vpack.c.bf16 %v2087, %v2086
    %v2129 = vpack.c.bf16 %v2089, %v2088
    %v2130 = vpack.c.bf16 %v2091, %v2090
    %v2131 = vpack.c.bf16 %v2093, %v2092
    %v2132 = vpack.c.bf16 %v2095, %v2094
    %v2133 = vpack.c.bf16 %v2097, %v2096
    %v2134 = vpack.c.bf16 %v2099, %v2098
    %v2135 = vpack.c.bf16 %v2101, %v2100
    %v2136 = vpack.c.bf16 %v2103, %v2102
    %v2137 = vpack.c.bf16 %v2105, %v2104
    %v2138 = vld [vmem:[%s3] sm:$0xf]
    %v2139 = vld [vmem:[%s3 + $0x4] sm:$0xf]
    %v2140 = vld [vmem:[%s3 + $0x8] sm:$0xf]
    %v2141 = vld [vmem:[%s3 + $0xc] sm:$0xf]
    %v2146 = vunpack.c.l.b16 %v2138
    %v2147 = vunpack.c.l.b16 %v2139
    %v2148 = vunpack.c.l.b16 %v2140
    %v2149 = vunpack.c.l.b16 %v2141
    %v2150 = vpack.c.b16 %v2147, %v2146
    %v2151 = vpack.c.b16 %v2149, %v2148
    %v2155 = vsel %vm278, %v2106, 0
    %v2158 = vsel %vm278, %v2107, 0
    %v2161 = vsel %vm278, %v2108, 0
    %v2164 = vsel %vm278, %v2109, 0
    %v2167 = vsel %vm278, %v2110, 0
    %v2170 = vsel %vm278, %v2111, 0
    %v2173 = vsel %vm278, %v2112, 0
    %v2176 = vsel %vm278, %v2113, 0
    %v2179 = vsel %vm278, %v2114, 0
    %v2182 = vsel %vm278, %v2115, 0
    %v2185 = vsel %vm278, %v2116, 0
    %v2188 = vsel %vm278, %v2117, 0
    %v2191 = vsel %vm278, %v2118, 0
    %v2194 = vsel %vm278, %v2119, 0
    %v2197 = vsel %vm278, %v2120, 0
    %v2200 = vsel %vm278, %v2121, 0
    %v2203 = vsel %vm278, %v2122, 0
    %v2206 = vsel %vm278, %v2123, 0
    %v2209 = vsel %vm278, %v2124, 0
    %v2212 = vsel %vm278, %v2125, 0
    %v2215 = vsel %vm278, %v2126, 0
    %v2218 = vsel %vm278, %v2127, 0
    %v2221 = vsel %vm278, %v2128, 0
    %v2224 = vsel %vm278, %v2129, 0
    %v2227 = vsel %vm278, %v2130, 0
    %v2230 = vsel %vm278, %v2131, 0
    %v2233 = vsel %vm278, %v2132, 0
    %v2236 = vsel %vm278, %v2133, 0
    %v2239 = vsel %vm278, %v2134, 0
    %v2242 = vsel %vm278, %v2135, 0
    %v2245 = vsel %vm278, %v2136, 0
    %v2248 = vsel %vm278, %v2137, 0
    %2250 = vmatprep.subr.bf16.mxu0 0
    %2251 = vmatpush1.bf16.msra.mxu0 %v2150
    %2252 = vmatprep.subr.bf16.mxu0 0
    %2253 = vmatpush1.bf16.msra.mxu0 %v2151
    %2254 = vmatprep.subr.bf16.mxu0 0
    %2255 = vmatpush1.bf16.msra.mxu0 0
    %2256 = vmatprep.subr.bf16.mxu0 0
    %2257 = vmatpush1.bf16.msra.mxu0 0
    %2258 = vmatprep.subr.bf16.mxu0 0
    %2259 = vmatpush1.bf16.msra.mxu0 0
    %2260 = vmatprep.subr.bf16.mxu0 0
    %2261 = vmatpush1.bf16.msra.mxu0 0
    %2262 = vmatprep.subr.bf16.mxu0 0
    %2263 = vmatpush1.bf16.msra.mxu0 0
    %2264 = vmatprep.subr.bf16.mxu0 0
    %2265 = vmatpush1.bf16.msra.mxu0 0
    %2266 = vmatprep.subr.bf16.mxu0 0
    %2267 = vmatpush1.bf16.msra.mxu0 0
    %2268 = vmatprep.subr.bf16.mxu0 0
    %2269 = vmatpush1.bf16.msra.mxu0 0
    %2270 = vmatprep.subr.bf16.mxu0 0
    %2271 = vmatpush1.bf16.msra.mxu0 0
    %2272 = vmatprep.subr.bf16.mxu0 0
    %2273 = vmatpush1.bf16.msra.mxu0 0
    %2274 = vmatprep.subr.bf16.mxu0 0
    %2275 = vmatpush1.bf16.msra.mxu0 0
    %2276 = vmatprep.subr.bf16.mxu0 0
    %2277 = vmatpush1.bf16.msra.mxu0 0
    %2278 = vmatprep.subr.bf16.mxu0 0
    %2279 = vmatpush1.bf16.msra.mxu0 0
    %2280 = vmatprep.subr.bf16.mxu0 0
    %2281 = vmatpush1.bf16.msra.mxu0 0
    %2282 = vmatprep.mubr.bf16.mxu0 0
    %2283 = vmatmul.mubr.bf16.gmra.mrb[0].mxu0 %v2155
    %v2284 = vpop.f32.mrb[0].mxu0
    %v2285 = vadd.f32 0.0, %v2284
    %v2286 = vpop.f32.mrb[0].mxu0
    %v2287 = vpop.f32.mrb[0].mxu0
    %v2288 = vadd.f32 0.0, %v2287
    %v2289 = vpop.f32.mrb[0].mxu0
    %2290 = vmatprep.mubr.bf16.mxu0 0
    %2291 = vmatmul.mubr.bf16.gmra.mrb[0].mxu0 %v2158
    %v2292 = vpop.f32.mrb[0].mxu0
    %v2293 = vadd.f32 0.0, %v2292
    %v2294 = vpop.f32.mrb[0].mxu0
    %v2295 = vpop.f32.mrb[0].mxu0
    %v2296 = vadd.f32 0.0, %v2295
    %v2297 = vpop.f32.mrb[0].mxu0
    %2298 = vmatprep.mubr.bf16.mxu0 0
    %2299 = vmatmul.mubr.bf16.gmra.mrb[0].mxu0 %v2161
    %v2300 = vpop.f32.mrb[0].mxu0
    %v2301 = vadd.f32 0.0, %v2300
    %v2302 = vpop.f32.mrb[0].mxu0
    %v2303 = vpop.f32.mrb[0].mxu0
    %v2304 = vadd.f32 0.0, %v2303
    %v2305 = vpop.f32.mrb[0].mxu0
    %2306 = vmatprep.mubr.bf16.mxu0 0
    %2307 = vmatmul.mubr.bf16.gmra.mrb[0].mxu0 %v2164
    %v2308 = vpop.f32.mrb[0].mxu0
    %v2309 = vadd.f32 0.0, %v2308
    %v2310 = vpop.f32.mrb[0].mxu0
    %v2311 = vpop.f32.mrb[0].mxu0
    %v2312 = vadd.f32 0.0, %v2311
    %v2313 = vpop.f32.mrb[0].mxu0
    %2314 = vmatprep.mubr.bf16.mxu0 0
    %2315 = vmatmul.mubr.bf16.gmra.mrb[0].mxu0 %v2167
    %v2316 = vpop.f32.mrb[0].mxu0
    %v2317 = vadd.f32 0.0, %v2316
    %v2318 = vpop.f32.mrb[0].mxu0
    %v2319 = vpop.f32.mrb[0].mxu0
    %v2320 = vadd.f32 0.0, %v2319
    %v2321 = vpop.f32.mrb[0].mxu0
    %2322 = vmatprep.mubr.bf16.mxu0 0
    %2323 = vmatmul.mubr.bf16.gmra.mrb[0].mxu0 %v2170
    %v2324 = vpop.f32.mrb[0].mxu0
    %v2325 = vadd.f32 0.0, %v2324
    %v2326 = vpop.f32.mrb[0].mxu0
    %v2327 = vpop.f32.mrb[0].mxu0
    %v2328 = vadd.f32 0.0, %v2327
    %v2329 = vpop.f32.mrb[0].mxu0
    %2330 = vmatprep.mubr.bf16.mxu0 0
    %2331 = vmatmul.mubr.bf16.gmra.mrb[0].mxu0 %v2173
    %v2332 = vpop.f32.mrb[0].mxu0
    %v2333 = vadd.f32 0.0, %v2332
    %v2334 = vpop.f32.mrb[0].mxu0
    %v2335 = vpop.f32.mrb[0].mxu0
    %v2336 = vadd.f32 0.0, %v2335
    %v2337 = vpop.f32.mrb[0].mxu0
    %2338 = vmatprep.mubr.bf16.mxu0 0
    %2339 = vmatmul.mubr.bf16.gmra.mrb[0].mxu0 %v2176
    %v2340 = vpop.f32.mrb[0].mxu0
    %v2341 = vadd.f32 0.0, %v2340
    %v2342 = vpop.f32.mrb[0].mxu0
    %v2343 = vpop.f32.mrb[0].mxu0
    %v2344 = vadd.f32 0.0, %v2343
    %v2345 = vpop.f32.mrb[0].mxu0
    %2346 = vmatprep.mubr.bf16.mxu0 0
    %2347 = vmatmul.mubr.bf16.gmra.mrb[0].mxu0 %v2179
    %v2348 = vpop.f32.mrb[0].mxu0
    %v2349 = vadd.f32 0.0, %v2348
    %v2350 = vpop.f32.mrb[0].mxu0
    %v2351 = vpop.f32.mrb[0].mxu0
    %v2352 = vadd.f32 0.0, %v2351
    %v2353 = vpop.f32.mrb[0].mxu0
    %2354 = vmatprep.mubr.bf16.mxu0 0
    %2355 = vmatmul.mubr.bf16.gmra.mrb[0].mxu0 %v2182
    %v2356 = vpop.f32.mrb[0].mxu0
    %v2357 = vadd.f32 0.0, %v2356
    %v2358 = vpop.f32.mrb[0].mxu0
    %v2359 = vpop.f32.mrb[0].mxu0
    %v2360 = vadd.f32 0.0, %v2359
    %v2361 = vpop.f32.mrb[0].mxu0
    %2362 = vmatprep.mubr.bf16.mxu0 0
    %2363 = vmatmul.mubr.bf16.gmra.mrb[0].mxu0 %v2185
    %v2364 = vpop.f32.mrb[0].mxu0
    %v2365 = vadd.f32 0.0, %v2364
    %v2366 = vpop.f32.mrb[0].mxu0
    %v2367 = vpop.f32.mrb[0].mxu0
    %v2368 = vadd.f32 0.0, %v2367
    %v2369 = vpop.f32.mrb[0].mxu0
    %2370 = vmatprep.mubr.bf16.mxu0 0
    %2371 = vmatmul.mubr.bf16.gmra.mrb[0].mxu0 %v2188
    %v2372 = vpop.f32.mrb[0].mxu0
    %v2373 = vadd.f32 0.0, %v2372
    %v2374 = vpop.f32.mrb[0].mxu0
    %v2375 = vpop.f32.mrb[0].mxu0
    %v2376 = vadd.f32 0.0, %v2375
    %v2377 = vpop.f32.mrb[0].mxu0
    %2378 = vmatprep.mubr.bf16.mxu0 0
    %2379 = vmatmul.mubr.bf16.gmra.mrb[0].mxu0 %v2191
    %v2380 = vpop.f32.mrb[0].mxu0
    %v2381 = vadd.f32 0.0, %v2380
    %v2382 = vpop.f32.mrb[0].mxu0
    %v2383 = vpop.f32.mrb[0].mxu0
    %v2384 = vadd.f32 0.0, %v2383
    %v2385 = vpop.f32.mrb[0].mxu0
    %2386 = vmatprep.mubr.bf16.mxu0 0
    %2387 = vmatmul.mubr.bf16.gmra.mrb[0].mxu0 %v2194
    %v2388 = vpop.f32.mrb[0].mxu0
    %v2389 = vadd.f32 0.0, %v2388
    %v2390 = vpop.f32.mrb[0].mxu0
    %v2391 = vpop.f32.mrb[0].mxu0
    %v2392 = vadd.f32 0.0, %v2391
    %v2393 = vpop.f32.mrb[0].mxu0
    %2394 = vmatprep.mubr.bf16.mxu0 0
    %2395 = vmatmul.mubr.bf16.gmra.mrb[0].mxu0 %v2197
    %v2396 = vpop.f32.mrb[0].mxu0
    %v2397 = vadd.f32 0.0, %v2396
    %v2398 = vpop.f32.mrb[0].mxu0
    %v2399 = vpop.f32.mrb[0].mxu0
    %v2400 = vadd.f32 0.0, %v2399
    %v2401 = vpop.f32.mrb[0].mxu0
    %2402 = vmatprep.mubr.bf16.mxu0 0
    %2403 = vmatmul.mubr.bf16.gmra.mrb[0].mxu0 %v2200
    %v2404 = vpop.f32.mrb[0].mxu0
    %v2405 = vadd.f32 0.0, %v2404
    %v2406 = vpop.f32.mrb[0].mxu0
    %v2407 = vpop.f32.mrb[0].mxu0
    %v2408 = vadd.f32 0.0, %v2407
    %v2409 = vpop.f32.mrb[0].mxu0
    %2410 = vmatprep.mubr.bf16.mxu0 0
    %2411 = vmatmul.mubr.bf16.gmra.mrb[0].mxu0 %v2203
    %v2412 = vpop.f32.mrb[0].mxu0
    %v2413 = vadd.f32 0.0, %v2412
    %v2414 = vpop.f32.mrb[0].mxu0
    %v2415 = vpop.f32.mrb[0].mxu0
    %v2416 = vadd.f32 0.0, %v2415
    %v2417 = vpop.f32.mrb[0].mxu0
    %2418 = vmatprep.mubr.bf16.mxu0 0
    %2419 = vmatmul.mubr.bf16.gmra.mrb[0].mxu0 %v2206
    %v2420 = vpop.f32.mrb[0].mxu0
    %v2421 = vadd.f32 0.0, %v2420
    %v2422 = vpop.f32.mrb[0].mxu0
    %v2423 = vpop.f32.mrb[0].mxu0
    %v2424 = vadd.f32 0.0, %v2423
    %v2425 = vpop.f32.mrb[0].mxu0
    %2426 = vmatprep.mubr.bf16.mxu0 0
    %2427 = vmatmul.mubr.bf16.gmra.mrb[0].mxu0 %v2209
    %v2428 = vpop.f32.mrb[0].mxu0
    %v2429 = vadd.f32 0.0, %v2428
    %v2430 = vpop.f32.mrb[0].mxu0
    %v2431 = vpop.f32.mrb[0].mxu0
    %v2432 = vadd.f32 0.0, %v2431
    %v2433 = vpop.f32.mrb[0].mxu0
    %2434 = vmatprep.mubr.bf16.mxu0 0
    %2435 = vmatmul.mubr.bf16.gmra.mrb[0].mxu0 %v2212
    %v2436 = vpop.f32.mrb[0].mxu0
    %v2437 = vadd.f32 0.0, %v2436
    %v2438 = vpop.f32.mrb[0].mxu0
    %v2439 = vpop.f32.mrb[0].mxu0
    %v2440 = vadd.f32 0.0, %v2439
    %v2441 = vpop.f32.mrb[0].mxu0
    %2442 = vmatprep.mubr.bf16.mxu0 0
    %2443 = vmatmul.mubr.bf16.gmra.mrb[0].mxu0 %v2215
    %v2444 = vpop.f32.mrb[0].mxu0
    %v2445 = vadd.f32 0.0, %v2444
    %v2446 = vpop.f32.mrb[0].mxu0
    %v2447 = vpop.f32.mrb[0].mxu0
    %v2448 = vadd.f32 0.0, %v2447
    %v2449 = vpop.f32.mrb[0].mxu0
    %2450 = vmatprep.mubr.bf16.mxu0 0
    %2451 = vmatmul.mubr.bf16.gmra.mrb[0].mxu0 %v2218
    %v2452 = vpop.f32.mrb[0].mxu0
    %v2453 = vadd.f32 0.0, %v2452
    %v2454 = vpop.f32.mrb[0].mxu0
    %v2455 = vpop.f32.mrb[0].mxu0
    %v2456 = vadd.f32 0.0, %v2455
    %v2457 = vpop.f32.mrb[0].mxu0
    %2458 = vmatprep.mubr.bf16.mxu0 0
    %2459 = vmatmul.mubr.bf16.gmra.mrb[0].mxu0 %v2221
    %v2460 = vpop.f32.mrb[0].mxu0
    %v2461 = vadd.f32 0.0, %v2460
    %v2462 = vpop.f32.mrb[0].mxu0
    %v2463 = vpop.f32.mrb[0].mxu0
    %v2464 = vadd.f32 0.0, %v2463
    %v2465 = vpop.f32.mrb[0].mxu0
    %2466 = vmatprep.mubr.bf16.mxu0 0
    %2467 = vmatmul.mubr.bf16.gmra.mrb[0].mxu0 %v2224
    %v2468 = vpop.f32.mrb[0].mxu0
    %v2469 = vadd.f32 0.0, %v2468
    %v2470 = vpop.f32.mrb[0].mxu0
    %v2471 = vpop.f32.mrb[0].mxu0
    %v2472 = vadd.f32 0.0, %v2471
    %v2473 = vpop.f32.mrb[0].mxu0
    %2474 = vmatprep.mubr.bf16.mxu0 0
    %2475 = vmatmul.mubr.bf16.gmra.mrb[0].mxu0 %v2227
    %v2476 = vpop.f32.mrb[0].mxu0
    %v2477 = vadd.f32 0.0, %v2476
    %v2478 = vpop.f32.mrb[0].mxu0
    %v2479 = vpop.f32.mrb[0].mxu0
    %v2480 = vadd.f32 0.0, %v2479
    %v2481 = vpop.f32.mrb[0].mxu0
    %2482 = vmatprep.mubr.bf16.mxu0 0
    %2483 = vmatmul.mubr.bf16.gmra.mrb[0].mxu0 %v2230
    %v2484 = vpop.f32.mrb[0].mxu0
    %v2485 = vadd.f32 0.0, %v2484
    %v2486 = vpop.f32.mrb[0].mxu0
    %v2487 = vpop.f32.mrb[0].mxu0
    %v2488 = vadd.f32 0.0, %v2487
    %v2489 = vpop.f32.mrb[0].mxu0
    %2490 = vmatprep.mubr.bf16.mxu0 0
    %2491 = vmatmul.mubr.bf16.gmra.mrb[0].mxu0 %v2233
    %v2492 = vpop.f32.mrb[0].mxu0
    %v2493 = vadd.f32 0.0, %v2492
    %v2494 = vpop.f32.mrb[0].mxu0
    %v2495 = vpop.f32.mrb[0].mxu0
    %v2496 = vadd.f32 0.0, %v2495
    %v2497 = vpop.f32.mrb[0].mxu0
    %2498 = vmatprep.mubr.bf16.mxu0 0
    %2499 = vmatmul.mubr.bf16.gmra.mrb[0].mxu0 %v2236
    %v2500 = vpop.f32.mrb[0].mxu0
    %v2501 = vadd.f32 0.0, %v2500
    %v2502 = vpop.f32.mrb[0].mxu0
    %v2503 = vpop.f32.mrb[0].mxu0
    %v2504 = vadd.f32 0.0, %v2503
    %v2505 = vpop.f32.mrb[0].mxu0
    %2506 = vmatprep.mubr.bf16.mxu0 0
    %2507 = vmatmul.mubr.bf16.gmra.mrb[0].mxu0 %v2239
    %v2508 = vpop.f32.mrb[0].mxu0
    %v2509 = vadd.f32 0.0, %v2508
    %v2510 = vpop.f32.mrb[0].mxu0
    %v2511 = vpop.f32.mrb[0].mxu0
    %v2512 = vadd.f32 0.0, %v2511
    %v2513 = vpop.f32.mrb[0].mxu0
    %2514 = vmatprep.mubr.bf16.mxu0 0
    %2515 = vmatmul.mubr.bf16.gmra.mrb[0].mxu0 %v2242
    %v2516 = vpop.f32.mrb[0].mxu0
    %v2517 = vadd.f32 0.0, %v2516
    %v2518 = vpop.f32.mrb[0].mxu0
    %v2519 = vpop.f32.mrb[0].mxu0
    %v2520 = vadd.f32 0.0, %v2519
    %v2521 = vpop.f32.mrb[0].mxu0
    %2522 = vmatprep.mubr.bf16.mxu0 0
    %2523 = vmatmul.mubr.bf16.gmra.mrb[0].mxu0 %v2245
    %v2524 = vpop.f32.mrb[0].mxu0
    %v2525 = vadd.f32 0.0, %v2524
    %v2526 = vpop.f32.mrb[0].mxu0
    %v2527 = vpop.f32.mrb[0].mxu0
    %v2528 = vadd.f32 0.0, %v2527
    %v2529 = vpop.f32.mrb[0].mxu0
    %2530 = vmatprep.mubr.bf16.mxu0 0
    %2531 = vmatmul.mubr.bf16.gmra.mrb[0].mxu0 %v2248
    %v2532 = vpop.f32.mrb[0].mxu0
    %v2533 = vadd.f32 0.0, %v2532
    %v2534 = vpop.f32.mrb[0].mxu0
    %v2535 = vpop.f32.mrb[0].mxu0
    %v2536 = vadd.f32 0.0, %v2535
    %v2537 = vpop.f32.mrb[0].mxu0
    %2538 = vdwg.mxu0
    %v2539 = vld [vmem:[%s4] sm:$0xf]
    %v2540 = vld [vmem:[%s4 + $0x4] sm:$0xf]
    %v2541 = vld [vmem:[%s4 + $0x8] sm:$0xf]
    %v2542 = vld [vmem:[%s4 + $0xc] sm:$0xf]
    %v2547 = vunpack.c.l.b16 %v2539
    %v2548 = vunpack.c.l.b16 %v2540
    %v2549 = vunpack.c.l.b16 %v2541
    %v2550 = vunpack.c.l.b16 %v2542
    %v2551 = vpack.c.b16 %v2548, %v2547
    %v2552 = vpack.c.b16 %v2550, %v2549
    %2555 = vmatprep.subr.bf16.mxu0 0
    %2556 = vmatpush1.bf16.msra.mxu0 %v2551
    %2557 = vmatprep.subr.bf16.mxu0 0
    %2558 = vmatpush1.bf16.msra.mxu0 %v2552
    %2559 = vmatprep.subr.bf16.mxu0 0
    %2560 = vmatpush1.bf16.msra.mxu0 0
    %2561 = vmatprep.subr.bf16.mxu0 0
    %2562 = vmatpush1.bf16.msra.mxu0 0
    %2563 = vmatprep.subr.bf16.mxu0 0
    %2564 = vmatpush1.bf16.msra.mxu0 0
    %2565 = vmatprep.subr.bf16.mxu0 0
    %2566 = vmatpush1.bf16.msra.mxu0 0
    %2567 = vmatprep.subr.bf16.mxu0 0
    %2568 = vmatpush1.bf16.msra.mxu0 0
    %2569 = vmatprep.subr.bf16.mxu0 0
    %2570 = vmatpush1.bf16.msra.mxu0 0
    %2571 = vmatprep.subr.bf16.mxu0 0
    %2572 = vmatpush1.bf16.msra.mxu0 0
    %2573 = vmatprep.subr.bf16.mxu0 0
    %2574 = vmatpush1.bf16.msra.mxu0 0
    %2575 = vmatprep.subr.bf16.mxu0 0
    %2576 = vmatpush1.bf16.msra.mxu0 0
    %2577 = vmatprep.subr.bf16.mxu0 0
    %2578 = vmatpush1.bf16.msra.mxu0 0
    %2579 = vmatprep.subr.bf16.mxu0 0
    %2580 = vmatpush1.bf16.msra.mxu0 0
    %2581 = vmatprep.subr.bf16.mxu0 0
    %2582 = vmatpush1.bf16.msra.mxu0 0
    %2583 = vmatprep.subr.bf16.mxu0 0
    %2584 = vmatpush1.bf16.msra.mxu0 0
    %2585 = vmatprep.subr.bf16.mxu0 0
    %2586 = vmatpush1.bf16.msra.mxu0 0
    %2587 = vmatprep.mubr.bf16.mxu0 0
    %2588 = vmatmul.mubr.bf16.gmra.mrb[0].mxu0 %v2155
    %v2589 = vpop.f32.mrb[0].mxu0
    %v2590 = vadd.f32 0.0, %v2589
    %v2591 = vpop.f32.mrb[0].mxu0
    %v2592 = vpop.f32.mrb[0].mxu0
    %v2593 = vadd.f32 0.0, %v2592
    %v2594 = vpop.f32.mrb[0].mxu0
    %2595 = vmatprep.mubr.bf16.mxu0 0
    %2596 = vmatmul.mubr.bf16.gmra.mrb[0].mxu0 %v2158
    %v2597 = vpop.f32.mrb[0].mxu0
    %v2598 = vadd.f32 0.0, %v2597
    %v2599 = vpop.f32.mrb[0].mxu0
    %v2600 = vpop.f32.mrb[0].mxu0
    %v2601 = vadd.f32 0.0, %v2600
    %v2602 = vpop.f32.mrb[0].mxu0
    %2603 = vmatprep.mubr.bf16.mxu0 0
    %2604 = vmatmul.mubr.bf16.gmra.mrb[0].mxu0 %v2161
    %v2605 = vpop.f32.mrb[0].mxu0
    %v2606 = vadd.f32 0.0, %v2605
    %v2607 = vpop.f32.mrb[0].mxu0
    %v2608 = vpop.f32.mrb[0].mxu0
    %v2609 = vadd.f32 0.0, %v2608
    %v2610 = vpop.f32.mrb[0].mxu0
    %2611 = vmatprep.mubr.bf16.mxu0 0
    %2612 = vmatmul.mubr.bf16.gmra.mrb[0].mxu0 %v2164
    %v2613 = vpop.f32.mrb[0].mxu0
    %v2614 = vadd.f32 0.0, %v2613
    %v2615 = vpop.f32.mrb[0].mxu0
    %v2616 = vpop.f32.mrb[0].mxu0
    %v2617 = vadd.f32 0.0, %v2616
    %v2618 = vpop.f32.mrb[0].mxu0
    %2619 = vmatprep.mubr.bf16.mxu0 0
    %2620 = vmatmul.mubr.bf16.gmra.mrb[0].mxu0 %v2167
    %v2621 = vpop.f32.mrb[0].mxu0
    %v2622 = vadd.f32 0.0, %v2621
    %v2623 = vpop.f32.mrb[0].mxu0
    %v2624 = vpop.f32.mrb[0].mxu0
    %v2625 = vadd.f32 0.0, %v2624
    %v2626 = vpop.f32.mrb[0].mxu0
    %2627 = vmatprep.mubr.bf16.mxu0 0
    %2628 = vmatmul.mubr.bf16.gmra.mrb[0].mxu0 %v2170
    %v2629 = vpop.f32.mrb[0].mxu0
    %v2630 = vadd.f32 0.0, %v2629
    %v2631 = vpop.f32.mrb[0].mxu0
    %v2632 = vpop.f32.mrb[0].mxu0
    %v2633 = vadd.f32 0.0, %v2632
    %v2634 = vpop.f32.mrb[0].mxu0
    %2635 = vmatprep.mubr.bf16.mxu0 0
    %2636 = vmatmul.mubr.bf16.gmra.mrb[0].mxu0 %v2173
    %v2637 = vpop.f32.mrb[0].mxu0
    %v2638 = vadd.f32 0.0, %v2637
    %v2639 = vpop.f32.mrb[0].mxu0
    %v2640 = vpop.f32.mrb[0].mxu0
    %v2641 = vadd.f32 0.0, %v2640
    %v2642 = vpop.f32.mrb[0].mxu0
    %2643 = vmatprep.mubr.bf16.mxu0 0
    %2644 = vmatmul.mubr.bf16.gmra.mrb[0].mxu0 %v2176
    %v2645 = vpop.f32.mrb[0].mxu0
    %v2646 = vadd.f32 0.0, %v2645
    %v2647 = vpop.f32.mrb[0].mxu0
    %v2648 = vpop.f32.mrb[0].mxu0
    %v2649 = vadd.f32 0.0, %v2648
    %v2650 = vpop.f32.mrb[0].mxu0
    %2651 = vmatprep.mubr.bf16.mxu0 0
    %2652 = vmatmul.mubr.bf16.gmra.mrb[0].mxu0 %v2179
    %v2653 = vpop.f32.mrb[0].mxu0
    %v2654 = vadd.f32 0.0, %v2653
    %v2655 = vpop.f32.mrb[0].mxu0
    %v2656 = vpop.f32.mrb[0].mxu0
    %v2657 = vadd.f32 0.0, %v2656
    %v2658 = vpop.f32.mrb[0].mxu0
    %2659 = vmatprep.mubr.bf16.mxu0 0
    %2660 = vmatmul.mubr.bf16.gmra.mrb[0].mxu0 %v2182
    %v2661 = vpop.f32.mrb[0].mxu0
    %v2662 = vadd.f32 0.0, %v2661
    %v2663 = vpop.f32.mrb[0].mxu0
    %v2664 = vpop.f32.mrb[0].mxu0
    %v2665 = vadd.f32 0.0, %v2664
    %v2666 = vpop.f32.mrb[0].mxu0
    %2667 = vmatprep.mubr.bf16.mxu0 0
    %2668 = vmatmul.mubr.bf16.gmra.mrb[0].mxu0 %v2185
    %v2669 = vpop.f32.mrb[0].mxu0
    %v2670 = vadd.f32 0.0, %v2669
    %v2671 = vpop.f32.mrb[0].mxu0
    %v2672 = vpop.f32.mrb[0].mxu0
    %v2673 = vadd.f32 0.0, %v2672
    %v2674 = vpop.f32.mrb[0].mxu0
    %2675 = vmatprep.mubr.bf16.mxu0 0
    %2676 = vmatmul.mubr.bf16.gmra.mrb[0].mxu0 %v2188
    %v2677 = vpop.f32.mrb[0].mxu0
    %v2678 = vadd.f32 0.0, %v2677
    %v2679 = vpop.f32.mrb[0].mxu0
    %v2680 = vpop.f32.mrb[0].mxu0
    %v2681 = vadd.f32 0.0, %v2680
    %v2682 = vpop.f32.mrb[0].mxu0
    %2683 = vmatprep.mubr.bf16.mxu0 0
    %2684 = vmatmul.mubr.bf16.gmra.mrb[0].mxu0 %v2191
    %v2685 = vpop.f32.mrb[0].mxu0
    %v2686 = vadd.f32 0.0, %v2685
    %v2687 = vpop.f32.mrb[0].mxu0
    %v2688 = vpop.f32.mrb[0].mxu0
    %v2689 = vadd.f32 0.0, %v2688
    %v2690 = vpop.f32.mrb[0].mxu0
    %2691 = vmatprep.mubr.bf16.mxu0 0
    %2692 = vmatmul.mubr.bf16.gmra.mrb[0].mxu0 %v2194
    %v2693 = vpop.f32.mrb[0].mxu0
    %v2694 = vadd.f32 0.0, %v2693
    %v2695 = vpop.f32.mrb[0].mxu0
    %v2696 = vpop.f32.mrb[0].mxu0
    %v2697 = vadd.f32 0.0, %v2696
    %v2698 = vpop.f32.mrb[0].mxu0
    %2699 = vmatprep.mubr.bf16.mxu0 0
    %2700 = vmatmul.mubr.bf16.gmra.mrb[0].mxu0 %v2197
    %v2701 = vpop.f32.mrb[0].mxu0
    %v2702 = vadd.f32 0.0, %v2701
    %v2703 = vpop.f32.mrb[0].mxu0
    %v2704 = vpop.f32.mrb[0].mxu0
    %v2705 = vadd.f32 0.0, %v2704
    %v2706 = vpop.f32.mrb[0].mxu0
    %2707 = vmatprep.mubr.bf16.mxu0 0
    %2708 = vmatmul.mubr.bf16.gmra.mrb[0].mxu0 %v2200
    %v2709 = vpop.f32.mrb[0].mxu0
    %v2710 = vadd.f32 0.0, %v2709
    %v2711 = vpop.f32.mrb[0].mxu0
    %v2712 = vpop.f32.mrb[0].mxu0
    %v2713 = vadd.f32 0.0, %v2712
    %v2714 = vpop.f32.mrb[0].mxu0
    %2715 = vmatprep.mubr.bf16.mxu0 0
    %2716 = vmatmul.mubr.bf16.gmra.mrb[0].mxu0 %v2203
    %v2717 = vpop.f32.mrb[0].mxu0
    %v2718 = vadd.f32 0.0, %v2717
    %v2719 = vpop.f32.mrb[0].mxu0
    %v2720 = vpop.f32.mrb[0].mxu0
    %v2721 = vadd.f32 0.0, %v2720
    %v2722 = vpop.f32.mrb[0].mxu0
    %2723 = vmatprep.mubr.bf16.mxu0 0
    %2724 = vmatmul.mubr.bf16.gmra.mrb[0].mxu0 %v2206
    %v2725 = vpop.f32.mrb[0].mxu0
    %v2726 = vadd.f32 0.0, %v2725
    %v2727 = vpop.f32.mrb[0].mxu0
    %v2728 = vpop.f32.mrb[0].mxu0
    %v2729 = vadd.f32 0.0, %v2728
    %v2730 = vpop.f32.mrb[0].mxu0
    %2731 = vmatprep.mubr.bf16.mxu0 0
    %2732 = vmatmul.mubr.bf16.gmra.mrb[0].mxu0 %v2209
    %v2733 = vpop.f32.mrb[0].mxu0
    %v2734 = vadd.f32 0.0, %v2733
    %v2735 = vpop.f32.mrb[0].mxu0
    %v2736 = vpop.f32.mrb[0].mxu0
    %v2737 = vadd.f32 0.0, %v2736
    %v2738 = vpop.f32.mrb[0].mxu0
    %2739 = vmatprep.mubr.bf16.mxu0 0
    %2740 = vmatmul.mubr.bf16.gmra.mrb[0].mxu0 %v2212
    %v2741 = vpop.f32.mrb[0].mxu0
    %v2742 = vadd.f32 0.0, %v2741
    %v2743 = vpop.f32.mrb[0].mxu0
    %v2744 = vpop.f32.mrb[0].mxu0
    %v2745 = vadd.f32 0.0, %v2744
    %v2746 = vpop.f32.mrb[0].mxu0
    %2747 = vmatprep.mubr.bf16.mxu0 0
    %2748 = vmatmul.mubr.bf16.gmra.mrb[0].mxu0 %v2215
    %v2749 = vpop.f32.mrb[0].mxu0
    %v2750 = vadd.f32 0.0, %v2749
    %v2751 = vpop.f32.mrb[0].mxu0
    %v2752 = vpop.f32.mrb[0].mxu0
    %v2753 = vadd.f32 0.0, %v2752
    %v2754 = vpop.f32.mrb[0].mxu0
    %2755 = vmatprep.mubr.bf16.mxu0 0
    %2756 = vmatmul.mubr.bf16.gmra.mrb[0].mxu0 %v2218
    %v2757 = vpop.f32.mrb[0].mxu0
    %v2758 = vadd.f32 0.0, %v2757
    %v2759 = vpop.f32.mrb[0].mxu0
    %v2760 = vpop.f32.mrb[0].mxu0
    %v2761 = vadd.f32 0.0, %v2760
    %v2762 = vpop.f32.mrb[0].mxu0
    %2763 = vmatprep.mubr.bf16.mxu0 0
    %2764 = vmatmul.mubr.bf16.gmra.mrb[0].mxu0 %v2221
    %v2765 = vpop.f32.mrb[0].mxu0
    %v2766 = vadd.f32 0.0, %v2765
    %v2767 = vpop.f32.mrb[0].mxu0
    %v2768 = vpop.f32.mrb[0].mxu0
    %v2769 = vadd.f32 0.0, %v2768
    %v2770 = vpop.f32.mrb[0].mxu0
    %2771 = vmatprep.mubr.bf16.mxu0 0
    %2772 = vmatmul.mubr.bf16.gmra.mrb[0].mxu0 %v2224
    %v2773 = vpop.f32.mrb[0].mxu0
    %v2774 = vadd.f32 0.0, %v2773
    %v2775 = vpop.f32.mrb[0].mxu0
    %v2776 = vpop.f32.mrb[0].mxu0
    %v2777 = vadd.f32 0.0, %v2776
    %v2778 = vpop.f32.mrb[0].mxu0
    %2779 = vmatprep.mubr.bf16.mxu0 0
    %2780 = vmatmul.mubr.bf16.gmra.mrb[0].mxu0 %v2227
    %v2781 = vpop.f32.mrb[0].mxu0
    %v2782 = vadd.f32 0.0, %v2781
    %v2783 = vpop.f32.mrb[0].mxu0
    %v2784 = vpop.f32.mrb[0].mxu0
    %v2785 = vadd.f32 0.0, %v2784
    %v2786 = vpop.f32.mrb[0].mxu0
    %2787 = vmatprep.mubr.bf16.mxu0 0
    %2788 = vmatmul.mubr.bf16.gmra.mrb[0].mxu0 %v2230
    %v2789 = vpop.f32.mrb[0].mxu0
    %v2790 = vadd.f32 0.0, %v2789
    %v2791 = vpop.f32.mrb[0].mxu0
    %v2792 = vpop.f32.mrb[0].mxu0
    %v2793 = vadd.f32 0.0, %v2792
    %v2794 = vpop.f32.mrb[0].mxu0
    %2795 = vmatprep.mubr.bf16.mxu0 0
    %2796 = vmatmul.mubr.bf16.gmra.mrb[0].mxu0 %v2233
    %v2797 = vpop.f32.mrb[0].mxu0
    %v2798 = vadd.f32 0.0, %v2797
    %v2799 = vpop.f32.mrb[0].mxu0
    %v2800 = vpop.f32.mrb[0].mxu0
    %v2801 = vadd.f32 0.0, %v2800
    %v2802 = vpop.f32.mrb[0].mxu0
    %2803 = vmatprep.mubr.bf16.mxu0 0
    %2804 = vmatmul.mubr.bf16.gmra.mrb[0].mxu0 %v2236
    %v2805 = vpop.f32.mrb[0].mxu0
    %v2806 = vadd.f32 0.0, %v2805
    %v2807 = vpop.f32.mrb[0].mxu0
    %v2808 = vpop.f32.mrb[0].mxu0
    %v2809 = vadd.f32 0.0, %v2808
    %v2810 = vpop.f32.mrb[0].mxu0
    %2811 = vmatprep.mubr.bf16.mxu0 0
    %2812 = vmatmul.mubr.bf16.gmra.mrb[0].mxu0 %v2239
    %v2813 = vpop.f32.mrb[0].mxu0
    %v2814 = vadd.f32 0.0, %v2813
    %v2815 = vpop.f32.mrb[0].mxu0
    %v2816 = vpop.f32.mrb[0].mxu0
    %v2817 = vadd.f32 0.0, %v2816
    %v2818 = vpop.f32.mrb[0].mxu0
    %2819 = vmatprep.mubr.bf16.mxu0 0
    %2820 = vmatmul.mubr.bf16.gmra.mrb[0].mxu0 %v2242
    %v2821 = vpop.f32.mrb[0].mxu0
    %v2822 = vadd.f32 0.0, %v2821
    %v2823 = vpop.f32.mrb[0].mxu0
    %v2824 = vpop.f32.mrb[0].mxu0
    %v2825 = vadd.f32 0.0, %v2824
    %v2826 = vpop.f32.mrb[0].mxu0
    %2827 = vmatprep.mubr.bf16.mxu0 0
    %2828 = vmatmul.mubr.bf16.gmra.mrb[0].mxu0 %v2245
    %v2829 = vpop.f32.mrb[0].mxu0
    %v2830 = vadd.f32 0.0, %v2829
    %v2831 = vpop.f32.mrb[0].mxu0
    %v2832 = vpop.f32.mrb[0].mxu0
    %v2833 = vadd.f32 0.0, %v2832
    %v2834 = vpop.f32.mrb[0].mxu0
    %2835 = vmatprep.mubr.bf16.mxu0 0
    %2836 = vmatmul.mubr.bf16.gmra.mrb[0].mxu0 %v2248
    %v2837 = vpop.f32.mrb[0].mxu0
    %v2838 = vadd.f32 0.0, %v2837
    %v2839 = vpop.f32.mrb[0].mxu0
    %v2840 = vpop.f32.mrb[0].mxu0
    %v2841 = vadd.f32 0.0, %v2840
    %v2842 = vpop.f32.mrb[0].mxu0
    %2843 = vdwg.mxu0
    %v2844 = vpack.c.bf16 %v2288, %v2285
    %v2845 = vpack.c.bf16 %v2296, %v2293
    %v2846 = vpack.c.bf16 %v2304, %v2301
    %v2847 = vpack.c.bf16 %v2312, %v2309
    %v2848 = vpack.c.bf16 %v2320, %v2317
    %v2849 = vpack.c.bf16 %v2328, %v2325
    %v2850 = vpack.c.bf16 %v2336, %v2333
    %v2851 = vpack.c.bf16 %v2344, %v2341
    %v2852 = vpack.c.bf16 %v2352, %v2349
    %v2853 = vpack.c.bf16 %v2360, %v2357
    %v2854 = vpack.c.bf16 %v2368, %v2365
    %v2855 = vpack.c.bf16 %v2376, %v2373
    %v2856 = vpack.c.bf16 %v2384, %v2381
    %v2857 = vpack.c.bf16 %v2392, %v2389
    %v2858 = vpack.c.bf16 %v2400, %v2397
    %v2859 = vpack.c.bf16 %v2408, %v2405
    %v2860 = vpack.c.bf16 %v2416, %v2413
    %v2861 = vpack.c.bf16 %v2424, %v2421
    %v2862 = vpack.c.bf16 %v2432, %v2429
    %v2863 = vpack.c.bf16 %v2440, %v2437
    %v2864 = vpack.c.bf16 %v2448, %v2445
    %v2865 = vpack.c.bf16 %v2456, %v2453
    %v2866 = vpack.c.bf16 %v2464, %v2461
    %v2867 = vpack.c.bf16 %v2472, %v2469
    %v2868 = vpack.c.bf16 %v2480, %v2477
    %v2869 = vpack.c.bf16 %v2488, %v2485
    %v2870 = vpack.c.bf16 %v2496, %v2493
    %v2871 = vpack.c.bf16 %v2504, %v2501
    %v2872 = vpack.c.bf16 %v2512, %v2509
    %v2873 = vpack.c.bf16 %v2520, %v2517
    %v2874 = vpack.c.bf16 %v2528, %v2525
    %v2875 = vpack.c.bf16 %v2536, %v2533
    %2876 = vmatprep.subr.bf16.mxu0 0
    %2877 = vmatpush1.bf16.msra.mxu0 %v2844
    %2878 = vmatprep.subr.bf16.mxu0 0
    %2879 = vmatpush1.bf16.msra.mxu0 %v2845
    %2880 = vmatprep.subr.bf16.mxu0 0
    %2881 = vmatpush1.bf16.msra.mxu0 %v2846
    %2882 = vmatprep.subr.bf16.mxu0 0
    %2883 = vmatpush1.bf16.msra.mxu0 %v2847
    %2884 = vmatprep.subr.bf16.mxu0 0
    %2885 = vmatpush1.bf16.msra.mxu0 %v2848
    %2886 = vmatprep.subr.bf16.mxu0 0
    %2887 = vmatpush1.bf16.msra.mxu0 %v2849
    %2888 = vmatprep.subr.bf16.mxu0 0
    %2889 = vmatpush1.bf16.msra.mxu0 %v2850
    %2890 = vmatprep.subr.bf16.mxu0 0
    %2891 = vmatpush1.bf16.msra.mxu0 %v2851
    %2892 = vmatprep.subr.bf16.mxu0 0
    %2893 = vmatpush1.bf16.msra.mxu0 %v2852
    %2894 = vmatprep.subr.bf16.mxu0 0
    %2895 = vmatpush1.bf16.msra.mxu0 %v2853
    %2896 = vmatprep.subr.bf16.mxu0 0
    %2897 = vmatpush1.bf16.msra.mxu0 %v2854
    %2898 = vmatprep.subr.bf16.mxu0 0
    %2899 = vmatpush1.bf16.msra.mxu0 %v2855
    %2900 = vmatprep.subr.bf16.mxu0 0
    %2901 = vmatpush1.bf16.msra.mxu0 %v2856
    %2902 = vmatprep.subr.bf16.mxu0 0
    %2903 = vmatpush1.bf16.msra.mxu0 %v2857
    %2904 = vmatprep.subr.bf16.mxu0 0
    %2905 = vmatpush1.bf16.msra.mxu0 %v2858
    %2906 = vmatprep.subr.bf16.mxu0 0
    %2907 = vmatpush1.bf16.msra.mxu0 %v2859
    %2908 = vmatprep.mubr.bf16.mxu0 %v1209
    %2909 = vmatmul.mubr.bf16.gmra.mrb[0].mxu0 %v1208
    %v2910 = vpop.f32.mrb[0].mxu0
    %v2911 = vadd.f32 0.0, %v2910
    %v2912 = vpop.f32.mrb[0].mxu0
    %v2913 = vpop.f32.mrb[0].mxu0
    %v2914 = vadd.f32 0.0, %v2913
    %v2915 = vpop.f32.mrb[0].mxu0
    %2916 = vmatprep.mubr.bf16.mxu0 %v1213
    %2917 = vmatmul.mubr.bf16.gmra.mrb[0].mxu0 %v1212
    %v2918 = vpop.f32.mrb[0].mxu0
    %v2919 = vadd.f32 0.0, %v2918
    %v2920 = vpop.f32.mrb[0].mxu0
    %v2921 = vpop.f32.mrb[0].mxu0
    %v2922 = vadd.f32 0.0, %v2921
    %v2923 = vpop.f32.mrb[0].mxu0
    %2924 = vmatprep.mubr.bf16.mxu0 %v1217
    %2925 = vmatmul.mubr.bf16.gmra.mrb[0].mxu0 %v1216
    %v2926 = vpop.f32.mrb[0].mxu0
    %v2927 = vadd.f32 0.0, %v2926
    %v2928 = vpop.f32.mrb[0].mxu0
    %v2929 = vpop.f32.mrb[0].mxu0
    %v2930 = vadd.f32 0.0, %v2929
    %v2931 = vpop.f32.mrb[0].mxu0
    %2932 = vmatprep.mubr.bf16.mxu0 %v1221
    %2933 = vmatmul.mubr.bf16.gmra.mrb[0].mxu0 %v1220
    %v2934 = vpop.f32.mrb[0].mxu0
    %v2935 = vadd.f32 0.0, %v2934
    %v2936 = vpop.f32.mrb[0].mxu0
    %v2937 = vpop.f32.mrb[0].mxu0
    %v2938 = vadd.f32 0.0, %v2937
    %v2939 = vpop.f32.mrb[0].mxu0
    %2940 = vmatprep.mubr.bf16.mxu0 %v1225
    %2941 = vmatmul.mubr.bf16.gmra.mrb[0].mxu0 %v1224
    %v2942 = vpop.f32.mrb[0].mxu0
    %v2943 = vadd.f32 0.0, %v2942
    %v2944 = vpop.f32.mrb[0].mxu0
    %v2945 = vpop.f32.mrb[0].mxu0
    %v2946 = vadd.f32 0.0, %v2945
    %v2947 = vpop.f32.mrb[0].mxu0
    %2948 = vmatprep.mubr.bf16.mxu0 %v1229
    %2949 = vmatmul.mubr.bf16.gmra.mrb[0].mxu0 %v1228
    %v2950 = vpop.f32.mrb[0].mxu0
    %v2951 = vadd.f32 0.0, %v2950
    %v2952 = vpop.f32.mrb[0].mxu0
    %v2953 = vpop.f32.mrb[0].mxu0
    %v2954 = vadd.f32 0.0, %v2953
    %v2955 = vpop.f32.mrb[0].mxu0
    %2956 = vmatprep.mubr.bf16.mxu0 %v1233
    %2957 = vmatmul.mubr.bf16.gmra.mrb[0].mxu0 %v1232
    %v2958 = vpop.f32.mrb[0].mxu0
    %v2959 = vadd.f32 0.0, %v2958
    %v2960 = vpop.f32.mrb[0].mxu0
    %v2961 = vpop.f32.mrb[0].mxu0
    %v2962 = vadd.f32 0.0, %v2961
    %v2963 = vpop.f32.mrb[0].mxu0
    %2964 = vmatprep.mubr.bf16.mxu0 %v1237
    %2965 = vmatmul.mubr.bf16.gmra.mrb[0].mxu0 %v1236
    %v2966 = vpop.f32.mrb[0].mxu0
    %v2967 = vadd.f32 0.0, %v2966
    %v2968 = vpop.f32.mrb[0].mxu0
    %v2969 = vpop.f32.mrb[0].mxu0
    %v2970 = vadd.f32 0.0, %v2969
    %v2971 = vpop.f32.mrb[0].mxu0
    %2972 = vmatprep.mubr.bf16.mxu0 %v1241
    %2973 = vmatmul.mubr.bf16.gmra.mrb[0].mxu0 %v1240
    %v2974 = vpop.f32.mrb[0].mxu0
    %v2975 = vadd.f32 0.0, %v2974
    %v2976 = vpop.f32.mrb[0].mxu0
    %v2977 = vpop.f32.mrb[0].mxu0
    %v2978 = vadd.f32 0.0, %v2977
    %v2979 = vpop.f32.mrb[0].mxu0
    %2980 = vmatprep.mubr.bf16.mxu0 %v1245
    %2981 = vmatmul.mubr.bf16.gmra.mrb[0].mxu0 %v1244
    %v2982 = vpop.f32.mrb[0].mxu0
    %v2983 = vadd.f32 0.0, %v2982
    %v2984 = vpop.f32.mrb[0].mxu0
    %v2985 = vpop.f32.mrb[0].mxu0
    %v2986 = vadd.f32 0.0, %v2985
    %v2987 = vpop.f32.mrb[0].mxu0
    %2988 = vmatprep.mubr.bf16.mxu0 %v1249
    %2989 = vmatmul.mubr.bf16.gmra.mrb[0].mxu0 %v1248
    %v2990 = vpop.f32.mrb[0].mxu0
    %v2991 = vadd.f32 0.0, %v2990
    %v2992 = vpop.f32.mrb[0].mxu0
    %v2993 = vpop.f32.mrb[0].mxu0
    %v2994 = vadd.f32 0.0, %v2993
    %v2995 = vpop.f32.mrb[0].mxu0
    %2996 = vmatprep.mubr.bf16.mxu0 %v1253
    %2997 = vmatmul.mubr.bf16.gmra.mrb[0].mxu0 %v1252
    %v2998 = vpop.f32.mrb[0].mxu0
    %v2999 = vadd.f32 0.0, %v2998
    %v3000 = vpop.f32.mrb[0].mxu0
    %v3001 = vpop.f32.mrb[0].mxu0
    %v3002 = vadd.f32 0.0, %v3001
    %v3003 = vpop.f32.mrb[0].mxu0
    %3004 = vmatprep.mubr.bf16.mxu0 %v1257
    %3005 = vmatmul.mubr.bf16.gmra.mrb[0].mxu0 %v1256
    %v3006 = vpop.f32.mrb[0].mxu0
    %v3007 = vadd.f32 0.0, %v3006
    %v3008 = vpop.f32.mrb[0].mxu0
    %v3009 = vpop.f32.mrb[0].mxu0
    %v3010 = vadd.f32 0.0, %v3009
    %v3011 = vpop.f32.mrb[0].mxu0
    %3012 = vmatprep.mubr.bf16.mxu0 %v1261
    %3013 = vmatmul.mubr.bf16.gmra.mrb[0].mxu0 %v1260
    %v3014 = vpop.f32.mrb[0].mxu0
    %v3015 = vadd.f32 0.0, %v3014
    %v3016 = vpop.f32.mrb[0].mxu0
    %v3017 = vpop.f32.mrb[0].mxu0
    %v3018 = vadd.f32 0.0, %v3017
    %v3019 = vpop.f32.mrb[0].mxu0
    %3020 = vmatprep.mubr.bf16.mxu0 %v1265
    %3021 = vmatmul.mubr.bf16.gmra.mrb[0].mxu0 %v1264
    %v3022 = vpop.f32.mrb[0].mxu0
    %v3023 = vadd.f32 0.0, %v3022
    %v3024 = vpop.f32.mrb[0].mxu0
    %v3025 = vpop.f32.mrb[0].mxu0
    %v3026 = vadd.f32 0.0, %v3025
    %v3027 = vpop.f32.mrb[0].mxu0
    %3028 = vmatprep.mubr.bf16.mxu0 %v1269
    %3029 = vmatmul.mubr.bf16.gmra.mrb[0].mxu0 %v1268
    %v3030 = vpop.f32.mrb[0].mxu0
    %v3031 = vadd.f32 0.0, %v3030
    %v3032 = vpop.f32.mrb[0].mxu0
    %v3033 = vpop.f32.mrb[0].mxu0
    %v3034 = vadd.f32 0.0, %v3033
    %v3035 = vpop.f32.mrb[0].mxu0
    %3036 = vmatprep.mubr.bf16.mxu0 %v1273
    %3037 = vmatmul.mubr.bf16.gmra.mrb[0].mxu0 %v1272
    %v3038 = vpop.f32.mrb[0].mxu0
    %v3039 = vadd.f32 0.0, %v3038
    %v3040 = vpop.f32.mrb[0].mxu0
    %v3041 = vpop.f32.mrb[0].mxu0
    %v3042 = vadd.f32 0.0, %v3041
    %v3043 = vpop.f32.mrb[0].mxu0
    %3044 = vmatprep.mubr.bf16.mxu0 %v1277
    %3045 = vmatmul.mubr.bf16.gmra.mrb[0].mxu0 %v1276
    %v3046 = vpop.f32.mrb[0].mxu0
    %v3047 = vadd.f32 0.0, %v3046
    %v3048 = vpop.f32.mrb[0].mxu0
    %v3049 = vpop.f32.mrb[0].mxu0
    %v3050 = vadd.f32 0.0, %v3049
    %v3051 = vpop.f32.mrb[0].mxu0
    %3052 = vmatprep.mubr.bf16.mxu0 %v1281
    %3053 = vmatmul.mubr.bf16.gmra.mrb[0].mxu0 %v1280
    %v3054 = vpop.f32.mrb[0].mxu0
    %v3055 = vadd.f32 0.0, %v3054
    %v3056 = vpop.f32.mrb[0].mxu0
    %v3057 = vpop.f32.mrb[0].mxu0
    %v3058 = vadd.f32 0.0, %v3057
    %v3059 = vpop.f32.mrb[0].mxu0
    %3060 = vmatprep.mubr.bf16.mxu0 %v1285
    %3061 = vmatmul.mubr.bf16.gmra.mrb[0].mxu0 %v1284
    %v3062 = vpop.f32.mrb[0].mxu0
    %v3063 = vadd.f32 0.0, %v3062
    %v3064 = vpop.f32.mrb[0].mxu0
    %v3065 = vpop.f32.mrb[0].mxu0
    %v3066 = vadd.f32 0.0, %v3065
    %v3067 = vpop.f32.mrb[0].mxu0
    %3068 = vmatprep.mubr.bf16.mxu0 %v1289
    %3069 = vmatmul.mubr.bf16.gmra.mrb[0].mxu0 %v1288
    %v3070 = vpop.f32.mrb[0].mxu0
    %v3071 = vadd.f32 0.0, %v3070
    %v3072 = vpop.f32.mrb[0].mxu0
    %v3073 = vpop.f32.mrb[0].mxu0
    %v3074 = vadd.f32 0.0, %v3073
    %v3075 = vpop.f32.mrb[0].mxu0
    %3076 = vmatprep.mubr.bf16.mxu0 %v1293
    %3077 = vmatmul.mubr.bf16.gmra.mrb[0].mxu0 %v1292
    %v3078 = vpop.f32.mrb[0].mxu0
    %v3079 = vadd.f32 0.0, %v3078
    %v3080 = vpop.f32.mrb[0].mxu0
    %v3081 = vpop.f32.mrb[0].mxu0
    %v3082 = vadd.f32 0.0, %v3081
    %v3083 = vpop.f32.mrb[0].mxu0
    %3084 = vmatprep.mubr.bf16.mxu0 %v1297
    %3085 = vmatmul.mubr.bf16.gmra.mrb[0].mxu0 %v1296
    %v3086 = vpop.f32.mrb[0].mxu0
    %v3087 = vadd.f32 0.0, %v3086
    %v3088 = vpop.f32.mrb[0].mxu0
    %v3089 = vpop.f32.mrb[0].mxu0
    %v3090 = vadd.f32 0.0, %v3089
    %v3091 = vpop.f32.mrb[0].mxu0
    %3092 = vmatprep.mubr.bf16.mxu0 %v1301
    %3093 = vmatmul.mubr.bf16.gmra.mrb[0].mxu0 %v1300
    %v3094 = vpop.f32.mrb[0].mxu0
    %v3095 = vadd.f32 0.0, %v3094
    %v3096 = vpop.f32.mrb[0].mxu0
    %v3097 = vpop.f32.mrb[0].mxu0
    %v3098 = vadd.f32 0.0, %v3097
    %v3099 = vpop.f32.mrb[0].mxu0
    %3100 = vmatprep.mubr.bf16.mxu0 %v1305
    %3101 = vmatmul.mubr.bf16.gmra.mrb[0].mxu0 %v1304
    %v3102 = vpop.f32.mrb[0].mxu0
    %v3103 = vadd.f32 0.0, %v3102
    %v3104 = vpop.f32.mrb[0].mxu0
    %v3105 = vpop.f32.mrb[0].mxu0
    %v3106 = vadd.f32 0.0, %v3105
    %v3107 = vpop.f32.mrb[0].mxu0
    %3108 = vmatprep.mubr.bf16.mxu0 %v1309
    %3109 = vmatmul.mubr.bf16.gmra.mrb[0].mxu0 %v1308
    %v3110 = vpop.f32.mrb[0].mxu0
    %v3111 = vadd.f32 0.0, %v3110
    %v3112 = vpop.f32.mrb[0].mxu0
    %v3113 = vpop.f32.mrb[0].mxu0
    %v3114 = vadd.f32 0.0, %v3113
    %v3115 = vpop.f32.mrb[0].mxu0
    %3116 = vmatprep.mubr.bf16.mxu0 %v1313
    %3117 = vmatmul.mubr.bf16.gmra.mrb[0].mxu0 %v1312
    %v3118 = vpop.f32.mrb[0].mxu0
    %v3119 = vadd.f32 0.0, %v3118
    %v3120 = vpop.f32.mrb[0].mxu0
    %v3121 = vpop.f32.mrb[0].mxu0
    %v3122 = vadd.f32 0.0, %v3121
    %v3123 = vpop.f32.mrb[0].mxu0
    %3124 = vmatprep.mubr.bf16.mxu0 %v1317
    %3125 = vmatmul.mubr.bf16.gmra.mrb[0].mxu0 %v1316
    %v3126 = vpop.f32.mrb[0].mxu0
    %v3127 = vadd.f32 0.0, %v3126
    %v3128 = vpop.f32.mrb[0].mxu0
    %v3129 = vpop.f32.mrb[0].mxu0
    %v3130 = vadd.f32 0.0, %v3129
    %v3131 = vpop.f32.mrb[0].mxu0
    %3132 = vmatprep.mubr.bf16.mxu0 %v1321
    %3133 = vmatmul.mubr.bf16.gmra.mrb[0].mxu0 %v1320
    %v3134 = vpop.f32.mrb[0].mxu0
    %v3135 = vadd.f32 0.0, %v3134
    %v3136 = vpop.f32.mrb[0].mxu0
    %v3137 = vpop.f32.mrb[0].mxu0
    %v3138 = vadd.f32 0.0, %v3137
    %v3139 = vpop.f32.mrb[0].mxu0
    %3140 = vmatprep.mubr.bf16.mxu0 %v1325
    %3141 = vmatmul.mubr.bf16.gmra.mrb[0].mxu0 %v1324
    %v3142 = vpop.f32.mrb[0].mxu0
    %v3143 = vadd.f32 0.0, %v3142
    %v3144 = vpop.f32.mrb[0].mxu0
    %v3145 = vpop.f32.mrb[0].mxu0
    %v3146 = vadd.f32 0.0, %v3145
    %v3147 = vpop.f32.mrb[0].mxu0
    %3148 = vmatprep.mubr.bf16.mxu0 %v1329
    %3149 = vmatmul.mubr.bf16.gmra.mrb[0].mxu0 %v1328
    %v3150 = vpop.f32.mrb[0].mxu0
    %v3151 = vadd.f32 0.0, %v3150
    %v3152 = vpop.f32.mrb[0].mxu0
    %v3153 = vpop.f32.mrb[0].mxu0
    %v3154 = vadd.f32 0.0, %v3153
    %v3155 = vpop.f32.mrb[0].mxu0
    %3156 = vmatprep.mubr.bf16.mxu0 %v1333
    %3157 = vmatmul.mubr.bf16.gmra.mrb[0].mxu0 %v1332
    %v3158 = vpop.f32.mrb[0].mxu0
    %v3159 = vadd.f32 0.0, %v3158
    %v3160 = vpop.f32.mrb[0].mxu0
    %v3161 = vpop.f32.mrb[0].mxu0
    %v3162 = vadd.f32 0.0, %v3161
    %v3163 = vpop.f32.mrb[0].mxu0
    %3164 = vdwg.mxu0
    %3165 = vmatprep.subr.bf16.mxu0 0
    %3166 = vmatpush1.bf16.msra.mxu0 %v2860
    %3167 = vmatprep.subr.bf16.mxu0 0
    %3168 = vmatpush1.bf16.msra.mxu0 %v2861
    %3169 = vmatprep.subr.bf16.mxu0 0
    %3170 = vmatpush1.bf16.msra.mxu0 %v2862
    %3171 = vmatprep.subr.bf16.mxu0 0
    %3172 = vmatpush1.bf16.msra.mxu0 %v2863
    %3173 = vmatprep.subr.bf16.mxu0 0
    %3174 = vmatpush1.bf16.msra.mxu0 %v2864
    %3175 = vmatprep.subr.bf16.mxu0 0
    %3176 = vmatpush1.bf16.msra.mxu0 %v2865
    %3177 = vmatprep.subr.bf16.mxu0 0
    %3178 = vmatpush1.bf16.msra.mxu0 %v2866
    %3179 = vmatprep.subr.bf16.mxu0 0
    %3180 = vmatpush1.bf16.msra.mxu0 %v2867
    %3181 = vmatprep.subr.bf16.mxu0 0
    %3182 = vmatpush1.bf16.msra.mxu0 %v2868
    %3183 = vmatprep.subr.bf16.mxu0 0
    %3184 = vmatpush1.bf16.msra.mxu0 %v2869
    %3185 = vmatprep.subr.bf16.mxu0 0
    %3186 = vmatpush1.bf16.msra.mxu0 %v2870
    %3187 = vmatprep.subr.bf16.mxu0 0
    %3188 = vmatpush1.bf16.msra.mxu0 %v2871
    %3189 = vmatprep.subr.bf16.mxu0 0
    %3190 = vmatpush1.bf16.msra.mxu0 %v2872
    %3191 = vmatprep.subr.bf16.mxu0 0
    %3192 = vmatpush1.bf16.msra.mxu0 %v2873
    %3193 = vmatprep.subr.bf16.mxu0 0
    %3194 = vmatpush1.bf16.msra.mxu0 %v2874
    %3195 = vmatprep.subr.bf16.mxu0 0
    %3196 = vmatpush1.bf16.msra.mxu0 %v2875
    %3197 = vmatprep.mubr.bf16.mxu0 %v1211
    %3198 = vmatmul.mubr.bf16.gmra.mrb[0].mxu0 %v1210
    %v3199 = vpop.f32.mrb[0].mxu0
    %v3200 = vadd.f32 %v2911, %v3199
    %v3201 = vpop.f32.mrb[0].mxu0
    %v3202 = vpop.f32.mrb[0].mxu0
    %v3203 = vadd.f32 %v2914, %v3202
    %v3204 = vpop.f32.mrb[0].mxu0
    %3205 = vmatprep.mubr.bf16.mxu0 %v1215
    %3206 = vmatmul.mubr.bf16.gmra.mrb[0].mxu0 %v1214
    %v3207 = vpop.f32.mrb[0].mxu0
    %v3208 = vadd.f32 %v2919, %v3207
    %v3209 = vpop.f32.mrb[0].mxu0
    %v3210 = vpop.f32.mrb[0].mxu0
    %v3211 = vadd.f32 %v2922, %v3210
    %v3212 = vpop.f32.mrb[0].mxu0
    %3213 = vmatprep.mubr.bf16.mxu0 %v1219
    %3214 = vmatmul.mubr.bf16.gmra.mrb[0].mxu0 %v1218
    %v3215 = vpop.f32.mrb[0].mxu0
    %v3216 = vadd.f32 %v2927, %v3215
    %v3217 = vpop.f32.mrb[0].mxu0
    %v3218 = vpop.f32.mrb[0].mxu0
    %v3219 = vadd.f32 %v2930, %v3218
    %v3220 = vpop.f32.mrb[0].mxu0
    %3221 = vmatprep.mubr.bf16.mxu0 %v1223
    %3222 = vmatmul.mubr.bf16.gmra.mrb[0].mxu0 %v1222
    %v3223 = vpop.f32.mrb[0].mxu0
    %v3224 = vadd.f32 %v2935, %v3223
    %v3225 = vpop.f32.mrb[0].mxu0
    %v3226 = vpop.f32.mrb[0].mxu0
    %v3227 = vadd.f32 %v2938, %v3226
    %v3228 = vpop.f32.mrb[0].mxu0
    %3229 = vmatprep.mubr.bf16.mxu0 %v1227
    %3230 = vmatmul.mubr.bf16.gmra.mrb[0].mxu0 %v1226
    %v3231 = vpop.f32.mrb[0].mxu0
    %v3232 = vadd.f32 %v2943, %v3231
    %v3233 = vpop.f32.mrb[0].mxu0
    %v3234 = vpop.f32.mrb[0].mxu0
    %v3235 = vadd.f32 %v2946, %v3234
    %v3236 = vpop.f32.mrb[0].mxu0
    %3237 = vmatprep.mubr.bf16.mxu0 %v1231
    %3238 = vmatmul.mubr.bf16.gmra.mrb[0].mxu0 %v1230
    %v3239 = vpop.f32.mrb[0].mxu0
    %v3240 = vadd.f32 %v2951, %v3239
    %v3241 = vpop.f32.mrb[0].mxu0
    %v3242 = vpop.f32.mrb[0].mxu0
    %v3243 = vadd.f32 %v2954, %v3242
    %v3244 = vpop.f32.mrb[0].mxu0
    %3245 = vmatprep.mubr.bf16.mxu0 %v1235
    %3246 = vmatmul.mubr.bf16.gmra.mrb[0].mxu0 %v1234
    %v3247 = vpop.f32.mrb[0].mxu0
    %v3248 = vadd.f32 %v2959, %v3247
    %v3249 = vpop.f32.mrb[0].mxu0
    %v3250 = vpop.f32.mrb[0].mxu0
    %v3251 = vadd.f32 %v2962, %v3250
    %v3252 = vpop.f32.mrb[0].mxu0
    %3253 = vmatprep.mubr.bf16.mxu0 %v1239
    %3254 = vmatmul.mubr.bf16.gmra.mrb[0].mxu0 %v1238
    %v3255 = vpop.f32.mrb[0].mxu0
    %v3256 = vadd.f32 %v2967, %v3255
    %v3257 = vpop.f32.mrb[0].mxu0
    %v3258 = vpop.f32.mrb[0].mxu0
    %v3259 = vadd.f32 %v2970, %v3258
    %v3260 = vpop.f32.mrb[0].mxu0
    %3261 = vmatprep.mubr.bf16.mxu0 %v1243
    %3262 = vmatmul.mubr.bf16.gmra.mrb[0].mxu0 %v1242
    %v3263 = vpop.f32.mrb[0].mxu0
    %v3264 = vadd.f32 %v2975, %v3263
    %v3265 = vpop.f32.mrb[0].mxu0
    %v3266 = vpop.f32.mrb[0].mxu0
    %v3267 = vadd.f32 %v2978, %v3266
    %v3268 = vpop.f32.mrb[0].mxu0
    %3269 = vmatprep.mubr.bf16.mxu0 %v1247
    %3270 = vmatmul.mubr.bf16.gmra.mrb[0].mxu0 %v1246
    %v3271 = vpop.f32.mrb[0].mxu0
    %v3272 = vadd.f32 %v2983, %v3271
    %v3273 = vpop.f32.mrb[0].mxu0
    %v3274 = vpop.f32.mrb[0].mxu0
    %v3275 = vadd.f32 %v2986, %v3274
    %v3276 = vpop.f32.mrb[0].mxu0
    %3277 = vmatprep.mubr.bf16.mxu0 %v1251
    %3278 = vmatmul.mubr.bf16.gmra.mrb[0].mxu0 %v1250
    %v3279 = vpop.f32.mrb[0].mxu0
    %v3280 = vadd.f32 %v2991, %v3279
    %v3281 = vpop.f32.mrb[0].mxu0
    %v3282 = vpop.f32.mrb[0].mxu0
    %v3283 = vadd.f32 %v2994, %v3282
    %v3284 = vpop.f32.mrb[0].mxu0
    %3285 = vmatprep.mubr.bf16.mxu0 %v1255
    %3286 = vmatmul.mubr.bf16.gmra.mrb[0].mxu0 %v1254
    %v3287 = vpop.f32.mrb[0].mxu0
    %v3288 = vadd.f32 %v2999, %v3287
    %v3289 = vpop.f32.mrb[0].mxu0
    %v3290 = vpop.f32.mrb[0].mxu0
    %v3291 = vadd.f32 %v3002, %v3290
    %v3292 = vpop.f32.mrb[0].mxu0
    %3293 = vmatprep.mubr.bf16.mxu0 %v1259
    %3294 = vmatmul.mubr.bf16.gmra.mrb[0].mxu0 %v1258
    %v3295 = vpop.f32.mrb[0].mxu0
    %v3296 = vadd.f32 %v3007, %v3295
    %v3297 = vpop.f32.mrb[0].mxu0
    %v3298 = vpop.f32.mrb[0].mxu0
    %v3299 = vadd.f32 %v3010, %v3298
    %v3300 = vpop.f32.mrb[0].mxu0
    %3301 = vmatprep.mubr.bf16.mxu0 %v1263
    %3302 = vmatmul.mubr.bf16.gmra.mrb[0].mxu0 %v1262
    %v3303 = vpop.f32.mrb[0].mxu0
    %v3304 = vadd.f32 %v3015, %v3303
    %v3305 = vpop.f32.mrb[0].mxu0
    %v3306 = vpop.f32.mrb[0].mxu0
    %v3307 = vadd.f32 %v3018, %v3306
    %v3308 = vpop.f32.mrb[0].mxu0
    %3309 = vmatprep.mubr.bf16.mxu0 %v1267
    %3310 = vmatmul.mubr.bf16.gmra.mrb[0].mxu0 %v1266
    %v3311 = vpop.f32.mrb[0].mxu0
    %v3312 = vadd.f32 %v3023, %v3311
    %v3313 = vpop.f32.mrb[0].mxu0
    %v3314 = vpop.f32.mrb[0].mxu0
    %v3315 = vadd.f32 %v3026, %v3314
    %v3316 = vpop.f32.mrb[0].mxu0
    %3317 = vmatprep.mubr.bf16.mxu0 %v1271
    %3318 = vmatmul.mubr.bf16.gmra.mrb[0].mxu0 %v1270
    %v3319 = vpop.f32.mrb[0].mxu0
    %v3320 = vadd.f32 %v3031, %v3319
    %v3321 = vpop.f32.mrb[0].mxu0
    %v3322 = vpop.f32.mrb[0].mxu0
    %v3323 = vadd.f32 %v3034, %v3322
    %v3324 = vpop.f32.mrb[0].mxu0
    %3325 = vmatprep.mubr.bf16.mxu0 %v1275
    %3326 = vmatmul.mubr.bf16.gmra.mrb[0].mxu0 %v1274
    %v3327 = vpop.f32.mrb[0].mxu0
    %v3328 = vadd.f32 %v3039, %v3327
    %v3329 = vpop.f32.mrb[0].mxu0
    %v3330 = vpop.f32.mrb[0].mxu0
    %v3331 = vadd.f32 %v3042, %v3330
    %v3332 = vpop.f32.mrb[0].mxu0
    %3333 = vmatprep.mubr.bf16.mxu0 %v1279
    %3334 = vmatmul.mubr.bf16.gmra.mrb[0].mxu0 %v1278
    %v3335 = vpop.f32.mrb[0].mxu0
    %v3336 = vadd.f32 %v3047, %v3335
    %v3337 = vpop.f32.mrb[0].mxu0
    %v3338 = vpop.f32.mrb[0].mxu0
    %v3339 = vadd.f32 %v3050, %v3338
    %v3340 = vpop.f32.mrb[0].mxu0
    %3341 = vmatprep.mubr.bf16.mxu0 %v1283
    %3342 = vmatmul.mubr.bf16.gmra.mrb[0].mxu0 %v1282
    %v3343 = vpop.f32.mrb[0].mxu0
    %v3344 = vadd.f32 %v3055, %v3343
    %v3345 = vpop.f32.mrb[0].mxu0
    %v3346 = vpop.f32.mrb[0].mxu0
    %v3347 = vadd.f32 %v3058, %v3346
    %v3348 = vpop.f32.mrb[0].mxu0
    %3349 = vmatprep.mubr.bf16.mxu0 %v1287
    %3350 = vmatmul.mubr.bf16.gmra.mrb[0].mxu0 %v1286
    %v3351 = vpop.f32.mrb[0].mxu0
    %v3352 = vadd.f32 %v3063, %v3351
    %v3353 = vpop.f32.mrb[0].mxu0
    %v3354 = vpop.f32.mrb[0].mxu0
    %v3355 = vadd.f32 %v3066, %v3354
    %v3356 = vpop.f32.mrb[0].mxu0
    %3357 = vmatprep.mubr.bf16.mxu0 %v1291
    %3358 = vmatmul.mubr.bf16.gmra.mrb[0].mxu0 %v1290
    %v3359 = vpop.f32.mrb[0].mxu0
    %v3360 = vadd.f32 %v3071, %v3359
    %v3361 = vpop.f32.mrb[0].mxu0
    %v3362 = vpop.f32.mrb[0].mxu0
    %v3363 = vadd.f32 %v3074, %v3362
    %v3364 = vpop.f32.mrb[0].mxu0
    %3365 = vmatprep.mubr.bf16.mxu0 %v1295
    %3366 = vmatmul.mubr.bf16.gmra.mrb[0].mxu0 %v1294
    %v3367 = vpop.f32.mrb[0].mxu0
    %v3368 = vadd.f32 %v3079, %v3367
    %v3369 = vpop.f32.mrb[0].mxu0
    %v3370 = vpop.f32.mrb[0].mxu0
    %v3371 = vadd.f32 %v3082, %v3370
    %v3372 = vpop.f32.mrb[0].mxu0
    %3373 = vmatprep.mubr.bf16.mxu0 %v1299
    %3374 = vmatmul.mubr.bf16.gmra.mrb[0].mxu0 %v1298
    %v3375 = vpop.f32.mrb[0].mxu0
    %v3376 = vadd.f32 %v3087, %v3375
    %v3377 = vpop.f32.mrb[0].mxu0
    %v3378 = vpop.f32.mrb[0].mxu0
    %v3379 = vadd.f32 %v3090, %v3378
    %v3380 = vpop.f32.mrb[0].mxu0
    %3381 = vmatprep.mubr.bf16.mxu0 %v1303
    %3382 = vmatmul.mubr.bf16.gmra.mrb[0].mxu0 %v1302
    %v3383 = vpop.f32.mrb[0].mxu0
    %v3384 = vadd.f32 %v3095, %v3383
    %v3385 = vpop.f32.mrb[0].mxu0
    %v3386 = vpop.f32.mrb[0].mxu0
    %v3387 = vadd.f32 %v3098, %v3386
    %v3388 = vpop.f32.mrb[0].mxu0
    %3389 = vmatprep.mubr.bf16.mxu0 %v1307
    %3390 = vmatmul.mubr.bf16.gmra.mrb[0].mxu0 %v1306
    %v3391 = vpop.f32.mrb[0].mxu0
    %v3392 = vadd.f32 %v3103, %v3391
    %v3393 = vpop.f32.mrb[0].mxu0
    %v3394 = vpop.f32.mrb[0].mxu0
    %v3395 = vadd.f32 %v3106, %v3394
    %v3396 = vpop.f32.mrb[0].mxu0
    %3397 = vmatprep.mubr.bf16.mxu0 %v1311
    %3398 = vmatmul.mubr.bf16.gmra.mrb[0].mxu0 %v1310
    %v3399 = vpop.f32.mrb[0].mxu0
    %v3400 = vadd.f32 %v3111, %v3399
    %v3401 = vpop.f32.mrb[0].mxu0
    %v3402 = vpop.f32.mrb[0].mxu0
    %v3403 = vadd.f32 %v3114, %v3402
    %v3404 = vpop.f32.mrb[0].mxu0
    %3405 = vmatprep.mubr.bf16.mxu0 %v1315
    %3406 = vmatmul.mubr.bf16.gmra.mrb[0].mxu0 %v1314
    %v3407 = vpop.f32.mrb[0].mxu0
    %v3408 = vadd.f32 %v3119, %v3407
    %v3409 = vpop.f32.mrb[0].mxu0
    %v3410 = vpop.f32.mrb[0].mxu0
    %v3411 = vadd.f32 %v3122, %v3410
    %v3412 = vpop.f32.mrb[0].mxu0
    %3413 = vmatprep.mubr.bf16.mxu0 %v1319
    %3414 = vmatmul.mubr.bf16.gmra.mrb[0].mxu0 %v1318
    %v3415 = vpop.f32.mrb[0].mxu0
    %v3416 = vadd.f32 %v3127, %v3415
    %v3417 = vpop.f32.mrb[0].mxu0
    %v3418 = vpop.f32.mrb[0].mxu0
    %v3419 = vadd.f32 %v3130, %v3418
    %v3420 = vpop.f32.mrb[0].mxu0
    %3421 = vmatprep.mubr.bf16.mxu0 %v1323
    %3422 = vmatmul.mubr.bf16.gmra.mrb[0].mxu0 %v1322
    %v3423 = vpop.f32.mrb[0].mxu0
    %v3424 = vadd.f32 %v3135, %v3423
    %v3425 = vpop.f32.mrb[0].mxu0
    %v3426 = vpop.f32.mrb[0].mxu0
    %v3427 = vadd.f32 %v3138, %v3426
    %v3428 = vpop.f32.mrb[0].mxu0
    %3429 = vmatprep.mubr.bf16.mxu0 %v1327
    %3430 = vmatmul.mubr.bf16.gmra.mrb[0].mxu0 %v1326
    %v3431 = vpop.f32.mrb[0].mxu0
    %v3432 = vadd.f32 %v3143, %v3431
    %v3433 = vpop.f32.mrb[0].mxu0
    %v3434 = vpop.f32.mrb[0].mxu0
    %v3435 = vadd.f32 %v3146, %v3434
    %v3436 = vpop.f32.mrb[0].mxu0
    %3437 = vmatprep.mubr.bf16.mxu0 %v1331
    %3438 = vmatmul.mubr.bf16.gmra.mrb[0].mxu0 %v1330
    %v3439 = vpop.f32.mrb[0].mxu0
    %v3440 = vadd.f32 %v3151, %v3439
    %v3441 = vpop.f32.mrb[0].mxu0
    %v3442 = vpop.f32.mrb[0].mxu0
    %v3443 = vadd.f32 %v3154, %v3442
    %v3444 = vpop.f32.mrb[0].mxu0
    %3445 = vmatprep.mubr.bf16.mxu0 %v1335
    %3446 = vmatmul.mubr.bf16.gmra.mrb[0].mxu0 %v1334
    %v3447 = vpop.f32.mrb[0].mxu0
    %v3448 = vadd.f32 %v3159, %v3447
    %v3449 = vpop.f32.mrb[0].mxu0
    %v3450 = vpop.f32.mrb[0].mxu0
    %v3451 = vadd.f32 %v3162, %v3450
    %v3452 = vpop.f32.mrb[0].mxu0
    %3453 = vdwg.mxu0
    %v3454 = vpack.c.bf16 %v2593, %v2590
    %v3455 = vpack.c.bf16 %v2601, %v2598
    %v3456 = vpack.c.bf16 %v2609, %v2606
    %v3457 = vpack.c.bf16 %v2617, %v2614
    %v3458 = vpack.c.bf16 %v2625, %v2622
    %v3459 = vpack.c.bf16 %v2633, %v2630
    %v3460 = vpack.c.bf16 %v2641, %v2638
    %v3461 = vpack.c.bf16 %v2649, %v2646
    %v3462 = vpack.c.bf16 %v2657, %v2654
    %v3463 = vpack.c.bf16 %v2665, %v2662
    %v3464 = vpack.c.bf16 %v2673, %v2670
    %v3465 = vpack.c.bf16 %v2681, %v2678
    %v3466 = vpack.c.bf16 %v2689, %v2686
    %v3467 = vpack.c.bf16 %v2697, %v2694
    %v3468 = vpack.c.bf16 %v2705, %v2702
    %v3469 = vpack.c.bf16 %v2713, %v2710
    %v3470 = vpack.c.bf16 %v2721, %v2718
    %v3471 = vpack.c.bf16 %v2729, %v2726
    %v3472 = vpack.c.bf16 %v2737, %v2734
    %v3473 = vpack.c.bf16 %v2745, %v2742
    %v3474 = vpack.c.bf16 %v2753, %v2750
    %v3475 = vpack.c.bf16 %v2761, %v2758
    %v3476 = vpack.c.bf16 %v2769, %v2766
    %v3477 = vpack.c.bf16 %v2777, %v2774
    %v3478 = vpack.c.bf16 %v2785, %v2782
    %v3479 = vpack.c.bf16 %v2793, %v2790
    %v3480 = vpack.c.bf16 %v2801, %v2798
    %v3481 = vpack.c.bf16 %v2809, %v2806
    %v3482 = vpack.c.bf16 %v2817, %v2814
    %v3483 = vpack.c.bf16 %v2825, %v2822
    %v3484 = vpack.c.bf16 %v2833, %v2830
    %v3485 = vpack.c.bf16 %v2841, %v2838
    %3486 = vmatprep.subr.bf16.mxu0 0
    %3487 = vmatpush1.bf16.msra.mxu0 %v3454
    %3488 = vmatprep.subr.bf16.mxu0 0
    %3489 = vmatpush1.bf16.msra.mxu0 %v3455
    %3490 = vmatprep.subr.bf16.mxu0 0
    %3491 = vmatpush1.bf16.msra.mxu0 %v3456
    %3492 = vmatprep.subr.bf16.mxu0 0
    %3493 = vmatpush1.bf16.msra.mxu0 %v3457
    %3494 = vmatprep.subr.bf16.mxu0 0
    %3495 = vmatpush1.bf16.msra.mxu0 %v3458
    %3496 = vmatprep.subr.bf16.mxu0 0
    %3497 = vmatpush1.bf16.msra.mxu0 %v3459
    %3498 = vmatprep.subr.bf16.mxu0 0
    %3499 = vmatpush1.bf16.msra.mxu0 %v3460
    %3500 = vmatprep.subr.bf16.mxu0 0
    %3501 = vmatpush1.bf16.msra.mxu0 %v3461
    %3502 = vmatprep.subr.bf16.mxu0 0
    %3503 = vmatpush1.bf16.msra.mxu0 %v3462
    %3504 = vmatprep.subr.bf16.mxu0 0
    %3505 = vmatpush1.bf16.msra.mxu0 %v3463
    %3506 = vmatprep.subr.bf16.mxu0 0
    %3507 = vmatpush1.bf16.msra.mxu0 %v3464
    %3508 = vmatprep.subr.bf16.mxu0 0
    %3509 = vmatpush1.bf16.msra.mxu0 %v3465
    %3510 = vmatprep.subr.bf16.mxu0 0
    %3511 = vmatpush1.bf16.msra.mxu0 %v3466
    %3512 = vmatprep.subr.bf16.mxu0 0
    %3513 = vmatpush1.bf16.msra.mxu0 %v3467
    %3514 = vmatprep.subr.bf16.mxu0 0
    %3515 = vmatpush1.bf16.msra.mxu0 %v3468
    %3516 = vmatprep.subr.bf16.mxu0 0
    %3517 = vmatpush1.bf16.msra.mxu0 %v3469
    %3518 = vmatprep.mubr.bf16.mxu0 %v1209
    %3519 = vmatmul.mubr.bf16.gmra.mrb[0].mxu0 %v1208
    %v3520 = vpop.f32.mrb[0].mxu0
    %v3521 = vadd.f32 0.0, %v3520
    %v3522 = vpop.f32.mrb[0].mxu0
    %v3523 = vpop.f32.mrb[0].mxu0
    %v3524 = vadd.f32 0.0, %v3523
    %v3525 = vpop.f32.mrb[0].mxu0
    %3526 = vmatprep.mubr.bf16.mxu0 %v1213
    %3527 = vmatmul.mubr.bf16.gmra.mrb[0].mxu0 %v1212
    %v3528 = vpop.f32.mrb[0].mxu0
    %v3529 = vadd.f32 0.0, %v3528
    %v3530 = vpop.f32.mrb[0].mxu0
    %v3531 = vpop.f32.mrb[0].mxu0
    %v3532 = vadd.f32 0.0, %v3531
    %v3533 = vpop.f32.mrb[0].mxu0
    %3534 = vmatprep.mubr.bf16.mxu0 %v1217
    %3535 = vmatmul.mubr.bf16.gmra.mrb[0].mxu0 %v1216
    %v3536 = vpop.f32.mrb[0].mxu0
    %v3537 = vadd.f32 0.0, %v3536
    %v3538 = vpop.f32.mrb[0].mxu0
    %v3539 = vpop.f32.mrb[0].mxu0
    %v3540 = vadd.f32 0.0, %v3539
    %v3541 = vpop.f32.mrb[0].mxu0
    %3542 = vmatprep.mubr.bf16.mxu0 %v1221
    %3543 = vmatmul.mubr.bf16.gmra.mrb[0].mxu0 %v1220
    %v3544 = vpop.f32.mrb[0].mxu0
    %v3545 = vadd.f32 0.0, %v3544
    %v3546 = vpop.f32.mrb[0].mxu0
    %v3547 = vpop.f32.mrb[0].mxu0
    %v3548 = vadd.f32 0.0, %v3547
    %v3549 = vpop.f32.mrb[0].mxu0
    %3550 = vmatprep.mubr.bf16.mxu0 %v1225
    %3551 = vmatmul.mubr.bf16.gmra.mrb[0].mxu0 %v1224
    %v3552 = vpop.f32.mrb[0].mxu0
    %v3553 = vadd.f32 0.0, %v3552
    %v3554 = vpop.f32.mrb[0].mxu0
    %v3555 = vpop.f32.mrb[0].mxu0
    %v3556 = vadd.f32 0.0, %v3555
    %v3557 = vpop.f32.mrb[0].mxu0
    %3558 = vmatprep.mubr.bf16.mxu0 %v1229
    %3559 = vmatmul.mubr.bf16.gmra.mrb[0].mxu0 %v1228
    %v3560 = vpop.f32.mrb[0].mxu0
    %v3561 = vadd.f32 0.0, %v3560
    %v3562 = vpop.f32.mrb[0].mxu0
    %v3563 = vpop.f32.mrb[0].mxu0
    %v3564 = vadd.f32 0.0, %v3563
    %v3565 = vpop.f32.mrb[0].mxu0
    %3566 = vmatprep.mubr.bf16.mxu0 %v1233
    %3567 = vmatmul.mubr.bf16.gmra.mrb[0].mxu0 %v1232
    %v3568 = vpop.f32.mrb[0].mxu0
    %v3569 = vadd.f32 0.0, %v3568
    %v3570 = vpop.f32.mrb[0].mxu0
    %v3571 = vpop.f32.mrb[0].mxu0
    %v3572 = vadd.f32 0.0, %v3571
    %v3573 = vpop.f32.mrb[0].mxu0
    %3574 = vmatprep.mubr.bf16.mxu0 %v1237
    %3575 = vmatmul.mubr.bf16.gmra.mrb[0].mxu0 %v1236
    %v3576 = vpop.f32.mrb[0].mxu0
    %v3577 = vadd.f32 0.0, %v3576
    %v3578 = vpop.f32.mrb[0].mxu0
    %v3579 = vpop.f32.mrb[0].mxu0
    %v3580 = vadd.f32 0.0, %v3579
    %v3581 = vpop.f32.mrb[0].mxu0
    %3582 = vmatprep.mubr.bf16.mxu0 %v1241
    %3583 = vmatmul.mubr.bf16.gmra.mrb[0].mxu0 %v1240
    %v3584 = vpop.f32.mrb[0].mxu0
    %v3585 = vadd.f32 0.0, %v3584
    %v3586 = vpop.f32.mrb[0].mxu0
    %v3587 = vpop.f32.mrb[0].mxu0
    %v3588 = vadd.f32 0.0, %v3587
    %v3589 = vpop.f32.mrb[0].mxu0
    %3590 = vmatprep.mubr.bf16.mxu0 %v1245
    %3591 = vmatmul.mubr.bf16.gmra.mrb[0].mxu0 %v1244
    %v3592 = vpop.f32.mrb[0].mxu0
    %v3593 = vadd.f32 0.0, %v3592
    %v3594 = vpop.f32.mrb[0].mxu0
    %v3595 = vpop.f32.mrb[0].mxu0
    %v3596 = vadd.f32 0.0, %v3595
    %v3597 = vpop.f32.mrb[0].mxu0
    %3598 = vmatprep.mubr.bf16.mxu0 %v1249
    %3599 = vmatmul.mubr.bf16.gmra.mrb[0].mxu0 %v1248
    %v3600 = vpop.f32.mrb[0].mxu0
    %v3601 = vadd.f32 0.0, %v3600
    %v3602 = vpop.f32.mrb[0].mxu0
    %v3603 = vpop.f32.mrb[0].mxu0
    %v3604 = vadd.f32 0.0, %v3603
    %v3605 = vpop.f32.mrb[0].mxu0
    %3606 = vmatprep.mubr.bf16.mxu0 %v1253
    %3607 = vmatmul.mubr.bf16.gmra.mrb[0].mxu0 %v1252
    %v3608 = vpop.f32.mrb[0].mxu0
    %v3609 = vadd.f32 0.0, %v3608
    %v3610 = vpop.f32.mrb[0].mxu0
    %v3611 = vpop.f32.mrb[0].mxu0
    %v3612 = vadd.f32 0.0, %v3611
    %v3613 = vpop.f32.mrb[0].mxu0
    %3614 = vmatprep.mubr.bf16.mxu0 %v1257
    %3615 = vmatmul.mubr.bf16.gmra.mrb[0].mxu0 %v1256
    %v3616 = vpop.f32.mrb[0].mxu0
    %v3617 = vadd.f32 0.0, %v3616
    %v3618 = vpop.f32.mrb[0].mxu0
    %v3619 = vpop.f32.mrb[0].mxu0
    %v3620 = vadd.f32 0.0, %v3619
    %v3621 = vpop.f32.mrb[0].mxu0
    %3622 = vmatprep.mubr.bf16.mxu0 %v1261
    %3623 = vmatmul.mubr.bf16.gmra.mrb[0].mxu0 %v1260
    %v3624 = vpop.f32.mrb[0].mxu0
    %v3625 = vadd.f32 0.0, %v3624
    %v3626 = vpop.f32.mrb[0].mxu0
    %v3627 = vpop.f32.mrb[0].mxu0
    %v3628 = vadd.f32 0.0, %v3627
    %v3629 = vpop.f32.mrb[0].mxu0
    %3630 = vmatprep.mubr.bf16.mxu0 %v1265
    %3631 = vmatmul.mubr.bf16.gmra.mrb[0].mxu0 %v1264
    %v3632 = vpop.f32.mrb[0].mxu0
    %v3633 = vadd.f32 0.0, %v3632
    %v3634 = vpop.f32.mrb[0].mxu0
    %v3635 = vpop.f32.mrb[0].mxu0
    %v3636 = vadd.f32 0.0, %v3635
    %v3637 = vpop.f32.mrb[0].mxu0
    %3638 = vmatprep.mubr.bf16.mxu0 %v1269
    %3639 = vmatmul.mubr.bf16.gmra.mrb[0].mxu0 %v1268
    %v3640 = vpop.f32.mrb[0].mxu0
    %v3641 = vadd.f32 0.0, %v3640
    %v3642 = vpop.f32.mrb[0].mxu0
    %v3643 = vpop.f32.mrb[0].mxu0
    %v3644 = vadd.f32 0.0, %v3643
    %v3645 = vpop.f32.mrb[0].mxu0
    %3646 = vmatprep.mubr.bf16.mxu0 %v1273
    %3647 = vmatmul.mubr.bf16.gmra.mrb[0].mxu0 %v1272
    %v3648 = vpop.f32.mrb[0].mxu0
    %v3649 = vadd.f32 0.0, %v3648
    %v3650 = vpop.f32.mrb[0].mxu0
    %v3651 = vpop.f32.mrb[0].mxu0
    %v3652 = vadd.f32 0.0, %v3651
    %v3653 = vpop.f32.mrb[0].mxu0
    %3654 = vmatprep.mubr.bf16.mxu0 %v1277
    %3655 = vmatmul.mubr.bf16.gmra.mrb[0].mxu0 %v1276
    %v3656 = vpop.f32.mrb[0].mxu0
    %v3657 = vadd.f32 0.0, %v3656
    %v3658 = vpop.f32.mrb[0].mxu0
    %v3659 = vpop.f32.mrb[0].mxu0
    %v3660 = vadd.f32 0.0, %v3659
    %v3661 = vpop.f32.mrb[0].mxu0
    %3662 = vmatprep.mubr.bf16.mxu0 %v1281
    %3663 = vmatmul.mubr.bf16.gmra.mrb[0].mxu0 %v1280
    %v3664 = vpop.f32.mrb[0].mxu0
    %v3665 = vadd.f32 0.0, %v3664
    %v3666 = vpop.f32.mrb[0].mxu0
    %v3667 = vpop.f32.mrb[0].mxu0
    %v3668 = vadd.f32 0.0, %v3667
    %v3669 = vpop.f32.mrb[0].mxu0
    %3670 = vmatprep.mubr.bf16.mxu0 %v1285
    %3671 = vmatmul.mubr.bf16.gmra.mrb[0].mxu0 %v1284
    %v3672 = vpop.f32.mrb[0].mxu0
    %v3673 = vadd.f32 0.0, %v3672
    %v3674 = vpop.f32.mrb[0].mxu0
    %v3675 = vpop.f32.mrb[0].mxu0
    %v3676 = vadd.f32 0.0, %v3675
    %v3677 = vpop.f32.mrb[0].mxu0
    %3678 = vmatprep.mubr.bf16.mxu0 %v1289
    %3679 = vmatmul.mubr.bf16.gmra.mrb[0].mxu0 %v1288
    %v3680 = vpop.f32.mrb[0].mxu0
    %v3681 = vadd.f32 0.0, %v3680
    %v3682 = vpop.f32.mrb[0].mxu0
    %v3683 = vpop.f32.mrb[0].mxu0
    %v3684 = vadd.f32 0.0, %v3683
    %v3685 = vpop.f32.mrb[0].mxu0
    %3686 = vmatprep.mubr.bf16.mxu0 %v1293
    %3687 = vmatmul.mubr.bf16.gmra.mrb[0].mxu0 %v1292
    %v3688 = vpop.f32.mrb[0].mxu0
    %v3689 = vadd.f32 0.0, %v3688
    %v3690 = vpop.f32.mrb[0].mxu0
    %v3691 = vpop.f32.mrb[0].mxu0
    %v3692 = vadd.f32 0.0, %v3691
    %v3693 = vpop.f32.mrb[0].mxu0
    %3694 = vmatprep.mubr.bf16.mxu0 %v1297
    %3695 = vmatmul.mubr.bf16.gmra.mrb[0].mxu0 %v1296
    %v3696 = vpop.f32.mrb[0].mxu0
    %v3697 = vadd.f32 0.0, %v3696
    %v3698 = vpop.f32.mrb[0].mxu0
    %v3699 = vpop.f32.mrb[0].mxu0
    %v3700 = vadd.f32 0.0, %v3699
    %v3701 = vpop.f32.mrb[0].mxu0
    %3702 = vmatprep.mubr.bf16.mxu0 %v1301
    %3703 = vmatmul.mubr.bf16.gmra.mrb[0].mxu0 %v1300
    %v3704 = vpop.f32.mrb[0].mxu0
    %v3705 = vadd.f32 0.0, %v3704
    %v3706 = vpop.f32.mrb[0].mxu0
    %v3707 = vpop.f32.mrb[0].mxu0
    %v3708 = vadd.f32 0.0, %v3707
    %v3709 = vpop.f32.mrb[0].mxu0
    %3710 = vmatprep.mubr.bf16.mxu0 %v1305
    %3711 = vmatmul.mubr.bf16.gmra.mrb[0].mxu0 %v1304
    %v3712 = vpop.f32.mrb[0].mxu0
    %v3713 = vadd.f32 0.0, %v3712
    %v3714 = vpop.f32.mrb[0].mxu0
    %v3715 = vpop.f32.mrb[0].mxu0
    %v3716 = vadd.f32 0.0, %v3715
    %v3717 = vpop.f32.mrb[0].mxu0
    %3718 = vmatprep.mubr.bf16.mxu0 %v1309
    %3719 = vmatmul.mubr.bf16.gmra.mrb[0].mxu0 %v1308
    %v3720 = vpop.f32.mrb[0].mxu0
    %v3721 = vadd.f32 0.0, %v3720
    %v3722 = vpop.f32.mrb[0].mxu0
    %v3723 = vpop.f32.mrb[0].mxu0
    %v3724 = vadd.f32 0.0, %v3723
    %v3725 = vpop.f32.mrb[0].mxu0
    %3726 = vmatprep.mubr.bf16.mxu0 %v1313
    %3727 = vmatmul.mubr.bf16.gmra.mrb[0].mxu0 %v1312
    %v3728 = vpop.f32.mrb[0].mxu0
    %v3729 = vadd.f32 0.0, %v3728
    %v3730 = vpop.f32.mrb[0].mxu0
    %v3731 = vpop.f32.mrb[0].mxu0
    %v3732 = vadd.f32 0.0, %v3731
    %v3733 = vpop.f32.mrb[0].mxu0
    %3734 = vmatprep.mubr.bf16.mxu0 %v1317
    %3735 = vmatmul.mubr.bf16.gmra.mrb[0].mxu0 %v1316
    %v3736 = vpop.f32.mrb[0].mxu0
    %v3737 = vadd.f32 0.0, %v3736
    %v3738 = vpop.f32.mrb[0].mxu0
    %v3739 = vpop.f32.mrb[0].mxu0
    %v3740 = vadd.f32 0.0, %v3739
    %v3741 = vpop.f32.mrb[0].mxu0
    %3742 = vmatprep.mubr.bf16.mxu0 %v1321
    %3743 = vmatmul.mubr.bf16.gmra.mrb[0].mxu0 %v1320
    %v3744 = vpop.f32.mrb[0].mxu0
    %v3745 = vadd.f32 0.0, %v3744
    %v3746 = vpop.f32.mrb[0].mxu0
    %v3747 = vpop.f32.mrb[0].mxu0
    %v3748 = vadd.f32 0.0, %v3747
    %v3749 = vpop.f32.mrb[0].mxu0
    %3750 = vmatprep.mubr.bf16.mxu0 %v1325
    %3751 = vmatmul.mubr.bf16.gmra.mrb[0].mxu0 %v1324
    %v3752 = vpop.f32.mrb[0].mxu0
    %v3753 = vadd.f32 0.0, %v3752
    %v3754 = vpop.f32.mrb[0].mxu0
    %v3755 = vpop.f32.mrb[0].mxu0
    %v3756 = vadd.f32 0.0, %v3755
    %v3757 = vpop.f32.mrb[0].mxu0
    %3758 = vmatprep.mubr.bf16.mxu0 %v1329
    %3759 = vmatmul.mubr.bf16.gmra.mrb[0].mxu0 %v1328
    %v3760 = vpop.f32.mrb[0].mxu0
    %v3761 = vadd.f32 0.0, %v3760
    %v3762 = vpop.f32.mrb[0].mxu0
    %v3763 = vpop.f32.mrb[0].mxu0
    %v3764 = vadd.f32 0.0, %v3763
    %v3765 = vpop.f32.mrb[0].mxu0
    %3766 = vmatprep.mubr.bf16.mxu0 %v1333
    %3767 = vmatmul.mubr.bf16.gmra.mrb[0].mxu0 %v1332
    %v3768 = vpop.f32.mrb[0].mxu0
    %v3769 = vadd.f32 0.0, %v3768
    %v3770 = vpop.f32.mrb[0].mxu0
    %v3771 = vpop.f32.mrb[0].mxu0
    %v3772 = vadd.f32 0.0, %v3771
    %v3773 = vpop.f32.mrb[0].mxu0
    %3774 = vdwg.mxu0
    %3775 = vmatprep.subr.bf16.mxu0 0
    %3776 = vmatpush1.bf16.msra.mxu0 %v3470
    %3777 = vmatprep.subr.bf16.mxu0 0
    %3778 = vmatpush1.bf16.msra.mxu0 %v3471
    %3779 = vmatprep.subr.bf16.mxu0 0
    %3780 = vmatpush1.bf16.msra.mxu0 %v3472
    %3781 = vmatprep.subr.bf16.mxu0 0
    %3782 = vmatpush1.bf16.msra.mxu0 %v3473
    %3783 = vmatprep.subr.bf16.mxu0 0
    %3784 = vmatpush1.bf16.msra.mxu0 %v3474
    %3785 = vmatprep.subr.bf16.mxu0 0
    %3786 = vmatpush1.bf16.msra.mxu0 %v3475
    %3787 = vmatprep.subr.bf16.mxu0 0
    %3788 = vmatpush1.bf16.msra.mxu0 %v3476
    %3789 = vmatprep.subr.bf16.mxu0 0
    %3790 = vmatpush1.bf16.msra.mxu0 %v3477
    %3791 = vmatprep.subr.bf16.mxu0 0
    %3792 = vmatpush1.bf16.msra.mxu0 %v3478
    %3793 = vmatprep.subr.bf16.mxu0 0
    %3794 = vmatpush1.bf16.msra.mxu0 %v3479
    %3795 = vmatprep.subr.bf16.mxu0 0
    %3796 = vmatpush1.bf16.msra.mxu0 %v3480
    %3797 = vmatprep.subr.bf16.mxu0 0
    %3798 = vmatpush1.bf16.msra.mxu0 %v3481
    %3799 = vmatprep.subr.bf16.mxu0 0
    %3800 = vmatpush1.bf16.msra.mxu0 %v3482
    %3801 = vmatprep.subr.bf16.mxu0 0
    %3802 = vmatpush1.bf16.msra.mxu0 %v3483
    %3803 = vmatprep.subr.bf16.mxu0 0
    %3804 = vmatpush1.bf16.msra.mxu0 %v3484
    %3805 = vmatprep.subr.bf16.mxu0 0
    %3806 = vmatpush1.bf16.msra.mxu0 %v3485
    %3807 = vmatprep.mubr.bf16.mxu0 %v1211
    %3808 = vmatmul.mubr.bf16.gmra.mrb[0].mxu0 %v1210
    %v3809 = vpop.f32.mrb[0].mxu0
    %v3810 = vadd.f32 %v3521, %v3809
    %v3811 = vpop.f32.mrb[0].mxu0
    %v3812 = vpop.f32.mrb[0].mxu0
    %v3813 = vadd.f32 %v3524, %v3812
    %v3814 = vpop.f32.mrb[0].mxu0
    %3815 = vmatprep.mubr.bf16.mxu0 %v1215
    %3816 = vmatmul.mubr.bf16.gmra.mrb[0].mxu0 %v1214
    %v3817 = vpop.f32.mrb[0].mxu0
    %v3818 = vadd.f32 %v3529, %v3817
    %v3819 = vpop.f32.mrb[0].mxu0
    %v3820 = vpop.f32.mrb[0].mxu0
    %v3821 = vadd.f32 %v3532, %v3820
    %v3822 = vpop.f32.mrb[0].mxu0
    %3823 = vmatprep.mubr.bf16.mxu0 %v1219
    %3824 = vmatmul.mubr.bf16.gmra.mrb[0].mxu0 %v1218
    %v3825 = vpop.f32.mrb[0].mxu0
    %v3826 = vadd.f32 %v3537, %v3825
    %v3827 = vpop.f32.mrb[0].mxu0
    %v3828 = vpop.f32.mrb[0].mxu0
    %v3829 = vadd.f32 %v3540, %v3828
    %v3830 = vpop.f32.mrb[0].mxu0
    %3831 = vmatprep.mubr.bf16.mxu0 %v1223
    %3832 = vmatmul.mubr.bf16.gmra.mrb[0].mxu0 %v1222
    %v3833 = vpop.f32.mrb[0].mxu0
    %v3834 = vadd.f32 %v3545, %v3833
    %v3835 = vpop.f32.mrb[0].mxu0
    %v3836 = vpop.f32.mrb[0].mxu0
    %v3837 = vadd.f32 %v3548, %v3836
    %v3838 = vpop.f32.mrb[0].mxu0
    %3839 = vmatprep.mubr.bf16.mxu0 %v1227
    %3840 = vmatmul.mubr.bf16.gmra.mrb[0].mxu0 %v1226
    %v3841 = vpop.f32.mrb[0].mxu0
    %v3842 = vadd.f32 %v3553, %v3841
    %v3843 = vpop.f32.mrb[0].mxu0
    %v3844 = vpop.f32.mrb[0].mxu0
    %v3845 = vadd.f32 %v3556, %v3844
    %v3846 = vpop.f32.mrb[0].mxu0
    %3847 = vmatprep.mubr.bf16.mxu0 %v1231
    %3848 = vmatmul.mubr.bf16.gmra.mrb[0].mxu0 %v1230
    %v3849 = vpop.f32.mrb[0].mxu0
    %v3850 = vadd.f32 %v3561, %v3849
    %v3851 = vpop.f32.mrb[0].mxu0
    %v3852 = vpop.f32.mrb[0].mxu0
    %v3853 = vadd.f32 %v3564, %v3852
    %v3854 = vpop.f32.mrb[0].mxu0
    %3855 = vmatprep.mubr.bf16.mxu0 %v1235
    %3856 = vmatmul.mubr.bf16.gmra.mrb[0].mxu0 %v1234
    %v3857 = vpop.f32.mrb[0].mxu0
    %v3858 = vadd.f32 %v3569, %v3857
    %v3859 = vpop.f32.mrb[0].mxu0
    %v3860 = vpop.f32.mrb[0].mxu0
    %v3861 = vadd.f32 %v3572, %v3860
    %v3862 = vpop.f32.mrb[0].mxu0
    %3863 = vmatprep.mubr.bf16.mxu0 %v1239
    %3864 = vmatmul.mubr.bf16.gmra.mrb[0].mxu0 %v1238
    %v3865 = vpop.f32.mrb[0].mxu0
    %v3866 = vadd.f32 %v3577, %v3865
    %v3867 = vpop.f32.mrb[0].mxu0
    %v3868 = vpop.f32.mrb[0].mxu0
    %v3869 = vadd.f32 %v3580, %v3868
    %v3870 = vpop.f32.mrb[0].mxu0
    %3871 = vmatprep.mubr.bf16.mxu0 %v1243
    %3872 = vmatmul.mubr.bf16.gmra.mrb[0].mxu0 %v1242
    %v3873 = vpop.f32.mrb[0].mxu0
    %v3874 = vadd.f32 %v3585, %v3873
    %v3875 = vpop.f32.mrb[0].mxu0
    %v3876 = vpop.f32.mrb[0].mxu0
    %v3877 = vadd.f32 %v3588, %v3876
    %v3878 = vpop.f32.mrb[0].mxu0
    %3879 = vmatprep.mubr.bf16.mxu0 %v1247
    %3880 = vmatmul.mubr.bf16.gmra.mrb[0].mxu0 %v1246
    %v3881 = vpop.f32.mrb[0].mxu0
    %v3882 = vadd.f32 %v3593, %v3881
    %v3883 = vpop.f32.mrb[0].mxu0
    %v3884 = vpop.f32.mrb[0].mxu0
    %v3885 = vadd.f32 %v3596, %v3884
    %v3886 = vpop.f32.mrb[0].mxu0
    %3887 = vmatprep.mubr.bf16.mxu0 %v1251
    %3888 = vmatmul.mubr.bf16.gmra.mrb[0].mxu0 %v1250
    %v3889 = vpop.f32.mrb[0].mxu0
    %v3890 = vadd.f32 %v3601, %v3889
    %v3891 = vpop.f32.mrb[0].mxu0
    %v3892 = vpop.f32.mrb[0].mxu0
    %v3893 = vadd.f32 %v3604, %v3892
    %v3894 = vpop.f32.mrb[0].mxu0
    %3895 = vmatprep.mubr.bf16.mxu0 %v1255
    %3896 = vmatmul.mubr.bf16.gmra.mrb[0].mxu0 %v1254
    %v3897 = vpop.f32.mrb[0].mxu0
    %v3898 = vadd.f32 %v3609, %v3897
    %v3899 = vpop.f32.mrb[0].mxu0
    %v3900 = vpop.f32.mrb[0].mxu0
    %v3901 = vadd.f32 %v3612, %v3900
    %v3902 = vpop.f32.mrb[0].mxu0
    %3903 = vmatprep.mubr.bf16.mxu0 %v1259
    %3904 = vmatmul.mubr.bf16.gmra.mrb[0].mxu0 %v1258
    %v3905 = vpop.f32.mrb[0].mxu0
    %v3906 = vadd.f32 %v3617, %v3905
    %v3907 = vpop.f32.mrb[0].mxu0
    %v3908 = vpop.f32.mrb[0].mxu0
    %v3909 = vadd.f32 %v3620, %v3908
    %v3910 = vpop.f32.mrb[0].mxu0
    %3911 = vmatprep.mubr.bf16.mxu0 %v1263
    %3912 = vmatmul.mubr.bf16.gmra.mrb[0].mxu0 %v1262
    %v3913 = vpop.f32.mrb[0].mxu0
    %v3914 = vadd.f32 %v3625, %v3913
    %v3915 = vpop.f32.mrb[0].mxu0
    %v3916 = vpop.f32.mrb[0].mxu0
    %v3917 = vadd.f32 %v3628, %v3916
    %v3918 = vpop.f32.mrb[0].mxu0
    %3919 = vmatprep.mubr.bf16.mxu0 %v1267
    %3920 = vmatmul.mubr.bf16.gmra.mrb[0].mxu0 %v1266
    %v3921 = vpop.f32.mrb[0].mxu0
    %v3922 = vadd.f32 %v3633, %v3921
    %v3923 = vpop.f32.mrb[0].mxu0
    %v3924 = vpop.f32.mrb[0].mxu0
    %v3925 = vadd.f32 %v3636, %v3924
    %v3926 = vpop.f32.mrb[0].mxu0
    %3927 = vmatprep.mubr.bf16.mxu0 %v1271
    %3928 = vmatmul.mubr.bf16.gmra.mrb[0].mxu0 %v1270
    %v3929 = vpop.f32.mrb[0].mxu0
    %v3930 = vadd.f32 %v3641, %v3929
    %v3931 = vpop.f32.mrb[0].mxu0
    %v3932 = vpop.f32.mrb[0].mxu0
    %v3933 = vadd.f32 %v3644, %v3932
    %v3934 = vpop.f32.mrb[0].mxu0
    %3935 = vmatprep.mubr.bf16.mxu0 %v1275
    %3936 = vmatmul.mubr.bf16.gmra.mrb[0].mxu0 %v1274
    %v3937 = vpop.f32.mrb[0].mxu0
    %v3938 = vadd.f32 %v3649, %v3937
    %v3939 = vpop.f32.mrb[0].mxu0
    %v3940 = vpop.f32.mrb[0].mxu0
    %v3941 = vadd.f32 %v3652, %v3940
    %v3942 = vpop.f32.mrb[0].mxu0
    %3943 = vmatprep.mubr.bf16.mxu0 %v1279
    %3944 = vmatmul.mubr.bf16.gmra.mrb[0].mxu0 %v1278
    %v3945 = vpop.f32.mrb[0].mxu0
    %v3946 = vadd.f32 %v3657, %v3945
    %v3947 = vpop.f32.mrb[0].mxu0
    %v3948 = vpop.f32.mrb[0].mxu0
    %v3949 = vadd.f32 %v3660, %v3948
    %v3950 = vpop.f32.mrb[0].mxu0
    %3951 = vmatprep.mubr.bf16.mxu0 %v1283
    %3952 = vmatmul.mubr.bf16.gmra.mrb[0].mxu0 %v1282
    %v3953 = vpop.f32.mrb[0].mxu0
    %v3954 = vadd.f32 %v3665, %v3953
    %v3955 = vpop.f32.mrb[0].mxu0
    %v3956 = vpop.f32.mrb[0].mxu0
    %v3957 = vadd.f32 %v3668, %v3956
    %v3958 = vpop.f32.mrb[0].mxu0
    %3959 = vmatprep.mubr.bf16.mxu0 %v1287
    %3960 = vmatmul.mubr.bf16.gmra.mrb[0].mxu0 %v1286
    %v3961 = vpop.f32.mrb[0].mxu0
    %v3962 = vadd.f32 %v3673, %v3961
    %v3963 = vpop.f32.mrb[0].mxu0
    %v3964 = vpop.f32.mrb[0].mxu0
    %v3965 = vadd.f32 %v3676, %v3964
    %v3966 = vpop.f32.mrb[0].mxu0
    %3967 = vmatprep.mubr.bf16.mxu0 %v1291
    %3968 = vmatmul.mubr.bf16.gmra.mrb[0].mxu0 %v1290
    %v3969 = vpop.f32.mrb[0].mxu0
    %v3970 = vadd.f32 %v3681, %v3969
    %v3971 = vpop.f32.mrb[0].mxu0
    %v3972 = vpop.f32.mrb[0].mxu0
    %v3973 = vadd.f32 %v3684, %v3972
    %v3974 = vpop.f32.mrb[0].mxu0
    %3975 = vmatprep.mubr.bf16.mxu0 %v1295
    %3976 = vmatmul.mubr.bf16.gmra.mrb[0].mxu0 %v1294
    %v3977 = vpop.f32.mrb[0].mxu0
    %v3978 = vadd.f32 %v3689, %v3977
    %v3979 = vpop.f32.mrb[0].mxu0
    %v3980 = vpop.f32.mrb[0].mxu0
    %v3981 = vadd.f32 %v3692, %v3980
    %v3982 = vpop.f32.mrb[0].mxu0
    %3983 = vmatprep.mubr.bf16.mxu0 %v1299
    %3984 = vmatmul.mubr.bf16.gmra.mrb[0].mxu0 %v1298
    %v3985 = vpop.f32.mrb[0].mxu0
    %v3986 = vadd.f32 %v3697, %v3985
    %v3987 = vpop.f32.mrb[0].mxu0
    %v3988 = vpop.f32.mrb[0].mxu0
    %v3989 = vadd.f32 %v3700, %v3988
    %v3990 = vpop.f32.mrb[0].mxu0
    %3991 = vmatprep.mubr.bf16.mxu0 %v1303
    %3992 = vmatmul.mubr.bf16.gmra.mrb[0].mxu0 %v1302
    %v3993 = vpop.f32.mrb[0].mxu0
    %v3994 = vadd.f32 %v3705, %v3993
    %v3995 = vpop.f32.mrb[0].mxu0
    %v3996 = vpop.f32.mrb[0].mxu0
    %v3997 = vadd.f32 %v3708, %v3996
    %v3998 = vpop.f32.mrb[0].mxu0
    %3999 = vmatprep.mubr.bf16.mxu0 %v1307
    %4000 = vmatmul.mubr.bf16.gmra.mrb[0].mxu0 %v1306
    %v4001 = vpop.f32.mrb[0].mxu0
    %v4002 = vadd.f32 %v3713, %v4001
    %v4003 = vpop.f32.mrb[0].mxu0
    %v4004 = vpop.f32.mrb[0].mxu0
    %v4005 = vadd.f32 %v3716, %v4004
    %v4006 = vpop.f32.mrb[0].mxu0
    %4007 = vmatprep.mubr.bf16.mxu0 %v1311
    %4008 = vmatmul.mubr.bf16.gmra.mrb[0].mxu0 %v1310
    %v4009 = vpop.f32.mrb[0].mxu0
    %v4010 = vadd.f32 %v3721, %v4009
    %v4011 = vpop.f32.mrb[0].mxu0
    %v4012 = vpop.f32.mrb[0].mxu0
    %v4013 = vadd.f32 %v3724, %v4012
    %v4014 = vpop.f32.mrb[0].mxu0
    %4015 = vmatprep.mubr.bf16.mxu0 %v1315
    %4016 = vmatmul.mubr.bf16.gmra.mrb[0].mxu0 %v1314
    %v4017 = vpop.f32.mrb[0].mxu0
    %v4018 = vadd.f32 %v3729, %v4017
    %v4019 = vpop.f32.mrb[0].mxu0
    %v4020 = vpop.f32.mrb[0].mxu0
    %v4021 = vadd.f32 %v3732, %v4020
    %v4022 = vpop.f32.mrb[0].mxu0
    %4023 = vmatprep.mubr.bf16.mxu0 %v1319
    %4024 = vmatmul.mubr.bf16.gmra.mrb[0].mxu0 %v1318
    %v4025 = vpop.f32.mrb[0].mxu0
    %v4026 = vadd.f32 %v3737, %v4025
    %v4027 = vpop.f32.mrb[0].mxu0
    %v4028 = vpop.f32.mrb[0].mxu0
    %v4029 = vadd.f32 %v3740, %v4028
    %v4030 = vpop.f32.mrb[0].mxu0
    %4031 = vmatprep.mubr.bf16.mxu0 %v1323
    %4032 = vmatmul.mubr.bf16.gmra.mrb[0].mxu0 %v1322
    %v4033 = vpop.f32.mrb[0].mxu0
    %v4034 = vadd.f32 %v3745, %v4033
    %v4035 = vpop.f32.mrb[0].mxu0
    %v4036 = vpop.f32.mrb[0].mxu0
    %v4037 = vadd.f32 %v3748, %v4036
    %v4038 = vpop.f32.mrb[0].mxu0
    %4039 = vmatprep.mubr.bf16.mxu0 %v1327
    %4040 = vmatmul.mubr.bf16.gmra.mrb[0].mxu0 %v1326
    %v4041 = vpop.f32.mrb[0].mxu0
    %v4042 = vadd.f32 %v3753, %v4041
    %v4043 = vpop.f32.mrb[0].mxu0
    %v4044 = vpop.f32.mrb[0].mxu0
    %v4045 = vadd.f32 %v3756, %v4044
    %v4046 = vpop.f32.mrb[0].mxu0
    %4047 = vmatprep.mubr.bf16.mxu0 %v1331
    %4048 = vmatmul.mubr.bf16.gmra.mrb[0].mxu0 %v1330
    %v4049 = vpop.f32.mrb[0].mxu0
    %v4050 = vadd.f32 %v3761, %v4049
    %v4051 = vpop.f32.mrb[0].mxu0
    %v4052 = vpop.f32.mrb[0].mxu0
    %v4053 = vadd.f32 %v3764, %v4052
    %v4054 = vpop.f32.mrb[0].mxu0
    %4055 = vmatprep.mubr.bf16.mxu0 %v1335
    %4056 = vmatmul.mubr.bf16.gmra.mrb[0].mxu0 %v1334
    %v4057 = vpop.f32.mrb[0].mxu0
    %v4058 = vadd.f32 %v3769, %v4057
    %v4059 = vpop.f32.mrb[0].mxu0
    %v4060 = vpop.f32.mrb[0].mxu0
    %v4061 = vadd.f32 %v3772, %v4060
    %v4062 = vpop.f32.mrb[0].mxu0
    %4063 = vdwg.mxu0
    %v4064 = vld [vmem:[%s5] sm:$0xff]
    %v4065 = vld [vmem:[%s5 + $0x8] sm:$0xff]
    %v4066 = vld [vmem:[%s5 + $0x10] sm:$0xff]
    %v4067 = vld [vmem:[%s5 + $0x18] sm:$0xff]
    %v4068 = vld [vmem:[%s5 + $0x20] sm:$0xff]
    %v4069 = vld [vmem:[%s5 + $0x28] sm:$0xff]
    %v4070 = vld [vmem:[%s5 + $0x30] sm:$0xff]
    %v4071 = vld [vmem:[%s5 + $0x38] sm:$0xff]
    %v4072 = vld [vmem:[%s5 + $0x40] sm:$0xff]
    %v4073 = vld [vmem:[%s5 + $0x48] sm:$0xff]
    %v4074 = vld [vmem:[%s5 + $0x50] sm:$0xff]
    %v4075 = vld [vmem:[%s5 + $0x58] sm:$0xff]
    %v4076 = vld [vmem:[%s5 + $0x60] sm:$0xff]
    %v4077 = vld [vmem:[%s5 + $0x68] sm:$0xff]
    %v4078 = vld [vmem:[%s5 + $0x70] sm:$0xff]
    %v4079 = vld [vmem:[%s5 + $0x78] sm:$0xff]
    %v4080 = vld [vmem:[%s5 + $0x80] sm:$0xff]
    %v4081 = vld [vmem:[%s5 + $0x88] sm:$0xff]
    %v4082 = vld [vmem:[%s5 + $0x90] sm:$0xff]
    %v4083 = vld [vmem:[%s5 + $0x98] sm:$0xff]
    %v4084 = vld [vmem:[%s5 + $0xa0] sm:$0xff]
    %v4085 = vld [vmem:[%s5 + $0xa8] sm:$0xff]
    %v4086 = vld [vmem:[%s5 + $0xb0] sm:$0xff]
    %v4087 = vld [vmem:[%s5 + $0xb8] sm:$0xff]
    %v4088 = vld [vmem:[%s5 + $0xc0] sm:$0xff]
    %v4089 = vld [vmem:[%s5 + $0xc8] sm:$0xff]
    %v4090 = vld [vmem:[%s5 + $0xd0] sm:$0xff]
    %v4091 = vld [vmem:[%s5 + $0xd8] sm:$0xff]
    %v4092 = vld [vmem:[%s5 + $0xe0] sm:$0xff]
    %v4093 = vld [vmem:[%s5 + $0xe8] sm:$0xff]
    %v4094 = vld [vmem:[%s5 + $0xf0] sm:$0xff]
    %v4095 = vld [vmem:[%s5 + $0xf8] sm:$0xff]
    %v4096 = vld [vmem:[%s5 + $0x100] sm:$0xff]
    %v4097 = vld [vmem:[%s5 + $0x108] sm:$0xff]
    %v4098 = vld [vmem:[%s5 + $0x110] sm:$0xff]
    %v4099 = vld [vmem:[%s5 + $0x118] sm:$0xff]
    %v4100 = vld [vmem:[%s5 + $0x120] sm:$0xff]
    %v4101 = vld [vmem:[%s5 + $0x128] sm:$0xff]
    %v4102 = vld [vmem:[%s5 + $0x130] sm:$0xff]
    %v4103 = vld [vmem:[%s5 + $0x138] sm:$0xff]
    %v4104 = vld [vmem:[%s5 + $0x140] sm:$0xff]
    %v4105 = vld [vmem:[%s5 + $0x148] sm:$0xff]
    %v4106 = vld [vmem:[%s5 + $0x150] sm:$0xff]
    %v4107 = vld [vmem:[%s5 + $0x158] sm:$0xff]
    %v4108 = vld [vmem:[%s5 + $0x160] sm:$0xff]
    %v4109 = vld [vmem:[%s5 + $0x168] sm:$0xff]
    %v4110 = vld [vmem:[%s5 + $0x170] sm:$0xff]
    %v4111 = vld [vmem:[%s5 + $0x178] sm:$0xff]
    %v4112 = vld [vmem:[%s5 + $0x180] sm:$0xff]
    %v4113 = vld [vmem:[%s5 + $0x188] sm:$0xff]
    %v4114 = vld [vmem:[%s5 + $0x190] sm:$0xff]
    %v4115 = vld [vmem:[%s5 + $0x198] sm:$0xff]
    %v4116 = vld [vmem:[%s5 + $0x1a0] sm:$0xff]
    %v4117 = vld [vmem:[%s5 + $0x1a8] sm:$0xff]
    %v4118 = vld [vmem:[%s5 + $0x1b0] sm:$0xff]
    %v4119 = vld [vmem:[%s5 + $0x1b8] sm:$0xff]
    %v4120 = vld [vmem:[%s5 + $0x1c0] sm:$0xff]
    %v4121 = vld [vmem:[%s5 + $0x1c8] sm:$0xff]
    %v4122 = vld [vmem:[%s5 + $0x1d0] sm:$0xff]
    %v4123 = vld [vmem:[%s5 + $0x1d8] sm:$0xff]
    %v4124 = vld [vmem:[%s5 + $0x1e0] sm:$0xff]
    %v4125 = vld [vmem:[%s5 + $0x1e8] sm:$0xff]
    %v4126 = vld [vmem:[%s5 + $0x1f0] sm:$0xff]
    %v4127 = vld [vmem:[%s5 + $0x1f8] sm:$0xff]
    %v4128 = vmul.f32 %v3810, 1.442695
    %v4129 = vpow.pop %v4128
    %v4130 = vmul.f32 %v3813, 1.442695
    %v4131 = vpow.pop %v4130
    %v4132 = vmul.f32 %v3818, 1.442695
    %v4133 = vpow.pop %v4132
    %v4134 = vmul.f32 %v3821, 1.442695
    %v4135 = vpow.pop %v4134
    %v4136 = vmul.f32 %v3826, 1.442695
    %v4137 = vpow.pop %v4136
    %v4138 = vmul.f32 %v3829, 1.442695
    %v4139 = vpow.pop %v4138
    %v4140 = vmul.f32 %v3834, 1.442695
    %v4141 = vpow.pop %v4140
    %v4142 = vmul.f32 %v3837, 1.442695
    %v4143 = vpow.pop %v4142
    %v4144 = vmul.f32 %v3842, 1.442695
    %v4145 = vpow.pop %v4144
    %v4146 = vmul.f32 %v3845, 1.442695
    %v4147 = vpow.pop %v4146
    %v4148 = vmul.f32 %v3850, 1.442695
    %v4149 = vpow.pop %v4148
    %v4150 = vmul.f32 %v3853, 1.442695
    %v4151 = vpow.pop %v4150
    %v4152 = vmul.f32 %v3858, 1.442695
    %v4153 = vpow.pop %v4152
    %v4154 = vmul.f32 %v3861, 1.442695
    %v4155 = vpow.pop %v4154
    %v4156 = vmul.f32 %v3866, 1.442695
    %v4157 = vpow.pop %v4156
    %v4158 = vmul.f32 %v3869, 1.442695
    %v4159 = vpow.pop %v4158
    %v4160 = vmul.f32 %v3874, 1.442695
    %v4161 = vpow.pop %v4160
    %v4162 = vmul.f32 %v3877, 1.442695
    %v4163 = vpow.pop %v4162
    %v4164 = vmul.f32 %v3882, 1.442695
    %v4165 = vpow.pop %v4164
    %v4166 = vmul.f32 %v3885, 1.442695
    %v4167 = vpow.pop %v4166
    %v4168 = vmul.f32 %v3890, 1.442695
    %v4169 = vpow.pop %v4168
    %v4170 = vmul.f32 %v3893, 1.442695
    %v4171 = vpow.pop %v4170
    %v4172 = vmul.f32 %v3898, 1.442695
    %v4173 = vpow.pop %v4172
    %v4174 = vmul.f32 %v3901, 1.442695
    %v4175 = vpow.pop %v4174
    %v4176 = vmul.f32 %v3906, 1.442695
    %v4177 = vpow.pop %v4176
    %v4178 = vmul.f32 %v3909, 1.442695
    %v4179 = vpow.pop %v4178
    %v4180 = vmul.f32 %v3914, 1.442695
    %v4181 = vpow.pop %v4180
    %v4182 = vmul.f32 %v3917, 1.442695
    %v4183 = vpow.pop %v4182
    %v4184 = vmul.f32 %v3922, 1.442695
    %v4185 = vpow.pop %v4184
    %v4186 = vmul.f32 %v3925, 1.442695
    %v4187 = vpow.pop %v4186
    %v4188 = vmul.f32 %v3930, 1.442695
    %v4189 = vpow.pop %v4188
    %v4190 = vmul.f32 %v3933, 1.442695
    %v4191 = vpow.pop %v4190
    %v4192 = vmul.f32 %v3938, 1.442695
    %v4193 = vpow.pop %v4192
    %v4194 = vmul.f32 %v3941, 1.442695
    %v4195 = vpow.pop %v4194
    %v4196 = vmul.f32 %v3946, 1.442695
    %v4197 = vpow.pop %v4196
    %v4198 = vmul.f32 %v3949, 1.442695
    %v4199 = vpow.pop %v4198
    %v4200 = vmul.f32 %v3954, 1.442695
    %v4201 = vpow.pop %v4200
    %v4202 = vmul.f32 %v3957, 1.442695
    %v4203 = vpow.pop %v4202
    %v4204 = vmul.f32 %v3962, 1.442695
    %v4205 = vpow.pop %v4204
    %v4206 = vmul.f32 %v3965, 1.442695
    %v4207 = vpow.pop %v4206
    %v4208 = vmul.f32 %v3970, 1.442695
    %v4209 = vpow.pop %v4208
    %v4210 = vmul.f32 %v3973, 1.442695
    %v4211 = vpow.pop %v4210
    %v4212 = vmul.f32 %v3978, 1.442695
    %v4213 = vpow.pop %v4212
    %v4214 = vmul.f32 %v3981, 1.442695
    %v4215 = vpow.pop %v4214
    %v4216 = vmul.f32 %v3986, 1.442695
    %v4217 = vpow.pop %v4216
    %v4218 = vmul.f32 %v3989, 1.442695
    %v4219 = vpow.pop %v4218
    %v4220 = vmul.f32 %v3994, 1.442695
    %v4221 = vpow.pop %v4220
    %v4222 = vmul.f32 %v3997, 1.442695
    %v4223 = vpow.pop %v4222
    %v4224 = vmul.f32 %v4002, 1.442695
    %v4225 = vpow.pop %v4224
    %v4226 = vmul.f32 %v4005, 1.442695
    %v4227 = vpow.pop %v4226
    %v4228 = vmul.f32 %v4010, 1.442695
    %v4229 = vpow.pop %v4228
    %v4230 = vmul.f32 %v4013, 1.442695
    %v4231 = vpow.pop %v4230
    %v4232 = vmul.f32 %v4018, 1.442695
    %v4233 = vpow.pop %v4232
    %v4234 = vmul.f32 %v4021, 1.442695
    %v4235 = vpow.pop %v4234
    %v4236 = vmul.f32 %v4026, 1.442695
    %v4237 = vpow.pop %v4236
    %v4238 = vmul.f32 %v4029, 1.442695
    %v4239 = vpow.pop %v4238
    %v4240 = vmul.f32 %v4034, 1.442695
    %v4241 = vpow.pop %v4240
    %v4242 = vmul.f32 %v4037, 1.442695
    %v4243 = vpow.pop %v4242
    %v4244 = vmul.f32 %v4042, 1.442695
    %v4245 = vpow.pop %v4244
    %v4246 = vmul.f32 %v4045, 1.442695
    %v4247 = vpow.pop %v4246
    %v4248 = vmul.f32 %v4050, 1.442695
    %v4249 = vpow.pop %v4248
    %v4250 = vmul.f32 %v4053, 1.442695
    %v4251 = vpow.pop %v4250
    %v4252 = vmul.f32 %v4058, 1.442695
    %v4253 = vpow.pop %v4252
    %v4254 = vmul.f32 %v4061, 1.442695
    %v4255 = vpow.pop %v4254
    %v4256 = vmul.f32 %v4064, %v4129
    %v4257 = vmul.f32 %v4065, %v4131
    %v4258 = vmul.f32 %v4066, %v4133
    %v4259 = vmul.f32 %v4067, %v4135
    %v4260 = vmul.f32 %v4068, %v4137
    %v4261 = vmul.f32 %v4069, %v4139
    %v4262 = vmul.f32 %v4070, %v4141
    %v4263 = vmul.f32 %v4071, %v4143
    %v4264 = vmul.f32 %v4072, %v4145
    %v4265 = vmul.f32 %v4073, %v4147
    %v4266 = vmul.f32 %v4074, %v4149
    %v4267 = vmul.f32 %v4075, %v4151
    %v4268 = vmul.f32 %v4076, %v4153
    %v4269 = vmul.f32 %v4077, %v4155
    %v4270 = vmul.f32 %v4078, %v4157
    %v4271 = vmul.f32 %v4079, %v4159
    %v4272 = vmul.f32 %v4080, %v4161
    %v4273 = vmul.f32 %v4081, %v4163
    %v4274 = vmul.f32 %v4082, %v4165
    %v4275 = vmul.f32 %v4083, %v4167
    %v4276 = vmul.f32 %v4084, %v4169
    %v4277 = vmul.f32 %v4085, %v4171
    %v4278 = vmul.f32 %v4086, %v4173
    %v4279 = vmul.f32 %v4087, %v4175
    %v4280 = vmul.f32 %v4088, %v4177
    %v4281 = vmul.f32 %v4089, %v4179
    %v4282 = vmul.f32 %v4090, %v4181
    %v4283 = vmul.f32 %v4091, %v4183
    %v4284 = vmul.f32 %v4092, %v4185
    %v4285 = vmul.f32 %v4093, %v4187
    %v4286 = vmul.f32 %v4094, %v4189
    %v4287 = vmul.f32 %v4095, %v4191
    %v4288 = vmul.f32 %v4096, %v4193
    %v4289 = vmul.f32 %v4097, %v4195
    %v4290 = vmul.f32 %v4098, %v4197
    %v4291 = vmul.f32 %v4099, %v4199
    %v4292 = vmul.f32 %v4100, %v4201
    %v4293 = vmul.f32 %v4101, %v4203
    %v4294 = vmul.f32 %v4102, %v4205
    %v4295 = vmul.f32 %v4103, %v4207
    %v4296 = vmul.f32 %v4104, %v4209
    %v4297 = vmul.f32 %v4105, %v4211
    %v4298 = vmul.f32 %v4106, %v4213
    %v4299 = vmul.f32 %v4107, %v4215
    %v4300 = vmul.f32 %v4108, %v4217
    %v4301 = vmul.f32 %v4109, %v4219
    %v4302 = vmul.f32 %v4110, %v4221
    %v4303 = vmul.f32 %v4111, %v4223
    %v4304 = vmul.f32 %v4112, %v4225
    %v4305 = vmul.f32 %v4113, %v4227
    %v4306 = vmul.f32 %v4114, %v4229
    %v4307 = vmul.f32 %v4115, %v4231
    %v4308 = vmul.f32 %v4116, %v4233
    %v4309 = vmul.f32 %v4117, %v4235
    %v4310 = vmul.f32 %v4118, %v4237
    %v4311 = vmul.f32 %v4119, %v4239
    %v4312 = vmul.f32 %v4120, %v4241
    %v4313 = vmul.f32 %v4121, %v4243
    %v4314 = vmul.f32 %v4122, %v4245
    %v4315 = vmul.f32 %v4123, %v4247
    %v4316 = vmul.f32 %v4124, %v4249
    %v4317 = vmul.f32 %v4125, %v4251
    %v4318 = vmul.f32 %v4126, %v4253
    %v4319 = vmul.f32 %v4127, %v4255
    %v4320 = vadd.f32 %v4256, %v3200
    %v4321 = vadd.f32 %v4257, %v3203
    %v4322 = vadd.f32 %v4258, %v3208
    %v4323 = vadd.f32 %v4259, %v3211
    %v4324 = vadd.f32 %v4260, %v3216
    %v4325 = vadd.f32 %v4261, %v3219
    %v4326 = vadd.f32 %v4262, %v3224
    %v4327 = vadd.f32 %v4263, %v3227
    %v4328 = vadd.f32 %v4264, %v3232
    %v4329 = vadd.f32 %v4265, %v3235
    %v4330 = vadd.f32 %v4266, %v3240
    %v4331 = vadd.f32 %v4267, %v3243
    %v4332 = vadd.f32 %v4268, %v3248
    %v4333 = vadd.f32 %v4269, %v3251
    %v4334 = vadd.f32 %v4270, %v3256
    %v4335 = vadd.f32 %v4271, %v3259
    %v4336 = vadd.f32 %v4272, %v3264
    %v4337 = vadd.f32 %v4273, %v3267
    %v4338 = vadd.f32 %v4274, %v3272
    %v4339 = vadd.f32 %v4275, %v3275
    %v4340 = vadd.f32 %v4276, %v3280
    %v4341 = vadd.f32 %v4277, %v3283
    %v4342 = vadd.f32 %v4278, %v3288
    %v4343 = vadd.f32 %v4279, %v3291
    %v4344 = vadd.f32 %v4280, %v3296
    %v4345 = vadd.f32 %v4281, %v3299
    %v4346 = vadd.f32 %v4282, %v3304
    %v4347 = vadd.f32 %v4283, %v3307
    %v4348 = vadd.f32 %v4284, %v3312
    %v4349 = vadd.f32 %v4285, %v3315
    %v4350 = vadd.f32 %v4286, %v3320
    %v4351 = vadd.f32 %v4287, %v3323
    %v4352 = vadd.f32 %v4288, %v3328
    %v4353 = vadd.f32 %v4289, %v3331
    %v4354 = vadd.f32 %v4290, %v3336
    %v4355 = vadd.f32 %v4291, %v3339
    %v4356 = vadd.f32 %v4292, %v3344
    %v4357 = vadd.f32 %v4293, %v3347
    %v4358 = vadd.f32 %v4294, %v3352
    %v4359 = vadd.f32 %v4295, %v3355
    %v4360 = vadd.f32 %v4296, %v3360
    %v4361 = vadd.f32 %v4297, %v3363
    %v4362 = vadd.f32 %v4298, %v3368
    %v4363 = vadd.f32 %v4299, %v3371
    %v4364 = vadd.f32 %v4300, %v3376
    %v4365 = vadd.f32 %v4301, %v3379
    %v4366 = vadd.f32 %v4302, %v3384
    %v4367 = vadd.f32 %v4303, %v3387
    %v4368 = vadd.f32 %v4304, %v3392
    %v4369 = vadd.f32 %v4305, %v3395
    %v4370 = vadd.f32 %v4306, %v3400
    %v4371 = vadd.f32 %v4307, %v3403
    %v4372 = vadd.f32 %v4308, %v3408
    %v4373 = vadd.f32 %v4309, %v3411
    %v4374 = vadd.f32 %v4310, %v3416
    %v4375 = vadd.f32 %v4311, %v3419
    %v4376 = vadd.f32 %v4312, %v3424
    %v4377 = vadd.f32 %v4313, %v3427
    %v4378 = vadd.f32 %v4314, %v3432
    %v4379 = vadd.f32 %v4315, %v3435
    %v4380 = vadd.f32 %v4316, %v3440
    %v4381 = vadd.f32 %v4317, %v3443
    %v4382 = vadd.f32 %v4318, %v3448
    %v4383 = vadd.f32 %v4319, %v3451
    %v4384 = vpack.c.bf16 %v4321, %v4320
    %v4385 = vpack.c.bf16 %v4323, %v4322
    %v4386 = vpack.c.bf16 %v4325, %v4324
    %v4387 = vpack.c.bf16 %v4327, %v4326
    %v4388 = vpack.c.bf16 %v4329, %v4328
    %v4389 = vpack.c.bf16 %v4331, %v4330
    %v4390 = vpack.c.bf16 %v4333, %v4332
    %v4391 = vpack.c.bf16 %v4335, %v4334
    %v4392 = vpack.c.bf16 %v4337, %v4336
    %v4393 = vpack.c.bf16 %v4339, %v4338
    %v4394 = vpack.c.bf16 %v4341, %v4340
    %v4395 = vpack.c.bf16 %v4343, %v4342
    %v4396 = vpack.c.bf16 %v4345, %v4344
    %v4397 = vpack.c.bf16 %v4347, %v4346
    %v4398 = vpack.c.bf16 %v4349, %v4348
    %v4399 = vpack.c.bf16 %v4351, %v4350
    %v4400 = vpack.c.bf16 %v4353, %v4352
    %v4401 = vpack.c.bf16 %v4355, %v4354
    %v4402 = vpack.c.bf16 %v4357, %v4356
    %v4403 = vpack.c.bf16 %v4359, %v4358
    %v4404 = vpack.c.bf16 %v4361, %v4360
    %v4405 = vpack.c.bf16 %v4363, %v4362
    %v4406 = vpack.c.bf16 %v4365, %v4364
    %v4407 = vpack.c.bf16 %v4367, %v4366
    %v4408 = vpack.c.bf16 %v4369, %v4368
    %v4409 = vpack.c.bf16 %v4371, %v4370
    %v4410 = vpack.c.bf16 %v4373, %v4372
    %v4411 = vpack.c.bf16 %v4375, %v4374
    %v4412 = vpack.c.bf16 %v4377, %v4376
    %v4413 = vpack.c.bf16 %v4379, %v4378
    %v4414 = vpack.c.bf16 %v4381, %v4380
    %v4415 = vpack.c.bf16 %v4383, %v4382
    %v4448 = vunpack.c.l.b16 %v4384
    %v4449 = vunpack.c.h.b16 %v4384
    %v4450 = vunpack.c.l.b16 %v4385
    %v4451 = vunpack.c.h.b16 %v4385
    %v4452 = vunpack.c.l.b16 %v4386
    %v4453 = vunpack.c.h.b16 %v4386
    %v4454 = vunpack.c.l.b16 %v4387
    %v4455 = vunpack.c.h.b16 %v4387
    %v4456 = vunpack.c.l.b16 %v4388
    %v4457 = vunpack.c.h.b16 %v4388
    %v4458 = vunpack.c.l.b16 %v4389
    %v4459 = vunpack.c.h.b16 %v4389
    %v4460 = vunpack.c.l.b16 %v4390
    %v4461 = vunpack.c.h.b16 %v4390
    %v4462 = vunpack.c.l.b16 %v4391
    %v4463 = vunpack.c.h.b16 %v4391
    %v4464 = vunpack.c.l.b16 %v4392
    %v4465 = vunpack.c.h.b16 %v4392
    %v4466 = vunpack.c.l.b16 %v4393
    %v4467 = vunpack.c.h.b16 %v4393
    %v4468 = vunpack.c.l.b16 %v4394
    %v4469 = vunpack.c.h.b16 %v4394
    %v4470 = vunpack.c.l.b16 %v4395
    %v4471 = vunpack.c.h.b16 %v4395
    %v4472 = vunpack.c.l.b16 %v4396
    %v4473 = vunpack.c.h.b16 %v4396
    %v4474 = vunpack.c.l.b16 %v4397
    %v4475 = vunpack.c.h.b16 %v4397
    %v4476 = vunpack.c.l.b16 %v4398
    %v4477 = vunpack.c.h.b16 %v4398
    %v4478 = vunpack.c.l.b16 %v4399
    %v4479 = vunpack.c.h.b16 %v4399
    %v4480 = vunpack.c.l.b16 %v4400
    %v4481 = vunpack.c.h.b16 %v4400
    %v4482 = vunpack.c.l.b16 %v4401
    %v4483 = vunpack.c.h.b16 %v4401
    %v4484 = vunpack.c.l.b16 %v4402
    %v4485 = vunpack.c.h.b16 %v4402
    %v4486 = vunpack.c.l.b16 %v4403
    %v4487 = vunpack.c.h.b16 %v4403
    %v4488 = vunpack.c.l.b16 %v4404
    %v4489 = vunpack.c.h.b16 %v4404
    %v4490 = vunpack.c.l.b16 %v4405
    %v4491 = vunpack.c.h.b16 %v4405
    %v4492 = vunpack.c.l.b16 %v4406
    %v4493 = vunpack.c.h.b16 %v4406
    %v4494 = vunpack.c.l.b16 %v4407
    %v4495 = vunpack.c.h.b16 %v4407
    %v4496 = vunpack.c.l.b16 %v4408
    %v4497 = vunpack.c.h.b16 %v4408
    %v4498 = vunpack.c.l.b16 %v4409
    %v4499 = vunpack.c.h.b16 %v4409
    %v4500 = vunpack.c.l.b16 %v4410
    %v4501 = vunpack.c.h.b16 %v4410
    %v4502 = vunpack.c.l.b16 %v4411
    %v4503 = vunpack.c.h.b16 %v4411
    %v4504 = vunpack.c.l.b16 %v4412
    %v4505 = vunpack.c.h.b16 %v4412
    %v4506 = vunpack.c.l.b16 %v4413
    %v4507 = vunpack.c.h.b16 %v4413
    %v4508 = vunpack.c.l.b16 %v4414
    %v4509 = vunpack.c.h.b16 %v4414
    %v4510 = vunpack.c.l.b16 %v4415
    %v4511 = vunpack.c.h.b16 %v4415
    %v4512 = vpack.c.b16 %v4448, %v4448
    %v4513 = vpack.c.b16 %v4449, %v4449
    %v4514 = vpack.c.b16 %v4450, %v4450
    %v4515 = vpack.c.b16 %v4451, %v4451
    %v4516 = vpack.c.b16 %v4452, %v4452
    %v4517 = vpack.c.b16 %v4453, %v4453
    %v4518 = vpack.c.b16 %v4454, %v4454
    %v4519 = vpack.c.b16 %v4455, %v4455
    %v4520 = vpack.c.b16 %v4456, %v4456
    %v4521 = vpack.c.b16 %v4457, %v4457
    %v4522 = vpack.c.b16 %v4458, %v4458
    %v4523 = vpack.c.b16 %v4459, %v4459
    %v4524 = vpack.c.b16 %v4460, %v4460
    %v4525 = vpack.c.b16 %v4461, %v4461
    %v4526 = vpack.c.b16 %v4462, %v4462
    %v4527 = vpack.c.b16 %v4463, %v4463
    %v4528 = vpack.c.b16 %v4464, %v4464
    %v4529 = vpack.c.b16 %v4465, %v4465
    %v4530 = vpack.c.b16 %v4466, %v4466
    %v4531 = vpack.c.b16 %v4467, %v4467
    %v4532 = vpack.c.b16 %v4468, %v4468
    %v4533 = vpack.c.b16 %v4469, %v4469
    %v4534 = vpack.c.b16 %v4470, %v4470
    %v4535 = vpack.c.b16 %v4471, %v4471
    %v4536 = vpack.c.b16 %v4472, %v4472
    %v4537 = vpack.c.b16 %v4473, %v4473
    %v4538 = vpack.c.b16 %v4474, %v4474
    %v4539 = vpack.c.b16 %v4475, %v4475
    %v4540 = vpack.c.b16 %v4476, %v4476
    %v4541 = vpack.c.b16 %v4477, %v4477
    %v4542 = vpack.c.b16 %v4478, %v4478
    %v4543 = vpack.c.b16 %v4479, %v4479
    %v4544 = vpack.c.b16 %v4480, %v4480
    %v4545 = vpack.c.b16 %v4481, %v4481
    %v4546 = vpack.c.b16 %v4482, %v4482
    %v4547 = vpack.c.b16 %v4483, %v4483
    %v4548 = vpack.c.b16 %v4484, %v4484
    %v4549 = vpack.c.b16 %v4485, %v4485
    %v4550 = vpack.c.b16 %v4486, %v4486
    %v4551 = vpack.c.b16 %v4487, %v4487
    %v4552 = vpack.c.b16 %v4488, %v4488
    %v4553 = vpack.c.b16 %v4489, %v4489
    %v4554 = vpack.c.b16 %v4490, %v4490
    %v4555 = vpack.c.b16 %v4491, %v4491
    %v4556 = vpack.c.b16 %v4492, %v4492
    %v4557 = vpack.c.b16 %v4493, %v4493
    %v4558 = vpack.c.b16 %v4494, %v4494
    %v4559 = vpack.c.b16 %v4495, %v4495
    %v4560 = vpack.c.b16 %v4496, %v4496
    %v4561 = vpack.c.b16 %v4497, %v4497
    %v4562 = vpack.c.b16 %v4498, %v4498
    %v4563 = vpack.c.b16 %v4499, %v4499
    %v4564 = vpack.c.b16 %v4500, %v4500
    %v4565 = vpack.c.b16 %v4501, %v4501
    %v4566 = vpack.c.b16 %v4502, %v4502
    %v4567 = vpack.c.b16 %v4503, %v4503
    %v4568 = vpack.c.b16 %v4504, %v4504
    %v4569 = vpack.c.b16 %v4505, %v4505
    %v4570 = vpack.c.b16 %v4506, %v4506
    %v4571 = vpack.c.b16 %v4507, %v4507
    %v4572 = vpack.c.b16 %v4508, %v4508
    %v4573 = vpack.c.b16 %v4509, %v4509
    %v4574 = vpack.c.b16 %v4510, %v4510
    %v4575 = vpack.c.b16 %v4511, %v4511
    %vm4640 = vcmask 125952
    %4641 = vst.msk [vmem:[%s6] sm:$0xf] %vm4640, %v4512
    %4642 = vst.msk [vmem:[%s6 + $0x4] sm:$0xf] %vm4640, %v4513
    %4643 = vst.msk [vmem:[%s6 + $0x8] sm:$0xf] %vm4640, %v4514
    %4644 = vst.msk [vmem:[%s6 + $0xc] sm:$0xf] %vm4640, %v4515
    %4645 = vst.msk [vmem:[%s6 + $0x10] sm:$0xf] %vm4640, %v4516
    %4646 = vst.msk [vmem:[%s6 + $0x14] sm:$0xf] %vm4640, %v4517
    %4647 = vst.msk [vmem:[%s6 + $0x18] sm:$0xf] %vm4640, %v4518
    %4648 = vst.msk [vmem:[%s6 + $0x1c] sm:$0xf] %vm4640, %v4519
    %4649 = vst.msk [vmem:[%s6 + $0x20] sm:$0xf] %vm4640, %v4520
    %4650 = vst.msk [vmem:[%s6 + $0x24] sm:$0xf] %vm4640, %v4521
    %4651 = vst.msk [vmem:[%s6 + $0x28] sm:$0xf] %vm4640, %v4522
    %4652 = vst.msk [vmem:[%s6 + $0x2c] sm:$0xf] %vm4640, %v4523
    %4653 = vst.msk [vmem:[%s6 + $0x30] sm:$0xf] %vm4640, %v4524
    %4654 = vst.msk [vmem:[%s6 + $0x34] sm:$0xf] %vm4640, %v4525
    %4655 = vst.msk [vmem:[%s6 + $0x38] sm:$0xf] %vm4640, %v4526
    %4656 = vst.msk [vmem:[%s6 + $0x3c] sm:$0xf] %vm4640, %v4527
    %4657 = vst.msk [vmem:[%s6 + $0x40] sm:$0xf] %vm4640, %v4528
    %4658 = vst.msk [vmem:[%s6 + $0x44] sm:$0xf] %vm4640, %v4529
    %4659 = vst.msk [vmem:[%s6 + $0x48] sm:$0xf] %vm4640, %v4530
    %4660 = vst.msk [vmem:[%s6 + $0x4c] sm:$0xf] %vm4640, %v4531
    %4661 = vst.msk [vmem:[%s6 + $0x50] sm:$0xf] %vm4640, %v4532
    %4662 = vst.msk [vmem:[%s6 + $0x54] sm:$0xf] %vm4640, %v4533
    %4663 = vst.msk [vmem:[%s6 + $0x58] sm:$0xf] %vm4640, %v4534
    %4664 = vst.msk [vmem:[%s6 + $0x5c] sm:$0xf] %vm4640, %v4535
    %4665 = vst.msk [vmem:[%s6 + $0x60] sm:$0xf] %vm4640, %v4536
    %4666 = vst.msk [vmem:[%s6 + $0x64] sm:$0xf] %vm4640, %v4537
    %4667 = vst.msk [vmem:[%s6 + $0x68] sm:$0xf] %vm4640, %v4538
    %4668 = vst.msk [vmem:[%s6 + $0x6c] sm:$0xf] %vm4640, %v4539
    %4669 = vst.msk [vmem:[%s6 + $0x70] sm:$0xf] %vm4640, %v4540
    %4670 = vst.msk [vmem:[%s6 + $0x74] sm:$0xf] %vm4640, %v4541
    %4671 = vst.msk [vmem:[%s6 + $0x78] sm:$0xf] %vm4640, %v4542
    %4672 = vst.msk [vmem:[%s6 + $0x7c] sm:$0xf] %vm4640, %v4543
    %4673 = vst.msk [vmem:[%s6 + $0x80] sm:$0xf] %vm4640, %v4544
    %4674 = vst.msk [vmem:[%s6 + $0x84] sm:$0xf] %vm4640, %v4545
    %4675 = vst.msk [vmem:[%s6 + $0x88] sm:$0xf] %vm4640, %v4546
    %4676 = vst.msk [vmem:[%s6 + $0x8c] sm:$0xf] %vm4640, %v4547
    %4677 = vst.msk [vmem:[%s6 + $0x90] sm:$0xf] %vm4640, %v4548
    %4678 = vst.msk [vmem:[%s6 + $0x94] sm:$0xf] %vm4640, %v4549
    %4679 = vst.msk [vmem:[%s6 + $0x98] sm:$0xf] %vm4640, %v4550
    %4680 = vst.msk [vmem:[%s6 + $0x9c] sm:$0xf] %vm4640, %v4551
    %4681 = vst.msk [vmem:[%s6 + $0xa0] sm:$0xf] %vm4640, %v4552
    %4682 = vst.msk [vmem:[%s6 + $0xa4] sm:$0xf] %vm4640, %v4553
    %4683 = vst.msk [vmem:[%s6 + $0xa8] sm:$0xf] %vm4640, %v4554
    %4684 = vst.msk [vmem:[%s6 + $0xac] sm:$0xf] %vm4640, %v4555
    %4685 = vst.msk [vmem:[%s6 + $0xb0] sm:$0xf] %vm4640, %v4556
    %4686 = vst.msk [vmem:[%s6 + $0xb4] sm:$0xf] %vm4640, %v4557
    %4687 = vst.msk [vmem:[%s6 + $0xb8] sm:$0xf] %vm4640, %v4558
    %4688 = vst.msk [vmem:[%s6 + $0xbc] sm:$0xf] %vm4640, %v4559
    %4689 = vst.msk [vmem:[%s6 + $0xc0] sm:$0xf] %vm4640, %v4560
    %4690 = vst.msk [vmem:[%s6 + $0xc4] sm:$0xf] %vm4640, %v4561
    %4691 = vst.msk [vmem:[%s6 + $0xc8] sm:$0xf] %vm4640, %v4562
    %4692 = vst.msk [vmem:[%s6 + $0xcc] sm:$0xf] %vm4640, %v4563
    %4693 = vst.msk [vmem:[%s6 + $0xd0] sm:$0xf] %vm4640, %v4564
    %4694 = vst.msk [vmem:[%s6 + $0xd4] sm:$0xf] %vm4640, %v4565
    %4695 = vst.msk [vmem:[%s6 + $0xd8] sm:$0xf] %vm4640, %v4566
    %4696 = vst.msk [vmem:[%s6 + $0xdc] sm:$0xf] %vm4640, %v4567
    %4697 = vst.msk [vmem:[%s6 + $0xe0] sm:$0xf] %vm4640, %v4568
    %4698 = vst.msk [vmem:[%s6 + $0xe4] sm:$0xf] %vm4640, %v4569
    %4699 = vst.msk [vmem:[%s6 + $0xe8] sm:$0xf] %vm4640, %v4570
    %4700 = vst.msk [vmem:[%s6 + $0xec] sm:$0xf] %vm4640, %v4571
    %4701 = vst.msk [vmem:[%s6 + $0xf0] sm:$0xf] %vm4640, %v4572
    %4702 = vst.msk [vmem:[%s6 + $0xf4] sm:$0xf] %vm4640, %v4573
    %4703 = vst.msk [vmem:[%s6 + $0xf8] sm:$0xf] %vm4640, %v4574
    %4704 = vst.msk [vmem:[%s6 + $0xfc] sm:$0xf] %vm4640, %v4575
    // Predicated region
    $region30: #{tpu_custom_call.1} parent=1 // pred_check
      _
    $region31: #{tpu_custom_call.1} parent=1 // pred_check_branch
      %4706 = sbr.rel (0) target = $region33
    $region32: #{tpu_custom_call.1} parent=1 // pred_region
      _
    $region33: #{tpu_custom_call.1} parent=1 // pred_fallthru
      _
    // Predicated region
    $region34: #{tpu_custom_call.1} parent=1 // pred_check
      _
    $region35: #{tpu_custom_call.1} parent=1 // pred_check_branch
      %4708 = sbr.rel (0) target = $region37
    $region36: #{tpu_custom_call.1} parent=1 // pred_region
      _
    $region37: #{tpu_custom_call.1} parent=1 // pred_fallthru
      _
    %4709 = vsyncpa [#allocation3], 1

</llo_original>
